<compile_context>
chip_gen: v7x
topology: tpu7x:2x2x1
jax: 0.10.0
libtpu: 0.0.40
codegen_flags: <defaults>
</compile_context>

<pallas_src>
import functools
import math

import jax
import jax.numpy as jnp
from jax.experimental import pallas as pl
from jax.experimental.pallas import tpu as pltpu

# ----------------------------- config ---------------------------------------
B = 2            # batch
S = 16           # sequence length (num patches)
D = 32           # hidden size
I = 64           # intermediate size
H = 4            # attention heads
HD = D // H      # head dim
L = 2            # encoder layers
DP = 128         # lane-padded hidden size
IP = 128         # lane-padded intermediate size
EPS = 1e-6
SCALE = HD ** -0.5

F32 = jnp.float32
BF16 = jnp.bfloat16


# ----------------------------- in-kernel helpers ----------------------------
def _layernorm(x, w, b):
    # x is (rows, DP) with zeros in the padded lanes, so sums over the padded
    # axis equal sums over the real D columns; divide by the real D.
    mu = jnp.sum(x, axis=-1, keepdims=True) * (1.0 / D)
    msq = jnp.sum(x * x, axis=-1, keepdims=True) * (1.0 / D)
    var = msq - mu * mu
    # w, b are zero in the padded lanes -> padded output stays exactly zero.
    return (x - mu) * jax.lax.rsqrt(var + EPS) * w + b


def _gelu_tanh(x):
    c = math.sqrt(2.0 / math.pi)
    return 0.5 * x * (1.0 + jnp.tanh(c * (x + 0.044715 * x * x * x)))


def _softmax_lastdim(s):
    s = s - jnp.max(s, axis=-1, keepdims=True)
    e = jnp.exp(s)
    return e * pl.reciprocal(jnp.sum(e, axis=-1, keepdims=True), approx=True)


# ----------------------------- fused kernel ---------------------------------
def _encoder_kernel(x_ref, ln1w_ref, ln1b_ref,
                    wqt_ref, bqt_ref, wkt_ref, bkt_ref, wvt_ref, bvt_ref,
                    wo_ref, bo_ref, ln2w_ref, ln2b_ref,
                    w1_ref, b1_ref, w2_ref, b2_ref,
                    out_ref, acc_ref, *, batched_heads):
    l = pl.program_id(1)

    @pl.when(l == 0)
    def _():
        acc_ref[...] = x_ref[0]

    x = acc_ref[...]                                    # (S, DP) f32

    # ---------------- self-attention (pre-LN) ----------------
    h = _layernorm(x, ln1w_ref[0], ln1b_ref[0])
    hb = h.astype(BF16)

    # Projections computed directly in transposed (feature, seq) layout via
    # pre-transposed bf16 weights -> no in-kernel transpose needed.
    qT = jnp.einsum('od,sd->os', wqt_ref[0], hb,
                    preferred_element_type=F32) + bqt_ref[0]      # (DP, S)
    kT = jnp.einsum('od,sd->os', wkt_ref[0], hb,
                    preferred_element_type=F32) + bkt_ref[0]
    vT = jnp.einsum('od,sd->os', wvt_ref[0], hb,
                    preferred_element_type=F32) + bvt_ref[0]

    # Head-major views: leading-axis slice + leading-dim split only (the real
    # heads occupy the first D rows; no lane shuffles / relayouts).
    qT3 = qT[:D].reshape(H, HD, S).astype(BF16)          # (H, HD, S)
    kT3 = kT[:D].reshape(H, HD, S).astype(BF16)
    vT3 = vT[:D].reshape(H, HD, S).astype(BF16)
    wo3 = wo_ref[0]                                      # (H, HD, DP) bf16

    if batched_heads:
        # scale is already folded into the Q weights/bias.
        s = jnp.einsum('hdq,hdk->hqk', qT3, kT3,
                       preferred_element_type=F32)               # (H, S, S)
        p = _softmax_lastdim(s).astype(BF16)
        ctx = jnp.einsum('hqk,hdk->hqd', p, vT3,
                         preferred_element_type=F32)             # (H, S, HD)
        per_head = jnp.einsum('hqd,hdo->hqo', ctx.astype(BF16), wo3,
                              preferred_element_type=F32)        # (H, S, DP)
        attn = jnp.sum(per_head, axis=0)                         # (S, DP)
    else:
        # Robust fallback: same math with per-head 2-D dots.
        attn = jnp.zeros((S, DP), F32)
        for hh in range(H):
            s = jnp.einsum('dq,dk->qk', qT3[hh], kT3[hh],
                           preferred_element_type=F32)
            p = _softmax_lastdim(s).astype(BF16)
            ctx = jnp.einsum('qk,dk->qd', p, vT3[hh],
                             preferred_element_type=F32)
            attn = attn + jnp.dot(ctx.astype(BF16), wo3[hh],
                                  preferred_element_type=F32)

    x = x + attn + bo_ref[0]

    # ---------------- MLP (pre-LN) ----------------
    h = _layernorm(x, ln2w_ref[0], ln2b_ref[0])
    u = jnp.dot(h.astype(BF16), w1_ref[0],
                preferred_element_type=F32) + b1_ref[0]          # (S, IP)
    u = _gelu_tanh(u)
    y = jnp.dot(u.astype(BF16), w2_ref[0],
                preferred_element_type=F32) + b2_ref[0]          # (S, DP)
    x = x + y

    acc_ref[...] = x

    @pl.when(l == pl.num_programs(1) - 1)
    def _():
        out_ref[0] = x


# ----------------------------- pallas_call builder ---------------------------
def _build_encoder(batched_heads):
    kernel = functools.partial(_encoder_kernel, batched_heads=batched_heads)

    act_map = lambda b, l: (b, 0, 0)        # activation: per-batch block, layer-resident
    mat_map = lambda b, l: (l, 0, 0)        # per-layer weight slabs
    vec_map = lambda b, l: (l, 0, 0)
    wo_map = lambda b, l: (l, 0, 0, 0)

    in_specs = [
        pl.BlockSpec((1, S, DP), act_map),        # x
        pl.BlockSpec((1, 1, DP), vec_map),        # ln1_w
        pl.BlockSpec((1, 1, DP), vec_map),        # ln1_b
        pl.BlockSpec((1, DP, DP), mat_map),       # wqT (scale folded, transposed)
        pl.BlockSpec((1, DP, 1), vec_map),        # bqT
        pl.BlockSpec((1, DP, DP), mat_map),       # wkT
        pl.BlockSpec((1, DP, 1), vec_map),        # bkT
        pl.BlockSpec((1, DP, DP), mat_map),       # wvT
        pl.BlockSpec((1, DP, 1), vec_map),        # bvT
        pl.BlockSpec((1, H, HD, DP), wo_map),     # wo (per-head rows)
        pl.BlockSpec((1, 1, DP), vec_map),        # bo
        pl.BlockSpec((1, 1, DP), vec_map),        # ln2_w
        pl.BlockSpec((1, 1, DP), vec_map),        # ln2_b
        pl.BlockSpec((1, DP, IP), mat_map),       # w1
        pl.BlockSpec((1, 1, IP), vec_map),        # b1
        pl.BlockSpec((1, IP, DP), mat_map),       # w2
        pl.BlockSpec((1, 1, DP), vec_map),        # b2
    ]
    out_spec = pl.BlockSpec((1, S, DP), act_map)

    return pl.pallas_call(
        kernel,
        grid=(B, L),                              # layer axis innermost
        in_specs=in_specs,
        out_specs=out_spec,
        out_shape=jax.ShapeDtypeStruct((B, S, DP), jnp.float32),
        scratch_shapes=[pltpu.VMEM((S, DP), jnp.float32)],   # resident activation
        compiler_params=pltpu.CompilerParams(
            dimension_semantics=("parallel", "arbitrary"),
            vmem_limit_bytes=32 * 1024 * 1024),
    )


# ----------------------------- wrapper ---------------------------------------
def siglip_encoder(inputs_embeds, kparams):
    b, s, d = inputs_embeds.shape
    assert (b, s, d) == (B, S, D)
    # Zero-pad hidden dim to 128 lanes (lane-dense activations & stores).
    x = jnp.zeros((B, S, DP), jnp.float32)
    x = x.at[:, :, :D].set(inputs_embeds.astype(jnp.float32))
    args = (x,
            kparams["ln1_w"], kparams["ln1_b"],
            kparams["wqT"], kparams["bqT"], kparams["wkT"], kparams["bkT"],
            kparams["wvT"], kparams["bvT"], kparams["wo"], kparams["bo"],
            kparams["ln2_w"], kparams["ln2_b"],
            kparams["w1"], kparams["b1"], kparams["w2"], kparams["b2"])
    try:
        out = jax.block_until_ready(_build_encoder(True)(*args))
    except Exception:
        # TODO(synk): if this Mosaic build rejects the head-batched dot_general
        # (leading batch dim + non-minor lhs contraction), fall back to the
        # mathematically identical per-head 2-D formulation.
        out = jax.block_until_ready(_build_encoder(False)(*args))
    return out[:, :, :D]


# ----------------------------- parameters ------------------------------------
def init_logical_params(key):
    """Unpadded f32 parameters, matching the PyTorch module layout."""
    def nrm(k, shape, scale=0.02):
        return (scale * jax.random.normal(k, shape)).astype(jnp.float32)

    ks = jax.random.split(key, 16)
    return {
        "ln1_w": 1.0 + nrm(ks[0], (L, D)), "ln1_b": nrm(ks[1], (L, D)),
        "wq": nrm(ks[2], (L, D, D)), "bq": nrm(ks[3], (L, D)),
        "wk": nrm(ks[4], (L, D, D)), "bk": nrm(ks[5], (L, D)),
        "wv": nrm(ks[6], (L, D, D)), "bv": nrm(ks[7], (L, D)),
        "wo": nrm(ks[8], (L, D, D)), "bo": nrm(ks[9], (L, D)),
        "ln2_w": 1.0 + nrm(ks[10], (L, D)), "ln2_b": nrm(ks[11], (L, D)),
        "w1": nrm(ks[12], (L, D, I)), "b1": nrm(ks[13], (L, I)),
        "w2": nrm(ks[14], (L, I, D)), "b2": nrm(ks[15], (L, D)),
    }


def prepare_kernel_params(p):
    """One-time prep: lane-pad to 128, pre-transpose Q/K/V weights, fold the
    softmax scale into Q, reshape the out-proj per head, cast matmul weights
    to bf16 (LN params / biases stay f32)."""
    def pad_vec(a, width):                           # (L, n) -> (L, 1, width) f32
        out = jnp.zeros((L, 1, width), jnp.float32)
        return out.at[:, 0, :a.shape[1]].set(a)

    def pad_wT(w, scale=1.0):                        # (L, D, D) -> (L, DP, DP) bf16, transposed
        out = jnp.zeros((L, DP, DP), jnp.float32)
        out = out.at[:, :w.shape[2], :w.shape[1]].set(jnp.swapaxes(w, 1, 2) * scale)
        return out.astype(jnp.bfloat16)

    def pad_bT(b, scale=1.0):                        # (L, D) -> (L, DP, 1) f32
        out = jnp.zeros((L, DP, 1), jnp.float32)
        return out.at[:, :b.shape[1], 0].set(b * scale)

    def pad_mat(w, r, c):                            # (L, a, b) -> (L, r, c) bf16
        out = jnp.zeros((L, r, c), jnp.float32)
        out = out.at[:, :w.shape[1], :w.shape[2]].set(w)
        return out.astype(jnp.bfloat16)

    wo = jnp.zeros((L, D, DP), jnp.float32).at[:, :, :D].set(p["wo"])
    wo = wo.reshape(L, H, HD, DP).astype(jnp.bfloat16)

    return {
        "ln1_w": pad_vec(p["ln1_w"], DP), "ln1_b": pad_vec(p["ln1_b"], DP),
        "wqT": pad_wT(p["wq"], SCALE), "bqT": pad_bT(p["bq"], SCALE),
        "wkT": pad_wT(p["wk"]), "bkT": pad_bT(p["bk"]),
        "wvT": pad_wT(p["wv"]), "bvT": pad_bT(p["bv"]),
        "wo": wo, "bo": pad_vec(p["bo"], DP),
        "ln2_w": pad_vec(p["ln2_w"], DP), "ln2_b": pad_vec(p["ln2_b"], DP),
        "w1": pad_mat(p["w1"], DP, IP), "b1": pad_vec(p["b1"], IP),
        "w2": pad_mat(p["w2"], IP, DP), "b2": pad_vec(p["b2"], DP),
    }


# ----------------------------- pure-JAX reference ----------------------------
def reference_forward(x, p):
    hi = jax.lax.Precision.HIGHEST

    def ln(x, w, b):
        mu = jnp.mean(x, -1, keepdims=True)
        var = jnp.mean(jnp.square(x - mu), -1, keepdims=True)
        return (x - mu) * jax.lax.rsqrt(var + EPS) * w + b

    h = x.astype(jnp.float32)
    for l in range(L):
        r = h
        y = ln(h, p["ln1_w"][l], p["ln1_b"][l])
        q = jnp.einsum('bsd,de->bse', y, p["wq"][l], precision=hi) + p["bq"][l]
        k = jnp.einsum('bsd,de->bse', y, p["wk"][l], precision=hi) + p["bk"][l]
        v = jnp.einsum('bsd,de->bse', y, p["wv"][l], precision=hi) + p["bv"][l]
        q = q.reshape(B, S, H, HD)
        k = k.reshape(B, S, H, HD)
        v = v.reshape(B, S, H, HD)
        s = jnp.einsum('bqhd,bkhd->bhqk', q, k, precision=hi) * SCALE
        pr = jax.nn.softmax(s, axis=-1)
        ctx = jnp.einsum('bhqk,bkhd->bqhd', pr, v, precision=hi).reshape(B, S, D)
        attn = jnp.einsum('bsd,de->bse', ctx, p["wo"][l], precision=hi) + p["bo"][l]
        h = r + attn
        r = h
        y = ln(h, p["ln2_w"][l], p["ln2_b"][l])
        y = jnp.einsum('bsd,di->bsi', y, p["w1"][l], precision=hi) + p["b1"][l]
        y = jax.nn.gelu(y, approximate=True)
        y = jnp.einsum('bsi,id->bsd', y, p["w2"][l], precision=hi) + p["b2"][l]
        h = r + y
    return h


# ----------------------------- main -------------------------------------------
if __name__ == "__main__":
    key = jax.random.PRNGKey(0)
    k_x, k_par = jax.random.split(key)
    inputs_embeds = jax.random.normal(k_x, (B, S, D), dtype=jnp.float32)

    logical = init_logical_params(k_par)
    kparams = prepare_kernel_params(logical)

    out = siglip_encoder(inputs_embeds, kparams)
    out = jax.block_until_ready(out)

    ref = reference_forward(inputs_embeds, logical)
    assert out.shape == (B, S, D)
    assert jnp.allclose(out, ref, rtol=2e-2, atol=2e-2), "mismatch vs reference"
    print("KERNEL_OK")
</pallas_src>

<mosaic_0001>
module attributes {stable_mosaic.version = 11 : i64} {
  func.func @_encoder_kernel(%arg0: i32, %arg1: i32, %arg2: memref<1x16x128xf32, #tpu.memory_space<vmem>>, %arg3: memref<1x1x128xf32, #tpu.memory_space<vmem>>, %arg4: memref<1x1x128xf32, #tpu.memory_space<vmem>>, %arg5: memref<1x128x128xbf16, #tpu.memory_space<vmem>>, %arg6: memref<1x128x1xf32, #tpu.memory_space<vmem>>, %arg7: memref<1x128x128xbf16, #tpu.memory_space<vmem>>, %arg8: memref<1x128x1xf32, #tpu.memory_space<vmem>>, %arg9: memref<1x128x128xbf16, #tpu.memory_space<vmem>>, %arg10: memref<1x128x1xf32, #tpu.memory_space<vmem>>, %arg11: memref<1x4x8x128xbf16, #tpu.memory_space<vmem>>, %arg12: memref<1x1x128xf32, #tpu.memory_space<vmem>>, %arg13: memref<1x1x128xf32, #tpu.memory_space<vmem>>, %arg14: memref<1x1x128xf32, #tpu.memory_space<vmem>>, %arg15: memref<1x128x128xbf16, #tpu.memory_space<vmem>>, %arg16: memref<1x1x128xf32, #tpu.memory_space<vmem>>, %arg17: memref<1x128x128xbf16, #tpu.memory_space<vmem>>, %arg18: memref<1x1x128xf32, #tpu.memory_space<vmem>>, %arg19: memref<1x16x128xf32, #tpu.memory_space<vmem>>, %arg20: memref<16x128xf32, #tpu.memory_space<vmem>>) attributes {dimension_semantics = [#tpu.dimension_semantics<parallel>, #tpu.dimension_semantics<arbitrary>], iteration_bounds = array<i64: 2, 2>, scalar_prefetch = 0 : i64, scratch_operands = 1 : i64, tpu.core_type = #tpu.core_type<tc>, window_params = [{transform_indices = @transform_0, window_bounds = array<i64: 1, 16, 128>}, {transform_indices = @transform_1, window_bounds = array<i64: 1, 1, 128>}, {transform_indices = @transform_2, window_bounds = array<i64: 1, 1, 128>}, {transform_indices = @transform_3, window_bounds = array<i64: 1, 128, 128>}, {transform_indices = @transform_4, window_bounds = array<i64: 1, 128, 1>}, {transform_indices = @transform_5, window_bounds = array<i64: 1, 128, 128>}, {transform_indices = @transform_6, window_bounds = array<i64: 1, 128, 1>}, {transform_indices = @transform_7, window_bounds = array<i64: 1, 128, 128>}, {transform_indices = @transform_8, window_bounds = array<i64: 1, 128, 1>}, {transform_indices = @transform_9, window_bounds = array<i64: 1, 4, 8, 128>}, {transform_indices = @transform_10, window_bounds = array<i64: 1, 1, 128>}, {transform_indices = @transform_11, window_bounds = array<i64: 1, 1, 128>}, {transform_indices = @transform_12, window_bounds = array<i64: 1, 1, 128>}, {transform_indices = @transform_13, window_bounds = array<i64: 1, 128, 128>}, {transform_indices = @transform_14, window_bounds = array<i64: 1, 1, 128>}, {transform_indices = @transform_15, window_bounds = array<i64: 1, 128, 128>}, {transform_indices = @transform_16, window_bounds = array<i64: 1, 1, 128>}, {transform_indices = @transform_17, window_bounds = array<i64: 1, 16, 128>}]} {
    %c0_i32 = arith.constant 0 : i32
    %0 = arith.cmpi eq, %arg1, %c0_i32 : i32
    %1 = arith.extui %0 : i1 to i32
    %c0_i32_0 = arith.constant 0 : i32
    %2 = arith.cmpi ne, %1, %c0_i32_0 : i32
    scf.if %2 {
      %c0_78 = arith.constant 0 : index
      %c0_79 = arith.constant 0 : index
      %c0_80 = arith.constant 0 : index
      %144 = vector.load %arg2[%c0_78, %c0_79, %c0_80] : memref<1x16x128xf32, #tpu.memory_space<vmem>>, vector<1x16x128xf32>
      %145 = vector.shape_cast %144 : vector<1x16x128xf32> to vector<16x128xf32>
      %c0_81 = arith.constant 0 : index
      %c0_82 = arith.constant 0 : index
      %146 = vector.load %arg20[%c0_81, %c0_82] : memref<16x128xf32, #tpu.memory_space<vmem>>, vector<16x128xf32>
      tpu.vector_store %arg20[%c0_81, %c0_82], %145 {strides = array<i32>} : memref<16x128xf32, #tpu.memory_space<vmem>>, vector<16x128xf32>,
    } else {
    }
    %c0 = arith.constant 0 : index
    %c0_1 = arith.constant 0 : index
    %3 = vector.load %arg20[%c0, %c0_1] : memref<16x128xf32, #tpu.memory_space<vmem>>, vector<16x128xf32>
    %c0_2 = arith.constant 0 : index
    %c0_3 = arith.constant 0 : index
    %c0_4 = arith.constant 0 : index
    %4 = vector.load %arg3[%c0_2, %c0_3, %c0_4] : memref<1x1x128xf32, #tpu.memory_space<vmem>>, vector<1x1x128xf32>
    %5 = vector.shape_cast %4 : vector<1x1x128xf32> to vector<1x128xf32>
    %c0_5 = arith.constant 0 : index
    %c0_6 = arith.constant 0 : index
    %c0_7 = arith.constant 0 : index
    %6 = vector.load %arg4[%c0_5, %c0_6, %c0_7] : memref<1x1x128xf32, #tpu.memory_space<vmem>>, vector<1x1x128xf32>
    %7 = vector.shape_cast %6 : vector<1x1x128xf32> to vector<1x128xf32>
    %cst = arith.constant dense<0.000000e+00> : vector<16xf32>
    %8 = vector.multi_reduction <add>, %3, %cst [1] : vector<16x128xf32> to vector<16xf32>
    %9 = vector.shape_cast %8 : vector<16xf32> to vector<16x1xf32>
    %cst_8 = arith.constant 3.125000e-02 : f32
    %10 = vector.broadcast %cst_8 : f32 to vector<16x1xf32>
    %11 = arith.mulf %9, %10 : vector<16x1xf32>
    %12 = arith.mulf %3, %3 : vector<16x128xf32>
    %cst_9 = arith.constant dense<0.000000e+00> : vector<16xf32>
    %13 = vector.multi_reduction <add>, %12, %cst_9 [1] : vector<16x128xf32> to vector<16xf32>
    %14 = vector.shape_cast %13 : vector<16xf32> to vector<16x1xf32>
    %cst_10 = arith.constant 3.125000e-02 : f32
    %15 = vector.broadcast %cst_10 : f32 to vector<16x1xf32>
    %16 = arith.mulf %14, %15 : vector<16x1xf32>
    %17 = arith.mulf %11, %11 : vector<16x1xf32>
    %18 = arith.subf %16, %17 : vector<16x1xf32>
    %19 = vector.broadcast %11 : vector<16x1xf32> to vector<16x128xf32>
    %20 = arith.subf %3, %19 : vector<16x128xf32>
    %cst_11 = arith.constant 9.99999997E-7 : f32
    %21 = vector.broadcast %cst_11 : f32 to vector<16x1xf32>
    %22 = arith.addf %18, %21 : vector<16x1xf32>
    %23 = math.rsqrt %22 : vector<16x1xf32>
    %24 = vector.broadcast %23 : vector<16x1xf32> to vector<16x128xf32>
    %25 = arith.mulf %20, %24 : vector<16x128xf32>
    %26 = vector.broadcast %5 : vector<1x128xf32> to vector<16x128xf32>
    %27 = arith.mulf %25, %26 : vector<16x128xf32>
    %28 = vector.broadcast %7 : vector<1x128xf32> to vector<16x128xf32>
    %29 = arith.addf %27, %28 : vector<16x128xf32>
    %30 = arith.truncf %29 : vector<16x128xf32> to vector<16x128xbf16>
    %c0_12 = arith.constant 0 : index
    %c0_13 = arith.constant 0 : index
    %c0_14 = arith.constant 0 : index
    %31 = vector.load %arg5[%c0_12, %c0_13, %c0_14] : memref<1x128x128xbf16, #tpu.memory_space<vmem>>, vector<1x128x128xbf16>
    %32 = vector.shape_cast %31 : vector<1x128x128xbf16> to vector<128x128xbf16>
    "tpu.trace_start"() <{level = 10 : i32, message = "od,sd->os"}> : () -> ()
    %cst_15 = arith.constant dense<0.000000e+00> : vector<128x16xf32>
    %33 = tpu.matmul %32, %30, %cst_15 {dimension_numbers = #tpu.dot_dimension_numbers<[1], [1], [0], [0], [0, 0, 1, 0], [], []>} : vector<128x128xbf16>, vector<16x128xbf16>, vector<128x16xf32> -> vector<128x16xf32>
    "tpu.trace_stop"() : () -> ()
    %c0_16 = arith.constant 0 : index
    %c0_17 = arith.constant 0 : index
    %c0_18 = arith.constant 0 : index
    %34 = vector.load %arg6[%c0_16, %c0_17, %c0_18] : memref<1x128x1xf32, #tpu.memory_space<vmem>>, vector<1x128x1xf32>
    %35 = vector.shape_cast %34 : vector<1x128x1xf32> to vector<128x1xf32>
    %36 = vector.broadcast %35 : vector<128x1xf32> to vector<128x16xf32>
    %37 = arith.addf %33, %36 : vector<128x16xf32>
    %c0_19 = arith.constant 0 : index
    %c0_20 = arith.constant 0 : index
    %c0_21 = arith.constant 0 : index
    %38 = vector.load %arg7[%c0_19, %c0_20, %c0_21] : memref<1x128x128xbf16, #tpu.memory_space<vmem>>, vector<1x128x128xbf16>
    %39 = vector.shape_cast %38 : vector<1x128x128xbf16> to vector<128x128xbf16>
    "tpu.trace_start"() <{level = 10 : i32, message = "od,sd->os"}> : () -> ()
    %cst_22 = arith.constant dense<0.000000e+00> : vector<128x16xf32>
    %40 = tpu.matmul %39, %30, %cst_22 {dimension_numbers = #tpu.dot_dimension_numbers<[1], [1], [0], [0], [0, 0, 1, 0], [], []>} : vector<128x128xbf16>, vector<16x128xbf16>, vector<128x16xf32> -> vector<128x16xf32>
    "tpu.trace_stop"() : () -> ()
    %c0_23 = arith.constant 0 : index
    %c0_24 = arith.constant 0 : index
    %c0_25 = arith.constant 0 : index
    %41 = vector.load %arg8[%c0_23, %c0_24, %c0_25] : memref<1x128x1xf32, #tpu.memory_space<vmem>>, vector<1x128x1xf32>
    %42 = vector.shape_cast %41 : vector<1x128x1xf32> to vector<128x1xf32>
    %43 = vector.broadcast %42 : vector<128x1xf32> to vector<128x16xf32>
    %44 = arith.addf %40, %43 : vector<128x16xf32>
    %c0_26 = arith.constant 0 : index
    %c0_27 = arith.constant 0 : index
    %c0_28 = arith.constant 0 : index
    %45 = vector.load %arg9[%c0_26, %c0_27, %c0_28] : memref<1x128x128xbf16, #tpu.memory_space<vmem>>, vector<1x128x128xbf16>
    %46 = vector.shape_cast %45 : vector<1x128x128xbf16> to vector<128x128xbf16>
    "tpu.trace_start"() <{level = 10 : i32, message = "od,sd->os"}> : () -> ()
    %cst_29 = arith.constant dense<0.000000e+00> : vector<128x16xf32>
    %47 = tpu.matmul %46, %30, %cst_29 {dimension_numbers = #tpu.dot_dimension_numbers<[1], [1], [0], [0], [0, 0, 1, 0], [], []>} : vector<128x128xbf16>, vector<16x128xbf16>, vector<128x16xf32> -> vector<128x16xf32>
    "tpu.trace_stop"() : () -> ()
    %c0_30 = arith.constant 0 : index
    %c0_31 = arith.constant 0 : index
    %c0_32 = arith.constant 0 : index
    %48 = vector.load %arg10[%c0_30, %c0_31, %c0_32] : memref<1x128x1xf32, #tpu.memory_space<vmem>>, vector<1x128x1xf32>
    %49 = vector.shape_cast %48 : vector<1x128x1xf32> to vector<128x1xf32>
    %50 = vector.broadcast %49 : vector<128x1xf32> to vector<128x16xf32>
    %51 = arith.addf %47, %50 : vector<128x16xf32>
    %52 = vector.extract_strided_slice %37 {offsets = [0, 0], sizes = [32, 16], strides = [1, 1]} : vector<128x16xf32> to vector<32x16xf32>
    %53 = vector.shape_cast %52 : vector<32x16xf32> to vector<4x8x16xf32>
    %54 = arith.truncf %53 : vector<4x8x16xf32> to vector<4x8x16xbf16>
    %55 = vector.extract_strided_slice %44 {offsets = [0, 0], sizes = [32, 16], strides = [1, 1]} : vector<128x16xf32> to vector<32x16xf32>
    %56 = vector.shape_cast %55 : vector<32x16xf32> to vector<4x8x16xf32>
    %57 = arith.truncf %56 : vector<4x8x16xf32> to vector<4x8x16xbf16>
    %58 = vector.extract_strided_slice %51 {offsets = [0, 0], sizes = [32, 16], strides = [1, 1]} : vector<128x16xf32> to vector<32x16xf32>
    %59 = vector.shape_cast %58 : vector<32x16xf32> to vector<4x8x16xf32>
    %60 = arith.truncf %59 : vector<4x8x16xf32> to vector<4x8x16xbf16>
    %c0_33 = arith.constant 0 : index
    %c0_34 = arith.constant 0 : index
    %c0_35 = arith.constant 0 : index
    %c0_36 = arith.constant 0 : index
    %61 = vector.load %arg11[%c0_33, %c0_34, %c0_35, %c0_36] : memref<1x4x8x128xbf16, #tpu.memory_space<vmem>>, vector<1x4x8x128xbf16>
    %62 = vector.shape_cast %61 : vector<1x4x8x128xbf16> to vector<4x8x128xbf16>
    "tpu.trace_start"() <{level = 10 : i32, message = "hdq,hdk->hqk"}> : () -> ()
    %cst_37 = arith.constant dense<0.000000e+00> : vector<4x16x16xf32>
    %63 = tpu.matmul %54, %57, %cst_37 {dimension_numbers = #tpu.dot_dimension_numbers<[1], [1], [2], [2], [0, 0, 0, 2, 1, 2], [0], [0]>} : vector<4x8x16xbf16>, vector<4x8x16xbf16>, vector<4x16x16xf32> -> vector<4x16x16xf32>
    "tpu.trace_stop"() : () -> ()
    %cst_38 = arith.constant dense<0xFF800000> : vector<4x16xf32>
    %64 = vector.multi_reduction <maximumf>, %63, %cst_38 [2] : vector<4x16x16xf32> to vector<4x16xf32>
    %65 = vector.shape_cast %64 : vector<4x16xf32> to vector<4x16x1xf32>
    %66 = vector.broadcast %65 : vector<4x16x1xf32> to vector<4x16x16xf32>
    %67 = arith.subf %63, %66 : vector<4x16x16xf32>
    %68 = math.exp %67 : vector<4x16x16xf32>
    %cst_39 = arith.constant dense<0.000000e+00> : vector<4x16xf32>
    %69 = vector.multi_reduction <add>, %68, %cst_39 [2] : vector<4x16x16xf32> to vector<4x16xf32>
    %70 = vector.shape_cast %69 : vector<4x16xf32> to vector<4x16x1xf32>
    %71 = tpu.reciprocal %70 {approx = true} : vector<4x16x1xf32> -> vector<4x16x1xf32>
    %72 = vector.broadcast %71 : vector<4x16x1xf32> to vector<4x16x16xf32>
    %73 = arith.mulf %68, %72 : vector<4x16x16xf32>
    %74 = arith.truncf %73 : vector<4x16x16xf32> to vector<4x16x16xbf16>
    "tpu.trace_start"() <{level = 10 : i32, message = "hqk,hdk->hqd"}> : () -> ()
    %cst_40 = arith.constant dense<0.000000e+00> : vector<4x16x8xf32>
    %75 = tpu.matmul %74, %60, %cst_40 {dimension_numbers = #tpu.dot_dimension_numbers<[2], [2], [1], [1], [0, 0, 0, 1, 1, 1], [0], [0]>} : vector<4x16x16xbf16>, vector<4x8x16xbf16>, vector<4x16x8xf32> -> vector<4x16x8xf32>
    "tpu.trace_stop"() : () -> ()
    %76 = arith.truncf %75 : vector<4x16x8xf32> to vector<4x16x8xbf16>
    "tpu.trace_start"() <{level = 10 : i32, message = "hqd,hdo->hqo"}> : () -> ()
    %cst_41 = arith.constant dense<0.000000e+00> : vector<4x16x128xf32>
    %77 = tpu.matmul %76, %62, %cst_41 {dimension_numbers = #tpu.dot_dimension_numbers<[2], [1], [1], [2], [0, 0, 0, 1, 1, 2], [0], [0]>} : vector<4x16x8xbf16>, vector<4x8x128xbf16>, vector<4x16x128xf32> -> vector<4x16x128xf32>
    "tpu.trace_stop"() : () -> ()
    %cst_42 = arith.constant dense<0.000000e+00> : vector<16x128xf32>
    %78 = vector.multi_reduction <add>, %77, %cst_42 [0] : vector<4x16x128xf32> to vector<16x128xf32>
    %79 = arith.addf %3, %78 : vector<16x128xf32>
    %c0_43 = arith.constant 0 : index
    %c0_44 = arith.constant 0 : index
    %c0_45 = arith.constant 0 : index
    %80 = vector.load %arg12[%c0_43, %c0_44, %c0_45] : memref<1x1x128xf32, #tpu.memory_space<vmem>>, vector<1x1x128xf32>
    %81 = vector.shape_cast %80 : vector<1x1x128xf32> to vector<1x128xf32>
    %82 = vector.broadcast %81 : vector<1x128xf32> to vector<16x128xf32>
    %83 = arith.addf %79, %82 : vector<16x128xf32>
    %c0_46 = arith.constant 0 : index
    %c0_47 = arith.constant 0 : index
    %c0_48 = arith.constant 0 : index
    %84 = vector.load %arg13[%c0_46, %c0_47, %c0_48] : memref<1x1x128xf32, #tpu.memory_space<vmem>>, vector<1x1x128xf32>
    %85 = vector.shape_cast %84 : vector<1x1x128xf32> to vector<1x128xf32>
    %c0_49 = arith.constant 0 : index
    %c0_50 = arith.constant 0 : index
    %c0_51 = arith.constant 0 : index
    %86 = vector.load %arg14[%c0_49, %c0_50, %c0_51] : memref<1x1x128xf32, #tpu.memory_space<vmem>>, vector<1x1x128xf32>
    %87 = vector.shape_cast %86 : vector<1x1x128xf32> to vector<1x128xf32>
    %cst_52 = arith.constant dense<0.000000e+00> : vector<16xf32>
    %88 = vector.multi_reduction <add>, %83, %cst_52 [1] : vector<16x128xf32> to vector<16xf32>
    %89 = vector.shape_cast %88 : vector<16xf32> to vector<16x1xf32>
    %cst_53 = arith.constant 3.125000e-02 : f32
    %90 = vector.broadcast %cst_53 : f32 to vector<16x1xf32>
    %91 = arith.mulf %89, %90 : vector<16x1xf32>
    %92 = arith.mulf %83, %83 : vector<16x128xf32>
    %cst_54 = arith.constant dense<0.000000e+00> : vector<16xf32>
    %93 = vector.multi_reduction <add>, %92, %cst_54 [1] : vector<16x128xf32> to vector<16xf32>
    %94 = vector.shape_cast %93 : vector<16xf32> to vector<16x1xf32>
    %cst_55 = arith.constant 3.125000e-02 : f32
    %95 = vector.broadcast %cst_55 : f32 to vector<16x1xf32>
    %96 = arith.mulf %94, %95 : vector<16x1xf32>
    %97 = arith.mulf %91, %91 : vector<16x1xf32>
    %98 = arith.subf %96, %97 : vector<16x1xf32>
    %99 = vector.broadcast %91 : vector<16x1xf32> to vector<16x128xf32>
    %100 = arith.subf %83, %99 : vector<16x128xf32>
    %cst_56 = arith.constant 9.99999997E-7 : f32
    %101 = vector.broadcast %cst_56 : f32 to vector<16x1xf32>
    %102 = arith.addf %98, %101 : vector<16x1xf32>
    %103 = math.rsqrt %102 : vector<16x1xf32>
    %104 = vector.broadcast %103 : vector<16x1xf32> to vector<16x128xf32>
    %105 = arith.mulf %100, %104 : vector<16x128xf32>
    %106 = vector.broadcast %85 : vector<1x128xf32> to vector<16x128xf32>
    %107 = arith.mulf %105, %106 : vector<16x128xf32>
    %108 = vector.broadcast %87 : vector<1x128xf32> to vector<16x128xf32>
    %109 = arith.addf %107, %108 : vector<16x128xf32>
    %110 = arith.truncf %109 : vector<16x128xf32> to vector<16x128xbf16>
    %c0_57 = arith.constant 0 : index
    %c0_58 = arith.constant 0 : index
    %c0_59 = arith.constant 0 : index
    %111 = vector.load %arg15[%c0_57, %c0_58, %c0_59] : memref<1x128x128xbf16, #tpu.memory_space<vmem>>, vector<1x128x128xbf16>
    %112 = vector.shape_cast %111 : vector<1x128x128xbf16> to vector<128x128xbf16>
    %cst_60 = arith.constant dense<0.000000e+00> : vector<16x128xf32>
    %113 = tpu.matmul %110, %112, %cst_60 {dimension_numbers = #tpu.dot_dimension_numbers<[1], [0], [0], [1], [0, 0, 1, 1], [], []>} : vector<16x128xbf16>, vector<128x128xbf16>, vector<16x128xf32> -> vector<16x128xf32>
    %c0_61 = arith.constant 0 : index
    %c0_62 = arith.constant 0 : index
    %c0_63 = arith.constant 0 : index
    %114 = vector.load %arg16[%c0_61, %c0_62, %c0_63] : memref<1x1x128xf32, #tpu.memory_space<vmem>>, vector<1x1x128xf32>
    %115 = vector.shape_cast %114 : vector<1x1x128xf32> to vector<1x128xf32>
    %116 = vector.broadcast %115 : vector<1x128xf32> to vector<16x128xf32>
    %117 = arith.addf %113, %116 : vector<16x128xf32>
    %cst_64 = arith.constant 5.000000e-01 : f32
    %118 = vector.broadcast %cst_64 : f32 to vector<16x128xf32>
    %119 = arith.mulf %118, %117 : vector<16x128xf32>
    %cst_65 = arith.constant 4.471500e-02 : f32
    %120 = vector.broadcast %cst_65 : f32 to vector<16x128xf32>
    %121 = arith.mulf %120, %117 : vector<16x128xf32>
    %122 = arith.mulf %121, %117 : vector<16x128xf32>
    %123 = arith.mulf %122, %117 : vector<16x128xf32>
    %124 = arith.addf %117, %123 : vector<16x128xf32>
    %cst_66 = arith.constant 0.797884583 : f32
    %125 = vector.broadcast %cst_66 : f32 to vector<16x128xf32>
    %126 = arith.mulf %125, %124 : vector<16x128xf32>
    %127 = math.tanh %126 : vector<16x128xf32>
    %cst_67 = arith.constant 1.000000e+00 : f32
    %128 = vector.broadcast %cst_67 : f32 to vector<16x128xf32>
    %129 = arith.addf %128, %127 : vector<16x128xf32>
    %130 = arith.mulf %119, %129 : vector<16x128xf32>
    %131 = arith.truncf %130 : vector<16x128xf32> to vector<16x128xbf16>
    %c0_68 = arith.constant 0 : index
    %c0_69 = arith.constant 0 : index
    %c0_70 = arith.constant 0 : index
    %132 = vector.load %arg17[%c0_68, %c0_69, %c0_70] : memref<1x128x128xbf16, #tpu.memory_space<vmem>>, vector<1x128x128xbf16>
    %133 = vector.shape_cast %132 : vector<1x128x128xbf16> to vector<128x128xbf16>
    %cst_71 = arith.constant dense<0.000000e+00> : vector<16x128xf32>
    %134 = tpu.matmul %131, %133, %cst_71 {dimension_numbers = #tpu.dot_dimension_numbers<[1], [0], [0], [1], [0, 0, 1, 1], [], []>} : vector<16x128xbf16>, vector<128x128xbf16>, vector<16x128xf32> -> vector<16x128xf32>
    %c0_72 = arith.constant 0 : index
    %c0_73 = arith.constant 0 : index
    %c0_74 = arith.constant 0 : index
    %135 = vector.load %arg18[%c0_72, %c0_73, %c0_74] : memref<1x1x128xf32, #tpu.memory_space<vmem>>, vector<1x1x128xf32>
    %136 = vector.shape_cast %135 : vector<1x1x128xf32> to vector<1x128xf32>
    %137 = vector.broadcast %136 : vector<1x128xf32> to vector<16x128xf32>
    %138 = arith.addf %134, %137 : vector<16x128xf32>
    %139 = arith.addf %83, %138 : vector<16x128xf32>
    %c0_75 = arith.constant 0 : index
    %c0_76 = arith.constant 0 : index
    %140 = vector.load %arg20[%c0_75, %c0_76] : memref<16x128xf32, #tpu.memory_space<vmem>>, vector<16x128xf32>
    tpu.vector_store %arg20[%c0_75, %c0_76], %139 {strides = array<i32>} : memref<16x128xf32, #tpu.memory_space<vmem>>, vector<16x128xf32>,
    %c1_i32 = arith.constant 1 : i32
    %141 = arith.cmpi eq, %arg1, %c1_i32 : i32
    %142 = arith.extui %141 : i1 to i32
    %c0_i32_77 = arith.constant 0 : i32
    %143 = arith.cmpi ne, %142, %c0_i32_77 : i32
    scf.if %143 {
      %c0_78 = arith.constant 0 : index
      %c0_79 = arith.constant 0 : index
      %c0_80 = arith.constant 0 : index
      %144 = vector.load %arg19[%c0_78, %c0_79, %c0_80] : memref<1x16x128xf32, #tpu.memory_space<vmem>>, vector<1x16x128xf32>
      %145 = vector.shape_cast %144 : vector<1x16x128xf32> to vector<16x128xf32>
      %146 = vector.shape_cast %139 : vector<16x128xf32> to vector<1x16x128xf32>
      tpu.vector_store %arg19[%c0_78, %c0_79, %c0_80], %146 {strides = array<i32>} : memref<1x16x128xf32, #tpu.memory_space<vmem>>, vector<1x16x128xf32>,
    } else {
    }
    return
  }
  func.func @transform_0(%arg0: i32, %arg1: i32) -> (i32, i32, i32) {
    %c0_i32 = arith.constant 0 : i32
    %c0_i32_0 = arith.constant 0 : i32
    %c0_i32_1 = arith.constant 0 : i32
    return %arg0, %c0_i32, %c0_i32_0 : i32, i32, i32
  }
  func.func @transform_1(%arg0: i32, %arg1: i32) -> (i32, i32, i32) {
    %c0_i32 = arith.constant 0 : i32
    %c0_i32_0 = arith.constant 0 : i32
    %c0_i32_1 = arith.constant 0 : i32
    return %arg1, %c0_i32, %c0_i32_0 : i32, i32, i32
  }
  func.func @transform_2(%arg0: i32, %arg1: i32) -> (i32, i32, i32) {
    %c0_i32 = arith.constant 0 : i32
    %c0_i32_0 = arith.constant 0 : i32
    %c0_i32_1 = arith.constant 0 : i32
    return %arg1, %c0_i32, %c0_i32_0 : i32, i32, i32
  }
  func.func @transform_3(%arg0: i32, %arg1: i32) -> (i32, i32, i32) {
    %c0_i32 = arith.constant 0 : i32
    %c0_i32_0 = arith.constant 0 : i32
    %c0_i32_1 = arith.constant 0 : i32
    return %arg1, %c0_i32, %c0_i32_0 : i32, i32, i32
  }
  func.func @transform_4(%arg0: i32, %arg1: i32) -> (i32, i32, i32) {
    %c0_i32 = arith.constant 0 : i32
    %c0_i32_0 = arith.constant 0 : i32
    %c0_i32_1 = arith.constant 0 : i32
    return %arg1, %c0_i32, %c0_i32_0 : i32, i32, i32
  }
  func.func @transform_5(%arg0: i32, %arg1: i32) -> (i32, i32, i32) {
    %c0_i32 = arith.constant 0 : i32
    %c0_i32_0 = arith.constant 0 : i32
    %c0_i32_1 = arith.constant 0 : i32
    return %arg1, %c0_i32, %c0_i32_0 : i32, i32, i32
  }
  func.func @transform_6(%arg0: i32, %arg1: i32) -> (i32, i32, i32) {
    %c0_i32 = arith.constant 0 : i32
    %c0_i32_0 = arith.constant 0 : i32
    %c0_i32_1 = arith.constant 0 : i32
    return %arg1, %c0_i32, %c0_i32_0 : i32, i32, i32
  }
  func.func @transform_7(%arg0: i32, %arg1: i32) -> (i32, i32, i32) {
    %c0_i32 = arith.constant 0 : i32
    %c0_i32_0 = arith.constant 0 : i32
    %c0_i32_1 = arith.constant 0 : i32
    return %arg1, %c0_i32, %c0_i32_0 : i32, i32, i32
  }
  func.func @transform_8(%arg0: i32, %arg1: i32) -> (i32, i32, i32) {
    %c0_i32 = arith.constant 0 : i32
    %c0_i32_0 = arith.constant 0 : i32
    %c0_i32_1 = arith.constant 0 : i32
    return %arg1, %c0_i32, %c0_i32_0 : i32, i32, i32
  }
  func.func @transform_9(%arg0: i32, %arg1: i32) -> (i32, i32, i32, i32) {
    %c0_i32 = arith.constant 0 : i32
    %c0_i32_0 = arith.constant 0 : i32
    %c0_i32_1 = arith.constant 0 : i32
    %c0_i32_2 = arith.constant 0 : i32
    return %arg1, %c0_i32, %c0_i32_0, %c0_i32_1 : i32, i32, i32, i32
  }
  func.func @transform_10(%arg0: i32, %arg1: i32) -> (i32, i32, i32) {
    %c0_i32 = arith.constant 0 : i32
    %c0_i32_0 = arith.constant 0 : i32
    %c0_i32_1 = arith.constant 0 : i32
    return %arg1, %c0_i32, %c0_i32_0 : i32, i32, i32
  }
  func.func @transform_11(%arg0: i32, %arg1: i32) -> (i32, i32, i32) {
    %c0_i32 = arith.constant 0 : i32
    %c0_i32_0 = arith.constant 0 : i32
    %c0_i32_1 = arith.constant 0 : i32
    return %arg1, %c0_i32, %c0_i32_0 : i32, i32, i32
  }
  func.func @transform_12(%arg0: i32, %arg1: i32) -> (i32, i32, i32) {
    %c0_i32 = arith.constant 0 : i32
    %c0_i32_0 = arith.constant 0 : i32
    %c0_i32_1 = arith.constant 0 : i32
    return %arg1, %c0_i32, %c0_i32_0 : i32, i32, i32
  }
  func.func @transform_13(%arg0: i32, %arg1: i32) -> (i32, i32, i32) {
    %c0_i32 = arith.constant 0 : i32
    %c0_i32_0 = arith.constant 0 : i32
    %c0_i32_1 = arith.constant 0 : i32
    return %arg1, %c0_i32, %c0_i32_0 : i32, i32, i32
  }
  func.func @transform_14(%arg0: i32, %arg1: i32) -> (i32, i32, i32) {
    %c0_i32 = arith.constant 0 : i32
    %c0_i32_0 = arith.constant 0 : i32
    %c0_i32_1 = arith.constant 0 : i32
    return %arg1, %c0_i32, %c0_i32_0 : i32, i32, i32
  }
  func.func @transform_15(%arg0: i32, %arg1: i32) -> (i32, i32, i32) {
    %c0_i32 = arith.constant 0 : i32
    %c0_i32_0 = arith.constant 0 : i32
    %c0_i32_1 = arith.constant 0 : i32
    return %arg1, %c0_i32, %c0_i32_0 : i32, i32, i32
  }
  func.func @transform_16(%arg0: i32, %arg1: i32) -> (i32, i32, i32) {
    %c0_i32 = arith.constant 0 : i32
    %c0_i32_0 = arith.constant 0 : i32
    %c0_i32_1 = arith.constant 0 : i32
    return %arg1, %c0_i32, %c0_i32_0 : i32, i32, i32
  }
  func.func @transform_17(%arg0: i32, %arg1: i32) -> (i32, i32, i32) {
    %c0_i32 = arith.constant 0 : i32
    %c0_i32_0 = arith.constant 0 : i32
    %c0_i32_1 = arith.constant 0 : i32
    return %arg0, %c0_i32, %c0_i32_0 : i32, i32, i32
  }
}

module attributes {stable_mosaic.version = 11 : i64} {
  func.func @_encoder_kernel(%arg0: i32, %arg1: i32, %arg2: memref<1x16x128xf32, #tpu.memory_space<vmem>>, %arg3: memref<1x1x128xf32, #tpu.memory_space<vmem>>, %arg4: memref<1x1x128xf32, #tpu.memory_space<vmem>>, %arg5: memref<1x128x128xbf16, #tpu.memory_space<vmem>>, %arg6: memref<1x128x1xf32, #tpu.memory_space<vmem>>, %arg7: memref<1x128x128xbf16, #tpu.memory_space<vmem>>, %arg8: memref<1x128x1xf32, #tpu.memory_space<vmem>>, %arg9: memref<1x128x128xbf16, #tpu.memory_space<vmem>>, %arg10: memref<1x128x1xf32, #tpu.memory_space<vmem>>, %arg11: memref<1x4x8x128xbf16, #tpu.memory_space<vmem>>, %arg12: memref<1x1x128xf32, #tpu.memory_space<vmem>>, %arg13: memref<1x1x128xf32, #tpu.memory_space<vmem>>, %arg14: memref<1x1x128xf32, #tpu.memory_space<vmem>>, %arg15: memref<1x128x128xbf16, #tpu.memory_space<vmem>>, %arg16: memref<1x1x128xf32, #tpu.memory_space<vmem>>, %arg17: memref<1x128x128xbf16, #tpu.memory_space<vmem>>, %arg18: memref<1x1x128xf32, #tpu.memory_space<vmem>>, %arg19: memref<1x16x128xf32, #tpu.memory_space<vmem>>, %arg20: memref<16x128xf32, #tpu.memory_space<vmem>>) attributes {dimension_semantics = [#tpu.dimension_semantics<parallel>, #tpu.dimension_semantics<arbitrary>], iteration_bounds = array<i64: 2, 2>, scalar_prefetch = 0 : i64, scratch_operands = 1 : i64, tpu.core_type = #tpu.core_type<tc>, window_params = [{transform_indices = @transform_0, window_bounds = array<i64: 1, 16, 128>}, {transform_indices = @transform_1, window_bounds = array<i64: 1, 1, 128>}, {transform_indices = @transform_2, window_bounds = array<i64: 1, 1, 128>}, {transform_indices = @transform_3, window_bounds = array<i64: 1, 128, 128>}, {transform_indices = @transform_4, window_bounds = array<i64: 1, 128, 1>}, {transform_indices = @transform_5, window_bounds = array<i64: 1, 128, 128>}, {transform_indices = @transform_6, window_bounds = array<i64: 1, 128, 1>}, {transform_indices = @transform_7, window_bounds = array<i64: 1, 128, 128>}, {transform_indices = @transform_8, window_bounds = array<i64: 1, 128, 1>}, {transform_indices = @transform_9, window_bounds = array<i64: 1, 4, 8, 128>}, {transform_indices = @transform_10, window_bounds = array<i64: 1, 1, 128>}, {transform_indices = @transform_11, window_bounds = array<i64: 1, 1, 128>}, {transform_indices = @transform_12, window_bounds = array<i64: 1, 1, 128>}, {transform_indices = @transform_13, window_bounds = array<i64: 1, 128, 128>}, {transform_indices = @transform_14, window_bounds = array<i64: 1, 1, 128>}, {transform_indices = @transform_15, window_bounds = array<i64: 1, 128, 128>}, {transform_indices = @transform_16, window_bounds = array<i64: 1, 1, 128>}, {transform_indices = @transform_17, window_bounds = array<i64: 1, 16, 128>}]} {
    %c0_i32 = arith.constant 0 : i32
    %0 = arith.cmpi eq, %arg1, %c0_i32 : i32
    %1 = arith.extui %0 : i1 to i32
    %c0_i32_0 = arith.constant 0 : i32
    %2 = arith.cmpi ne, %1, %c0_i32_0 : i32
    scf.if %2 {
      %c0_93 = arith.constant 0 : index
      %c0_94 = arith.constant 0 : index
      %c0_95 = arith.constant 0 : index
      %225 = vector.load %arg2[%c0_93, %c0_94, %c0_95] : memref<1x16x128xf32, #tpu.memory_space<vmem>>, vector<1x16x128xf32>
      %226 = vector.shape_cast %225 : vector<1x16x128xf32> to vector<16x128xf32>
      %c0_96 = arith.constant 0 : index
      %c0_97 = arith.constant 0 : index
      %227 = vector.load %arg20[%c0_96, %c0_97] : memref<16x128xf32, #tpu.memory_space<vmem>>, vector<16x128xf32>
      tpu.vector_store %arg20[%c0_96, %c0_97], %226 {strides = array<i32>} : memref<16x128xf32, #tpu.memory_space<vmem>>, vector<16x128xf32>,
    } else {
    }
    %c0 = arith.constant 0 : index
    %c0_1 = arith.constant 0 : index
    %3 = vector.load %arg20[%c0, %c0_1] : memref<16x128xf32, #tpu.memory_space<vmem>>, vector<16x128xf32>
    %c0_2 = arith.constant 0 : index
    %c0_3 = arith.constant 0 : index
    %c0_4 = arith.constant 0 : index
    %4 = vector.load %arg3[%c0_2, %c0_3, %c0_4] : memref<1x1x128xf32, #tpu.memory_space<vmem>>, vector<1x1x128xf32>
    %5 = vector.shape_cast %4 : vector<1x1x128xf32> to vector<1x128xf32>
    %c0_5 = arith.constant 0 : index
    %c0_6 = arith.constant 0 : index
    %c0_7 = arith.constant 0 : index
    %6 = vector.load %arg4[%c0_5, %c0_6, %c0_7] : memref<1x1x128xf32, #tpu.memory_space<vmem>>, vector<1x1x128xf32>
    %7 = vector.shape_cast %6 : vector<1x1x128xf32> to vector<1x128xf32>
    %cst = arith.constant dense<0.000000e+00> : vector<16xf32>
    %8 = vector.multi_reduction <add>, %3, %cst [1] : vector<16x128xf32> to vector<16xf32>
    %9 = vector.shape_cast %8 : vector<16xf32> to vector<16x1xf32>
    %cst_8 = arith.constant 3.125000e-02 : f32
    %10 = vector.broadcast %cst_8 : f32 to vector<16x1xf32>
    %11 = arith.mulf %9, %10 : vector<16x1xf32>
    %12 = arith.mulf %3, %3 : vector<16x128xf32>
    %cst_9 = arith.constant dense<0.000000e+00> : vector<16xf32>
    %13 = vector.multi_reduction <add>, %12, %cst_9 [1] : vector<16x128xf32> to vector<16xf32>
    %14 = vector.shape_cast %13 : vector<16xf32> to vector<16x1xf32>
    %cst_10 = arith.constant 3.125000e-02 : f32
    %15 = vector.broadcast %cst_10 : f32 to vector<16x1xf32>
    %16 = arith.mulf %14, %15 : vector<16x1xf32>
    %17 = arith.mulf %11, %11 : vector<16x1xf32>
    %18 = arith.subf %16, %17 : vector<16x1xf32>
    %19 = vector.broadcast %11 : vector<16x1xf32> to vector<16x128xf32>
    %20 = arith.subf %3, %19 : vector<16x128xf32>
    %cst_11 = arith.constant 9.99999997E-7 : f32
    %21 = vector.broadcast %cst_11 : f32 to vector<16x1xf32>
    %22 = arith.addf %18, %21 : vector<16x1xf32>
    %23 = math.rsqrt %22 : vector<16x1xf32>
    %24 = vector.broadcast %23 : vector<16x1xf32> to vector<16x128xf32>
    %25 = arith.mulf %20, %24 : vector<16x128xf32>
    %26 = vector.broadcast %5 : vector<1x128xf32> to vector<16x128xf32>
    %27 = arith.mulf %25, %26 : vector<16x128xf32>
    %28 = vector.broadcast %7 : vector<1x128xf32> to vector<16x128xf32>
    %29 = arith.addf %27, %28 : vector<16x128xf32>
    %30 = arith.truncf %29 : vector<16x128xf32> to vector<16x128xbf16>
    %c0_12 = arith.constant 0 : index
    %c0_13 = arith.constant 0 : index
    %c0_14 = arith.constant 0 : index
    %31 = vector.load %arg5[%c0_12, %c0_13, %c0_14] : memref<1x128x128xbf16, #tpu.memory_space<vmem>>, vector<1x128x128xbf16>
    %32 = vector.shape_cast %31 : vector<1x128x128xbf16> to vector<128x128xbf16>
    "tpu.trace_start"() <{level = 10 : i32, message = "od,sd->os"}> : () -> ()
    %cst_15 = arith.constant dense<0.000000e+00> : vector<128x16xf32>
    %33 = tpu.matmul %32, %30, %cst_15 {dimension_numbers = #tpu.dot_dimension_numbers<[1], [1], [0], [0], [0, 0, 1, 0], [], []>} : vector<128x128xbf16>, vector<16x128xbf16>, vector<128x16xf32> -> vector<128x16xf32>
    "tpu.trace_stop"() : () -> ()
    %c0_16 = arith.constant 0 : index
    %c0_17 = arith.constant 0 : index
    %c0_18 = arith.constant 0 : index
    %34 = vector.load %arg6[%c0_16, %c0_17, %c0_18] : memref<1x128x1xf32, #tpu.memory_space<vmem>>, vector<1x128x1xf32>
    %35 = vector.shape_cast %34 : vector<1x128x1xf32> to vector<128x1xf32>
    %36 = vector.broadcast %35 : vector<128x1xf32> to vector<128x16xf32>
    %37 = arith.addf %33, %36 : vector<128x16xf32>
    %c0_19 = arith.constant 0 : index
    %c0_20 = arith.constant 0 : index
    %c0_21 = arith.constant 0 : index
    %38 = vector.load %arg7[%c0_19, %c0_20, %c0_21] : memref<1x128x128xbf16, #tpu.memory_space<vmem>>, vector<1x128x128xbf16>
    %39 = vector.shape_cast %38 : vector<1x128x128xbf16> to vector<128x128xbf16>
    "tpu.trace_start"() <{level = 10 : i32, message = "od,sd->os"}> : () -> ()
    %cst_22 = arith.constant dense<0.000000e+00> : vector<128x16xf32>
    %40 = tpu.matmul %39, %30, %cst_22 {dimension_numbers = #tpu.dot_dimension_numbers<[1], [1], [0], [0], [0, 0, 1, 0], [], []>} : vector<128x128xbf16>, vector<16x128xbf16>, vector<128x16xf32> -> vector<128x16xf32>
    "tpu.trace_stop"() : () -> ()
    %c0_23 = arith.constant 0 : index
    %c0_24 = arith.constant 0 : index
    %c0_25 = arith.constant 0 : index
    %41 = vector.load %arg8[%c0_23, %c0_24, %c0_25] : memref<1x128x1xf32, #tpu.memory_space<vmem>>, vector<1x128x1xf32>
    %42 = vector.shape_cast %41 : vector<1x128x1xf32> to vector<128x1xf32>
    %43 = vector.broadcast %42 : vector<128x1xf32> to vector<128x16xf32>
    %44 = arith.addf %40, %43 : vector<128x16xf32>
    %c0_26 = arith.constant 0 : index
    %c0_27 = arith.constant 0 : index
    %c0_28 = arith.constant 0 : index
    %45 = vector.load %arg9[%c0_26, %c0_27, %c0_28] : memref<1x128x128xbf16, #tpu.memory_space<vmem>>, vector<1x128x128xbf16>
    %46 = vector.shape_cast %45 : vector<1x128x128xbf16> to vector<128x128xbf16>
    "tpu.trace_start"() <{level = 10 : i32, message = "od,sd->os"}> : () -> ()
    %cst_29 = arith.constant dense<0.000000e+00> : vector<128x16xf32>
    %47 = tpu.matmul %46, %30, %cst_29 {dimension_numbers = #tpu.dot_dimension_numbers<[1], [1], [0], [0], [0, 0, 1, 0], [], []>} : vector<128x128xbf16>, vector<16x128xbf16>, vector<128x16xf32> -> vector<128x16xf32>
    "tpu.trace_stop"() : () -> ()
    %c0_30 = arith.constant 0 : index
    %c0_31 = arith.constant 0 : index
    %c0_32 = arith.constant 0 : index
    %48 = vector.load %arg10[%c0_30, %c0_31, %c0_32] : memref<1x128x1xf32, #tpu.memory_space<vmem>>, vector<1x128x1xf32>
    %49 = vector.shape_cast %48 : vector<1x128x1xf32> to vector<128x1xf32>
    %50 = vector.broadcast %49 : vector<128x1xf32> to vector<128x16xf32>
    %51 = arith.addf %47, %50 : vector<128x16xf32>
    %52 = vector.extract_strided_slice %37 {offsets = [0, 0], sizes = [32, 16], strides = [1, 1]} : vector<128x16xf32> to vector<32x16xf32>
    %53 = vector.shape_cast %52 : vector<32x16xf32> to vector<4x8x16xf32>
    %54 = arith.truncf %53 : vector<4x8x16xf32> to vector<4x8x16xbf16>
    %55 = vector.extract_strided_slice %44 {offsets = [0, 0], sizes = [32, 16], strides = [1, 1]} : vector<128x16xf32> to vector<32x16xf32>
    %56 = vector.shape_cast %55 : vector<32x16xf32> to vector<4x8x16xf32>
    %57 = arith.truncf %56 : vector<4x8x16xf32> to vector<4x8x16xbf16>
    %58 = vector.extract_strided_slice %51 {offsets = [0, 0], sizes = [32, 16], strides = [1, 1]} : vector<128x16xf32> to vector<32x16xf32>
    %59 = vector.shape_cast %58 : vector<32x16xf32> to vector<4x8x16xf32>
    %60 = arith.truncf %59 : vector<4x8x16xf32> to vector<4x8x16xbf16>
    %c0_33 = arith.constant 0 : index
    %c0_34 = arith.constant 0 : index
    %c0_35 = arith.constant 0 : index
    %c0_36 = arith.constant 0 : index
    %61 = vector.load %arg11[%c0_33, %c0_34, %c0_35, %c0_36] : memref<1x4x8x128xbf16, #tpu.memory_space<vmem>>, vector<1x4x8x128xbf16>
    %62 = vector.shape_cast %61 : vector<1x4x8x128xbf16> to vector<4x8x128xbf16>
    %cst_37 = arith.constant 0.000000e+00 : f32
    %63 = vector.broadcast %cst_37 : f32 to vector<16x128xf32>
    %64 = vector.extract_strided_slice %54 {offsets = [0, 0, 0], sizes = [1, 8, 16], strides = [1, 1, 1]} : vector<4x8x16xbf16> to vector<1x8x16xbf16>
    %65 = vector.shape_cast %64 : vector<1x8x16xbf16> to vector<8x16xbf16>
    %66 = vector.extract_strided_slice %57 {offsets = [0, 0, 0], sizes = [1, 8, 16], strides = [1, 1, 1]} : vector<4x8x16xbf16> to vector<1x8x16xbf16>
    %67 = vector.shape_cast %66 : vector<1x8x16xbf16> to vector<8x16xbf16>
    "tpu.trace_start"() <{level = 10 : i32, message = "dq,dk->qk"}> : () -> ()
    %cst_38 = arith.constant dense<0.000000e+00> : vector<16x16xf32>
    %68 = tpu.matmul %65, %67, %cst_38 {dimension_numbers = #tpu.dot_dimension_numbers<[0], [0], [1], [1], [0, 1, 1, 1], [], []>} : vector<8x16xbf16>, vector<8x16xbf16>, vector<16x16xf32> -> vector<16x16xf32>
    "tpu.trace_stop"() : () -> ()
    %cst_39 = arith.constant dense<0xFF800000> : vector<16xf32>
    %69 = vector.multi_reduction <maximumf>, %68, %cst_39 [1] : vector<16x16xf32> to vector<16xf32>
    %70 = vector.shape_cast %69 : vector<16xf32> to vector<16x1xf32>
    %71 = vector.broadcast %70 : vector<16x1xf32> to vector<16x16xf32>
    %72 = arith.subf %68, %71 : vector<16x16xf32>
    %73 = math.exp %72 : vector<16x16xf32>
    %cst_40 = arith.constant dense<0.000000e+00> : vector<16xf32>
    %74 = vector.multi_reduction <add>, %73, %cst_40 [1] : vector<16x16xf32> to vector<16xf32>
    %75 = vector.shape_cast %74 : vector<16xf32> to vector<16x1xf32>
    %76 = tpu.reciprocal %75 {approx = true} : vector<16x1xf32> -> vector<16x1xf32>
    %77 = vector.broadcast %76 : vector<16x1xf32> to vector<16x16xf32>
    %78 = arith.mulf %73, %77 : vector<16x16xf32>
    %79 = arith.truncf %78 : vector<16x16xf32> to vector<16x16xbf16>
    %80 = vector.extract_strided_slice %60 {offsets = [0, 0, 0], sizes = [1, 8, 16], strides = [1, 1, 1]} : vector<4x8x16xbf16> to vector<1x8x16xbf16>
    %81 = vector.shape_cast %80 : vector<1x8x16xbf16> to vector<8x16xbf16>
    "tpu.trace_start"() <{level = 10 : i32, message = "qk,dk->qd"}> : () -> ()
    %cst_41 = arith.constant dense<0.000000e+00> : vector<16x8xf32>
    %82 = tpu.matmul %79, %81, %cst_41 {dimension_numbers = #tpu.dot_dimension_numbers<[1], [1], [0], [0], [0, 0, 1, 0], [], []>} : vector<16x16xbf16>, vector<8x16xbf16>, vector<16x8xf32> -> vector<16x8xf32>
    "tpu.trace_stop"() : () -> ()
    %83 = arith.truncf %82 : vector<16x8xf32> to vector<16x8xbf16>
    %84 = vector.extract_strided_slice %62 {offsets = [0, 0, 0], sizes = [1, 8, 128], strides = [1, 1, 1]} : vector<4x8x128xbf16> to vector<1x8x128xbf16>
    %85 = vector.shape_cast %84 : vector<1x8x128xbf16> to vector<8x128xbf16>
    %cst_42 = arith.constant dense<0.000000e+00> : vector<16x128xf32>
    %86 = tpu.matmul %83, %85, %cst_42 {dimension_numbers = #tpu.dot_dimension_numbers<[1], [0], [0], [1], [0, 0, 1, 1], [], []>} : vector<16x8xbf16>, vector<8x128xbf16>, vector<16x128xf32> -> vector<16x128xf32>
    %87 = arith.addf %63, %86 : vector<16x128xf32>
    %88 = vector.extract_strided_slice %54 {offsets = [1, 0, 0], sizes = [1, 8, 16], strides = [1, 1, 1]} : vector<4x8x16xbf16> to vector<1x8x16xbf16>
    %89 = vector.shape_cast %88 : vector<1x8x16xbf16> to vector<8x16xbf16>
    %90 = vector.extract_strided_slice %57 {offsets = [1, 0, 0], sizes = [1, 8, 16], strides = [1, 1, 1]} : vector<4x8x16xbf16> to vector<1x8x16xbf16>
    %91 = vector.shape_cast %90 : vector<1x8x16xbf16> to vector<8x16xbf16>
    "tpu.trace_start"() <{level = 10 : i32, message = "dq,dk->qk"}> : () -> ()
    %cst_43 = arith.constant dense<0.000000e+00> : vector<16x16xf32>
    %92 = tpu.matmul %89, %91, %cst_43 {dimension_numbers = #tpu.dot_dimension_numbers<[0], [0], [1], [1], [0, 1, 1, 1], [], []>} : vector<8x16xbf16>, vector<8x16xbf16>, vector<16x16xf32> -> vector<16x16xf32>
    "tpu.trace_stop"() : () -> ()
    %cst_44 = arith.constant dense<0xFF800000> : vector<16xf32>
    %93 = vector.multi_reduction <maximumf>, %92, %cst_44 [1] : vector<16x16xf32> to vector<16xf32>
    %94 = vector.shape_cast %93 : vector<16xf32> to vector<16x1xf32>
    %95 = vector.broadcast %94 : vector<16x1xf32> to vector<16x16xf32>
    %96 = arith.subf %92, %95 : vector<16x16xf32>
    %97 = math.exp %96 : vector<16x16xf32>
    %cst_45 = arith.constant dense<0.000000e+00> : vector<16xf32>
    %98 = vector.multi_reduction <add>, %97, %cst_45 [1] : vector<16x16xf32> to vector<16xf32>
    %99 = vector.shape_cast %98 : vector<16xf32> to vector<16x1xf32>
    %100 = tpu.reciprocal %99 {approx = true} : vector<16x1xf32> -> vector<16x1xf32>
    %101 = vector.broadcast %100 : vector<16x1xf32> to vector<16x16xf32>
    %102 = arith.mulf %97, %101 : vector<16x16xf32>
    %103 = arith.truncf %102 : vector<16x16xf32> to vector<16x16xbf16>
    %104 = vector.extract_strided_slice %60 {offsets = [1, 0, 0], sizes = [1, 8, 16], strides = [1, 1, 1]} : vector<4x8x16xbf16> to vector<1x8x16xbf16>
    %105 = vector.shape_cast %104 : vector<1x8x16xbf16> to vector<8x16xbf16>
    "tpu.trace_start"() <{level = 10 : i32, message = "qk,dk->qd"}> : () -> ()
    %cst_46 = arith.constant dense<0.000000e+00> : vector<16x8xf32>
    %106 = tpu.matmul %103, %105, %cst_46 {dimension_numbers = #tpu.dot_dimension_numbers<[1], [1], [0], [0], [0, 0, 1, 0], [], []>} : vector<16x16xbf16>, vector<8x16xbf16>, vector<16x8xf32> -> vector<16x8xf32>
    "tpu.trace_stop"() : () -> ()
    %107 = arith.truncf %106 : vector<16x8xf32> to vector<16x8xbf16>
    %108 = vector.extract_strided_slice %62 {offsets = [1, 0, 0], sizes = [1, 8, 128], strides = [1, 1, 1]} : vector<4x8x128xbf16> to vector<1x8x128xbf16>
    %109 = vector.shape_cast %108 : vector<1x8x128xbf16> to vector<8x128xbf16>
    %cst_47 = arith.constant dense<0.000000e+00> : vector<16x128xf32>
    %110 = tpu.matmul %107, %109, %cst_47 {dimension_numbers = #tpu.dot_dimension_numbers<[1], [0], [0], [1], [0, 0, 1, 1], [], []>} : vector<16x8xbf16>, vector<8x128xbf16>, vector<16x128xf32> -> vector<16x128xf32>
    %111 = arith.addf %87, %110 : vector<16x128xf32>
    %112 = vector.extract_strided_slice %54 {offsets = [2, 0, 0], sizes = [1, 8, 16], strides = [1, 1, 1]} : vector<4x8x16xbf16> to vector<1x8x16xbf16>
    %113 = vector.shape_cast %112 : vector<1x8x16xbf16> to vector<8x16xbf16>
    %114 = vector.extract_strided_slice %57 {offsets = [2, 0, 0], sizes = [1, 8, 16], strides = [1, 1, 1]} : vector<4x8x16xbf16> to vector<1x8x16xbf16>
    %115 = vector.shape_cast %114 : vector<1x8x16xbf16> to vector<8x16xbf16>
    "tpu.trace_start"() <{level = 10 : i32, message = "dq,dk->qk"}> : () -> ()
    %cst_48 = arith.constant dense<0.000000e+00> : vector<16x16xf32>
    %116 = tpu.matmul %113, %115, %cst_48 {dimension_numbers = #tpu.dot_dimension_numbers<[0], [0], [1], [1], [0, 1, 1, 1], [], []>} : vector<8x16xbf16>, vector<8x16xbf16>, vector<16x16xf32> -> vector<16x16xf32>
    "tpu.trace_stop"() : () -> ()
    %cst_49 = arith.constant dense<0xFF800000> : vector<16xf32>
    %117 = vector.multi_reduction <maximumf>, %116, %cst_49 [1] : vector<16x16xf32> to vector<16xf32>
    %118 = vector.shape_cast %117 : vector<16xf32> to vector<16x1xf32>
    %119 = vector.broadcast %118 : vector<16x1xf32> to vector<16x16xf32>
    %120 = arith.subf %116, %119 : vector<16x16xf32>
    %121 = math.exp %120 : vector<16x16xf32>
    %cst_50 = arith.constant dense<0.000000e+00> : vector<16xf32>
    %122 = vector.multi_reduction <add>, %121, %cst_50 [1] : vector<16x16xf32> to vector<16xf32>
    %123 = vector.shape_cast %122 : vector<16xf32> to vector<16x1xf32>
    %124 = tpu.reciprocal %123 {approx = true} : vector<16x1xf32> -> vector<16x1xf32>
    %125 = vector.broadcast %124 : vector<16x1xf32> to vector<16x16xf32>
    %126 = arith.mulf %121, %125 : vector<16x16xf32>
    %127 = arith.truncf %126 : vector<16x16xf32> to vector<16x16xbf16>
    %128 = vector.extract_strided_slice %60 {offsets = [2, 0, 0], sizes = [1, 8, 16], strides = [1, 1, 1]} : vector<4x8x16xbf16> to vector<1x8x16xbf16>
    %129 = vector.shape_cast %128 : vector<1x8x16xbf16> to vector<8x16xbf16>
    "tpu.trace_start"() <{level = 10 : i32, message = "qk,dk->qd"}> : () -> ()
    %cst_51 = arith.constant dense<0.000000e+00> : vector<16x8xf32>
    %130 = tpu.matmul %127, %129, %cst_51 {dimension_numbers = #tpu.dot_dimension_numbers<[1], [1], [0], [0], [0, 0, 1, 0], [], []>} : vector<16x16xbf16>, vector<8x16xbf16>, vector<16x8xf32> -> vector<16x8xf32>
    "tpu.trace_stop"() : () -> ()
    %131 = arith.truncf %130 : vector<16x8xf32> to vector<16x8xbf16>
    %132 = vector.extract_strided_slice %62 {offsets = [2, 0, 0], sizes = [1, 8, 128], strides = [1, 1, 1]} : vector<4x8x128xbf16> to vector<1x8x128xbf16>
    %133 = vector.shape_cast %132 : vector<1x8x128xbf16> to vector<8x128xbf16>
    %cst_52 = arith.constant dense<0.000000e+00> : vector<16x128xf32>
    %134 = tpu.matmul %131, %133, %cst_52 {dimension_numbers = #tpu.dot_dimension_numbers<[1], [0], [0], [1], [0, 0, 1, 1], [], []>} : vector<16x8xbf16>, vector<8x128xbf16>, vector<16x128xf32> -> vector<16x128xf32>
    %135 = arith.addf %111, %134 : vector<16x128xf32>
    %136 = vector.extract_strided_slice %54 {offsets = [3, 0, 0], sizes = [1, 8, 16], strides = [1, 1, 1]} : vector<4x8x16xbf16> to vector<1x8x16xbf16>
    %137 = vector.shape_cast %136 : vector<1x8x16xbf16> to vector<8x16xbf16>
    %138 = vector.extract_strided_slice %57 {offsets = [3, 0, 0], sizes = [1, 8, 16], strides = [1, 1, 1]} : vector<4x8x16xbf16> to vector<1x8x16xbf16>
    %139 = vector.shape_cast %138 : vector<1x8x16xbf16> to vector<8x16xbf16>
    "tpu.trace_start"() <{level = 10 : i32, message = "dq,dk->qk"}> : () -> ()
    %cst_53 = arith.constant dense<0.000000e+00> : vector<16x16xf32>
    %140 = tpu.matmul %137, %139, %cst_53 {dimension_numbers = #tpu.dot_dimension_numbers<[0], [0], [1], [1], [0, 1, 1, 1], [], []>} : vector<8x16xbf16>, vector<8x16xbf16>, vector<16x16xf32> -> vector<16x16xf32>
    "tpu.trace_stop"() : () -> ()
    %cst_54 = arith.constant dense<0xFF800000> : vector<16xf32>
    %141 = vector.multi_reduction <maximumf>, %140, %cst_54 [1] : vector<16x16xf32> to vector<16xf32>
    %142 = vector.shape_cast %141 : vector<16xf32> to vector<16x1xf32>
    %143 = vector.broadcast %142 : vector<16x1xf32> to vector<16x16xf32>
    %144 = arith.subf %140, %143 : vector<16x16xf32>
    %145 = math.exp %144 : vector<16x16xf32>
    %cst_55 = arith.constant dense<0.000000e+00> : vector<16xf32>
    %146 = vector.multi_reduction <add>, %145, %cst_55 [1] : vector<16x16xf32> to vector<16xf32>
    %147 = vector.shape_cast %146 : vector<16xf32> to vector<16x1xf32>
    %148 = tpu.reciprocal %147 {approx = true} : vector<16x1xf32> -> vector<16x1xf32>
    %149 = vector.broadcast %148 : vector<16x1xf32> to vector<16x16xf32>
    %150 = arith.mulf %145, %149 : vector<16x16xf32>
    %151 = arith.truncf %150 : vector<16x16xf32> to vector<16x16xbf16>
    %152 = vector.extract_strided_slice %60 {offsets = [3, 0, 0], sizes = [1, 8, 16], strides = [1, 1, 1]} : vector<4x8x16xbf16> to vector<1x8x16xbf16>
    %153 = vector.shape_cast %152 : vector<1x8x16xbf16> to vector<8x16xbf16>
    "tpu.trace_start"() <{level = 10 : i32, message = "qk,dk->qd"}> : () -> ()
    %cst_56 = arith.constant dense<0.000000e+00> : vector<16x8xf32>
    %154 = tpu.matmul %151, %153, %cst_56 {dimension_numbers = #tpu.dot_dimension_numbers<[1], [1], [0], [0], [0, 0, 1, 0], [], []>} : vector<16x16xbf16>, vector<8x16xbf16>, vector<16x8xf32> -> vector<16x8xf32>
    "tpu.trace_stop"() : () -> ()
    %155 = arith.truncf %154 : vector<16x8xf32> to vector<16x8xbf16>
    %156 = vector.extract_strided_slice %62 {offsets = [3, 0, 0], sizes = [1, 8, 128], strides = [1, 1, 1]} : vector<4x8x128xbf16> to vector<1x8x128xbf16>
    %157 = vector.shape_cast %156 : vector<1x8x128xbf16> to vector<8x128xbf16>
    %cst_57 = arith.constant dense<0.000000e+00> : vector<16x128xf32>
    %158 = tpu.matmul %155, %157, %cst_57 {dimension_numbers = #tpu.dot_dimension_numbers<[1], [0], [0], [1], [0, 0, 1, 1], [], []>} : vector<16x8xbf16>, vector<8x128xbf16>, vector<16x128xf32> -> vector<16x128xf32>
    %159 = arith.addf %135, %158 : vector<16x128xf32>
    %160 = arith.addf %3, %159 : vector<16x128xf32>
    %c0_58 = arith.constant 0 : index
    %c0_59 = arith.constant 0 : index
    %c0_60 = arith.constant 0 : index
    %161 = vector.load %arg12[%c0_58, %c0_59, %c0_60] : memref<1x1x128xf32, #tpu.memory_space<vmem>>, vector<1x1x128xf32>
    %162 = vector.shape_cast %161 : vector<1x1x128xf32> to vector<1x128xf32>
    %163 = vector.broadcast %162 : vector<1x128xf32> to vector<16x128xf32>
    %164 = arith.addf %160, %163 : vector<16x128xf32>
    %c0_61 = arith.constant 0 : index
    %c0_62 = arith.constant 0 : index
    %c0_63 = arith.constant 0 : index
    %165 = vector.load %arg13[%c0_61, %c0_62, %c0_63] : memref<1x1x128xf32, #tpu.memory_space<vmem>>, vector<1x1x128xf32>
    %166 = vector.shape_cast %165 : vector<1x1x128xf32> to vector<1x128xf32>
    %c0_64 = arith.constant 0 : index
    %c0_65 = arith.constant 0 : index
    %c0_66 = arith.constant 0 : index
    %167 = vector.load %arg14[%c0_64, %c0_65, %c0_66] : memref<1x1x128xf32, #tpu.memory_space<vmem>>, vector<1x1x128xf32>
    %168 = vector.shape_cast %167 : vector<1x1x128xf32> to vector<1x128xf32>
    %cst_67 = arith.constant dense<0.000000e+00> : vector<16xf32>
    %169 = vector.multi_reduction <add>, %164, %cst_67 [1] : vector<16x128xf32> to vector<16xf32>
    %170 = vector.shape_cast %169 : vector<16xf32> to vector<16x1xf32>
    %cst_68 = arith.constant 3.125000e-02 : f32
    %171 = vector.broadcast %cst_68 : f32 to vector<16x1xf32>
    %172 = arith.mulf %170, %171 : vector<16x1xf32>
    %173 = arith.mulf %164, %164 : vector<16x128xf32>
    %cst_69 = arith.constant dense<0.000000e+00> : vector<16xf32>
    %174 = vector.multi_reduction <add>, %173, %cst_69 [1] : vector<16x128xf32> to vector<16xf32>
    %175 = vector.shape_cast %174 : vector<16xf32> to vector<16x1xf32>
    %cst_70 = arith.constant 3.125000e-02 : f32
    %176 = vector.broadcast %cst_70 : f32 to vector<16x1xf32>
    %177 = arith.mulf %175, %176 : vector<16x1xf32>
    %178 = arith.mulf %172, %172 : vector<16x1xf32>
    %179 = arith.subf %177, %178 : vector<16x1xf32>
    %180 = vector.broadcast %172 : vector<16x1xf32> to vector<16x128xf32>
    %181 = arith.subf %164, %180 : vector<16x128xf32>
    %cst_71 = arith.constant 9.99999997E-7 : f32
    %182 = vector.broadcast %cst_71 : f32 to vector<16x1xf32>
    %183 = arith.addf %179, %182 : vector<16x1xf32>
    %184 = math.rsqrt %183 : vector<16x1xf32>
    %185 = vector.broadcast %184 : vector<16x1xf32> to vector<16x128xf32>
    %186 = arith.mulf %181, %185 : vector<16x128xf32>
    %187 = vector.broadcast %166 : vector<1x128xf32> to vector<16x128xf32>
    %188 = arith.mulf %186, %187 : vector<16x128xf32>
    %189 = vector.broadcast %168 : vector<1x128xf32> to vector<16x128xf32>
    %190 = arith.addf %188, %189 : vector<16x128xf32>
    %191 = arith.truncf %190 : vector<16x128xf32> to vector<16x128xbf16>
    %c0_72 = arith.constant 0 : index
    %c0_73 = arith.constant 0 : index
    %c0_74 = arith.constant 0 : index
    %192 = vector.load %arg15[%c0_72, %c0_73, %c0_74] : memref<1x128x128xbf16, #tpu.memory_space<vmem>>, vector<1x128x128xbf16>
    %193 = vector.shape_cast %192 : vector<1x128x128xbf16> to vector<128x128xbf16>
    %cst_75 = arith.constant dense<0.000000e+00> : vector<16x128xf32>
    %194 = tpu.matmul %191, %193, %cst_75 {dimension_numbers = #tpu.dot_dimension_numbers<[1], [0], [0], [1], [0, 0, 1, 1], [], []>} : vector<16x128xbf16>, vector<128x128xbf16>, vector<16x128xf32> -> vector<16x128xf32>
    %c0_76 = arith.constant 0 : index
    %c0_77 = arith.constant 0 : index
    %c0_78 = arith.constant 0 : index
    %195 = vector.load %arg16[%c0_76, %c0_77, %c0_78] : memref<1x1x128xf32, #tpu.memory_space<vmem>>, vector<1x1x128xf32>
    %196 = vector.shape_cast %195 : vector<1x1x128xf32> to vector<1x128xf32>
    %197 = vector.broadcast %196 : vector<1x128xf32> to vector<16x128xf32>
    %198 = arith.addf %194, %197 : vector<16x128xf32>
    %cst_79 = arith.constant 5.000000e-01 : f32
    %199 = vector.broadcast %cst_79 : f32 to vector<16x128xf32>
    %200 = arith.mulf %199, %198 : vector<16x128xf32>
    %cst_80 = arith.constant 4.471500e-02 : f32
    %201 = vector.broadcast %cst_80 : f32 to vector<16x128xf32>
    %202 = arith.mulf %201, %198 : vector<16x128xf32>
    %203 = arith.mulf %202, %198 : vector<16x128xf32>
    %204 = arith.mulf %203, %198 : vector<16x128xf32>
    %205 = arith.addf %198, %204 : vector<16x128xf32>
    %cst_81 = arith.constant 0.797884583 : f32
    %206 = vector.broadcast %cst_81 : f32 to vector<16x128xf32>
    %207 = arith.mulf %206, %205 : vector<16x128xf32>
    %208 = math.tanh %207 : vector<16x128xf32>
    %cst_82 = arith.constant 1.000000e+00 : f32
    %209 = vector.broadcast %cst_82 : f32 to vector<16x128xf32>
    %210 = arith.addf %209, %208 : vector<16x128xf32>
    %211 = arith.mulf %200, %210 : vector<16x128xf32>
    %212 = arith.truncf %211 : vector<16x128xf32> to vector<16x128xbf16>
    %c0_83 = arith.constant 0 : index
    %c0_84 = arith.constant 0 : index
    %c0_85 = arith.constant 0 : index
    %213 = vector.load %arg17[%c0_83, %c0_84, %c0_85] : memref<1x128x128xbf16, #tpu.memory_space<vmem>>, vector<1x128x128xbf16>
    %214 = vector.shape_cast %213 : vector<1x128x128xbf16> to vector<128x128xbf16>
    %cst_86 = arith.constant dense<0.000000e+00> : vector<16x128xf32>
    %215 = tpu.matmul %212, %214, %cst_86 {dimension_numbers = #tpu.dot_dimension_numbers<[1], [0], [0], [1], [0, 0, 1, 1], [], []>} : vector<16x128xbf16>, vector<128x128xbf16>, vector<16x128xf32> -> vector<16x128xf32>
    %c0_87 = arith.constant 0 : index
    %c0_88 = arith.constant 0 : index
    %c0_89 = arith.constant 0 : index
    %216 = vector.load %arg18[%c0_87, %c0_88, %c0_89] : memref<1x1x128xf32, #tpu.memory_space<vmem>>, vector<1x1x128xf32>
    %217 = vector.shape_cast %216 : vector<1x1x128xf32> to vector<1x128xf32>
    %218 = vector.broadcast %217 : vector<1x128xf32> to vector<16x128xf32>
    %219 = arith.addf %215, %218 : vector<16x128xf32>
    %220 = arith.addf %164, %219 : vector<16x128xf32>
    %c0_90 = arith.constant 0 : index
    %c0_91 = arith.constant 0 : index
    %221 = vector.load %arg20[%c0_90, %c0_91] : memref<16x128xf32, #tpu.memory_space<vmem>>, vector<16x128xf32>
    tpu.vector_store %arg20[%c0_90, %c0_91], %220 {strides = array<i32>} : memref<16x128xf32, #tpu.memory_space<vmem>>, vector<16x128xf32>,
    %c1_i32 = arith.constant 1 : i32
    %222 = arith.cmpi eq, %arg1, %c1_i32 : i32
    %223 = arith.extui %222 : i1 to i32
    %c0_i32_92 = arith.constant 0 : i32
    %224 = arith.cmpi ne, %223, %c0_i32_92 : i32
    scf.if %224 {
      %c0_93 = arith.constant 0 : index
      %c0_94 = arith.constant 0 : index
      %c0_95 = arith.constant 0 : index
      %225 = vector.load %arg19[%c0_93, %c0_94, %c0_95] : memref<1x16x128xf32, #tpu.memory_space<vmem>>, vector<1x16x128xf32>
      %226 = vector.shape_cast %225 : vector<1x16x128xf32> to vector<16x128xf32>
      %227 = vector.shape_cast %220 : vector<16x128xf32> to vector<1x16x128xf32>
      tpu.vector_store %arg19[%c0_93, %c0_94, %c0_95], %227 {strides = array<i32>} : memref<1x16x128xf32, #tpu.memory_space<vmem>>, vector<1x16x128xf32>,
    } else {
    }
    return
  }
  func.func @transform_0(%arg0: i32, %arg1: i32) -> (i32, i32, i32) {
    %c0_i32 = arith.constant 0 : i32
    %c0_i32_0 = arith.constant 0 : i32
    %c0_i32_1 = arith.constant 0 : i32
    return %arg0, %c0_i32, %c0_i32_0 : i32, i32, i32
  }
  func.func @transform_1(%arg0: i32, %arg1: i32) -> (i32, i32, i32) {
    %c0_i32 = arith.constant 0 : i32
    %c0_i32_0 = arith.constant 0 : i32
    %c0_i32_1 = arith.constant 0 : i32
    return %arg1, %c0_i32, %c0_i32_0 : i32, i32, i32
  }
  func.func @transform_2(%arg0: i32, %arg1: i32) -> (i32, i32, i32) {
    %c0_i32 = arith.constant 0 : i32
    %c0_i32_0 = arith.constant 0 : i32
    %c0_i32_1 = arith.constant 0 : i32
    return %arg1, %c0_i32, %c0_i32_0 : i32, i32, i32
  }
  func.func @transform_3(%arg0: i32, %arg1: i32) -> (i32, i32, i32) {
    %c0_i32 = arith.constant 0 : i32
    %c0_i32_0 = arith.constant 0 : i32
    %c0_i32_1 = arith.constant 0 : i32
    return %arg1, %c0_i32, %c0_i32_0 : i32, i32, i32
  }
  func.func @transform_4(%arg0: i32, %arg1: i32) -> (i32, i32, i32) {
    %c0_i32 = arith.constant 0 : i32
    %c0_i32_0 = arith.constant 0 : i32
    %c0_i32_1 = arith.constant 0 : i32
    return %arg1, %c0_i32, %c0_i32_0 : i32, i32, i32
  }
  func.func @transform_5(%arg0: i32, %arg1: i32) -> (i32, i32, i32) {
    %c0_i32 = arith.constant 0 : i32
    %c0_i32_0 = arith.constant 0 : i32
    %c0_i32_1 = arith.constant 0 : i32
    return %arg1, %c0_i32, %c0_i32_0 : i32, i32, i32
  }
  func.func @transform_6(%arg0: i32, %arg1: i32) -> (i32, i32, i32) {
    %c0_i32 = arith.constant 0 : i32
    %c0_i32_0 = arith.constant 0 : i32
    %c0_i32_1 = arith.constant 0 : i32
    return %arg1, %c0_i32, %c0_i32_0 : i32, i32, i32
  }
  func.func @transform_7(%arg0: i32, %arg1: i32) -> (i32, i32, i32) {
    %c0_i32 = arith.constant 0 : i32
    %c0_i32_0 = arith.constant 0 : i32
    %c0_i32_1 = arith.constant 0 : i32
    return %arg1, %c0_i32, %c0_i32_0 : i32, i32, i32
  }
  func.func @transform_8(%arg0: i32, %arg1: i32) -> (i32, i32, i32) {
    %c0_i32 = arith.constant 0 : i32
    %c0_i32_0 = arith.constant 0 : i32
    %c0_i32_1 = arith.constant 0 : i32
    return %arg1, %c0_i32, %c0_i32_0 : i32, i32, i32
  }
  func.func @transform_9(%arg0: i32, %arg1: i32) -> (i32, i32, i32, i32) {
    %c0_i32 = arith.constant 0 : i32
    %c0_i32_0 = arith.constant 0 : i32
    %c0_i32_1 = arith.constant 0 : i32
    %c0_i32_2 = arith.constant 0 : i32
    return %arg1, %c0_i32, %c0_i32_0, %c0_i32_1 : i32, i32, i32, i32
  }
  func.func @transform_10(%arg0: i32, %arg1: i32) -> (i32, i32, i32) {
    %c0_i32 = arith.constant 0 : i32
    %c0_i32_0 = arith.constant 0 : i32
    %c0_i32_1 = arith.constant 0 : i32
    return %arg1, %c0_i32, %c0_i32_0 : i32, i32, i32
  }
  func.func @transform_11(%arg0: i32, %arg1: i32) -> (i32, i32, i32) {
    %c0_i32 = arith.constant 0 : i32
    %c0_i32_0 = arith.constant 0 : i32
    %c0_i32_1 = arith.constant 0 : i32
    return %arg1, %c0_i32, %c0_i32_0 : i32, i32, i32
  }
  func.func @transform_12(%arg0: i32, %arg1: i32) -> (i32, i32, i32) {
    %c0_i32 = arith.constant 0 : i32
    %c0_i32_0 = arith.constant 0 : i32
    %c0_i32_1 = arith.constant 0 : i32
    return %arg1, %c0_i32, %c0_i32_0 : i32, i32, i32
  }
  func.func @transform_13(%arg0: i32, %arg1: i32) -> (i32, i32, i32) {
    %c0_i32 = arith.constant 0 : i32
    %c0_i32_0 = arith.constant 0 : i32
    %c0_i32_1 = arith.constant 0 : i32
    return %arg1, %c0_i32, %c0_i32_0 : i32, i32, i32
  }
  func.func @transform_14(%arg0: i32, %arg1: i32) -> (i32, i32, i32) {
    %c0_i32 = arith.constant 0 : i32
    %c0_i32_0 = arith.constant 0 : i32
    %c0_i32_1 = arith.constant 0 : i32
    return %arg1, %c0_i32, %c0_i32_0 : i32, i32, i32
  }
  func.func @transform_15(%arg0: i32, %arg1: i32) -> (i32, i32, i32) {
    %c0_i32 = arith.constant 0 : i32
    %c0_i32_0 = arith.constant 0 : i32
    %c0_i32_1 = arith.constant 0 : i32
    return %arg1, %c0_i32, %c0_i32_0 : i32, i32, i32
  }
  func.func @transform_16(%arg0: i32, %arg1: i32) -> (i32, i32, i32) {
    %c0_i32 = arith.constant 0 : i32
    %c0_i32_0 = arith.constant 0 : i32
    %c0_i32_1 = arith.constant 0 : i32
    return %arg1, %c0_i32, %c0_i32_0 : i32, i32, i32
  }
  func.func @transform_17(%arg0: i32, %arg1: i32) -> (i32, i32, i32) {
    %c0_i32 = arith.constant 0 : i32
    %c0_i32_0 = arith.constant 0 : i32
    %c0_i32_1 = arith.constant 0 : i32
    return %arg0, %c0_i32, %c0_i32_0 : i32, i32, i32
  }
}

</mosaic_0001>

<llo_original>
// kernel: tpu_custom_call.1
$region0: #{tpu_custom_call.1}
  #allocation0 [shape = 'u32[]', space=smem, size = 0x4, offset = 0x4, fixed_abs, tag = 'smem constant byte address 0x4 - core index']
  #allocation1 [shape = 'u32[144,128]{1,0:T(1,128)}', space=vmem, size = 0x12000, scoped, tag = 'internal scratch']
  #allocation2 [shape = 'f32[16,128]{1,0:T(8,128)}', space=vmem, size = 0x2000, scoped, tag = 'scratch operand']
  %s0 = inlined_call_operand.vmem [shape: f32[2,16,128], index: 0, kind: input, shape index: {}]
  %s1 = inlined_call_operand.vmem [shape: f32[2,1,128], index: 1, kind: input, shape index: {}]
  %s2 = inlined_call_operand.vmem [shape: f32[2,1,128], index: 2, kind: input, shape index: {}]
  %s3 = inlined_call_operand.vmem [shape: bf16[2,128,128], index: 3, kind: input, shape index: {}]
  %s4 = inlined_call_operand.vmem [shape: f32[2,128,1], index: 4, kind: input, shape index: {}]
  %s5 = inlined_call_operand.vmem [shape: bf16[2,128,128], index: 5, kind: input, shape index: {}]
  %s6 = inlined_call_operand.vmem [shape: f32[2,128,1], index: 6, kind: input, shape index: {}]
  %s7 = inlined_call_operand.vmem [shape: bf16[2,128,128], index: 7, kind: input, shape index: {}]
  %s8 = inlined_call_operand.vmem [shape: f32[2,128,1], index: 8, kind: input, shape index: {}]
  %s9 = inlined_call_operand.vmem [shape: bf16[2,4,8,128], index: 9, kind: input, shape index: {}]
  %s10 = inlined_call_operand.vmem [shape: f32[2,1,128], index: 10, kind: input, shape index: {}]
  %s11 = inlined_call_operand.vmem [shape: f32[2,1,128], index: 11, kind: input, shape index: {}]
  %s12 = inlined_call_operand.vmem [shape: f32[2,1,128], index: 12, kind: input, shape index: {}]
  %s13 = inlined_call_operand.vmem [shape: bf16[2,128,128], index: 13, kind: input, shape index: {}]
  %s14 = inlined_call_operand.vmem [shape: f32[2,1,128], index: 14, kind: input, shape index: {}]
  %s15 = inlined_call_operand.vmem [shape: bf16[2,128,128], index: 15, kind: input, shape index: {}]
  %s16 = inlined_call_operand.vmem [shape: f32[2,1,128], index: 16, kind: input, shape index: {}]
  %s17 = inlined_call_operand.hbm [shape: f32[2,16,128], index: 17, kind: output, shape index: {}]
  %s18 = sld [smem:[#allocation0]]
  $region109: #{tpu_custom_call.1} parent=0
    _
  %s20 = ssub.s32 1, %s18
  %s21 = scalar_select 0, %s20, %s18
  $region1: #{tpu_custom_call.1} parent=0
    #allocation3 [shape = 'u8[16384]{0}', space=vmem, size = 0x4000, scoped, tag = 'output window, operand 0']
    #allocation4 [shape = 's32[2]{0}', space=sflag, size = 0x8, scoped, tag = 'scoped memory for tpu_custom_call.1']
    %22 = vsyncpa [#allocation4], 0
    %s23 = scalar_lea.sflag [#allocation4], 1
    %24 = vsyncpa %s23, 0
    loop: start=0, step=1, limit=6
    $region2: #{tpu_custom_call.1} parent=1 // loop_pre_header
      _
    $region3: #{tpu_custom_call.1} parent=1 // loop_header
      %s26 = sphi 0, %s30
      %p27 = scmp.ge.s32.totalorder %s26, 6
      %s33 = sphi 0, %s45
      %s34 = sphi 0, %s41
      %s35 = sphi 0, %s33
      %s36 = sphi 0, %s34
      %s37 = sphi 0, %s35
      %s38 = sphi 0, %s36
      %s48 = sphi 0, %s50
      %s51 = sphi 0, %s48
      %s52 = sphi 0, %s51
      %s68 = sphi 0, %s52
      %s74 = sphi 0, %s76
      %s77 = sphi 0, %s74
      %s78 = sphi 0, %s77
      %s94 = sphi 0, %s78
      %s100 = sphi 0, %s102
      %s103 = sphi 0, %s100
      %s104 = sphi 0, %s103
      %s120 = sphi 0, %s104
      %s126 = sphi 0, %s128
      %s129 = sphi 0, %s126
      %s130 = sphi 0, %s129
      %s146 = sphi 0, %s130
      %s152 = sphi 0, %s154
      %s155 = sphi 0, %s152
      %s156 = sphi 0, %s155
      %s172 = sphi 0, %s156
      %s178 = sphi 0, %s180
      %s181 = sphi 0, %s178
      %s182 = sphi 0, %s181
      %s198 = sphi 0, %s182
      %s204 = sphi 0, %s206
      %s207 = sphi 0, %s204
      %s208 = sphi 0, %s207
      %s224 = sphi 0, %s208
      %s230 = sphi 0, %s232
      %s233 = sphi 0, %s230
      %s234 = sphi 0, %s233
      %s250 = sphi 0, %s234
      %s256 = sphi 0, %s258
      %s259 = sphi 0, %s256
      %s260 = sphi 0, %s259
      %s276 = sphi 0, %s260
      %s282 = sphi 0, %s284
      %s285 = sphi 0, %s282
      %s286 = sphi 0, %s285
      %s302 = sphi 0, %s286
      %s308 = sphi 0, %s310
      %s311 = sphi 0, %s308
      %s312 = sphi 0, %s311
      %s328 = sphi 0, %s312
      %s334 = sphi 0, %s336
      %s337 = sphi 0, %s334
      %s338 = sphi 0, %s337
      %s354 = sphi 0, %s338
      %s360 = sphi 0, %s362
      %s363 = sphi 0, %s360
      %s364 = sphi 0, %s363
      %s380 = sphi 0, %s364
      %s386 = sphi 0, %s388
      %s389 = sphi 0, %s386
      %s390 = sphi 0, %s389
      %s406 = sphi 0, %s390
      %s412 = sphi 0, %s414
      %s415 = sphi 0, %s412
      %s416 = sphi 0, %s415
      %s432 = sphi 0, %s416
      %s438 = sphi 0, %s440
      %s441 = sphi 0, %s438
      %s442 = sphi 0, %s441
      %s458 = sphi 0, %s442
      %s464 = sphi 0, %s466
      %s467 = sphi 0, %s464
      %s468 = sphi 0, %s467
      %s484 = sphi 0, %s468
      %s490 = sphi 0, %s492
      %s493 = sphi 0, %s490
      %s494 = sphi 0, %s493
      %s510 = sphi 0, %s494
    $region4: #{tpu_custom_call.1} parent=1 // loop_header_branch
      %29 = sbr.rel (%p27) target = $region8
    $region5: #{tpu_custom_call.1} parent=1 // loop_body
      %s31 = ssub.s32 %s26, 1
      %s32 = ssub.s32 %s26, 2
      %s39 = sadd.s32 1, %s34
      %p40 = scmp.ge.s32.totalorder %s39, 2
      %s41 = scalar_select %p40, 0, %s39
      %s42 = sadd.s32 1, %s33
      %s43 = scalar_select %p40, %s42, %s33
      %p44 = scmp.ge.s32.totalorder %s43, 2
      %s45 = scalar_select %p44, 0, %s43
      %s46 = ssub.s32 %s33, %s45
      %p47 = scmp.eq.s32.totalorder %s46, 0
      %s49 = sadd.s32 %s48, 1
      %s50 = scalar_select %p47, %s48, %s49
      %p53 = pneg %p47
      %p54 = scmp.eq.s32.totalorder %s26, 3
      %p55 = por %p53, %p54
      %p56 = scmp.ne.s32.totalorder %s48, %s51
      %p57 = scmp.eq.s32.totalorder %s26, 0
      %p58 = por %p56, %p57
      %p59 = scmp.ne.s32.totalorder %s48, %s51
      %p60 = scmp.eq.s32.totalorder %s31, 3
      %p61 = por %p59, %p60
      %p62 = scmp.ne.s32.totalorder %s51, %s52
      %p63 = scmp.eq.s32.totalorder %s31, 0
      %p64 = por %p62, %p63
      %p65 = scmp.ne.s32.totalorder %s51, %s52
      %p66 = scmp.eq.s32.totalorder %s32, 3
      %p67 = por %p65, %p66
      %p69 = scmp.ne.s32.totalorder %s52, %s68
      %p70 = scmp.eq.s32.totalorder %s32, 0
      %p71 = por %p69, %p70
      %s72 = ssub.s32 %s34, %s41
      %p73 = scmp.eq.s32.totalorder %s72, 0
      %s75 = sadd.s32 %s74, 1
      %s76 = scalar_select %p73, %s74, %s75
      %p79 = pneg %p73
      %p80 = scmp.eq.s32.totalorder %s26, 3
      %p81 = por %p79, %p80
      %p82 = scmp.ne.s32.totalorder %s74, %s77
      %p83 = scmp.eq.s32.totalorder %s26, 0
      %p84 = por %p82, %p83
      %p85 = scmp.ne.s32.totalorder %s74, %s77
      %p86 = scmp.eq.s32.totalorder %s31, 3
      %p87 = por %p85, %p86
      %p88 = scmp.ne.s32.totalorder %s77, %s78
      %p89 = scmp.eq.s32.totalorder %s31, 0
      %p90 = por %p88, %p89
      %p91 = scmp.ne.s32.totalorder %s77, %s78
      %p92 = scmp.eq.s32.totalorder %s32, 3
      %p93 = por %p91, %p92
      %p95 = scmp.ne.s32.totalorder %s78, %s94
      %p96 = scmp.eq.s32.totalorder %s32, 0
      %p97 = por %p95, %p96
      %s98 = ssub.s32 %s34, %s41
      %p99 = scmp.eq.s32.totalorder %s98, 0
      %s101 = sadd.s32 %s100, 1
      %s102 = scalar_select %p99, %s100, %s101
      %p105 = pneg %p99
      %p106 = scmp.eq.s32.totalorder %s26, 3
      %p107 = por %p105, %p106
      %p108 = scmp.ne.s32.totalorder %s100, %s103
      %p109 = scmp.eq.s32.totalorder %s26, 0
      %p110 = por %p108, %p109
      %p111 = scmp.ne.s32.totalorder %s100, %s103
      %p112 = scmp.eq.s32.totalorder %s31, 3
      %p113 = por %p111, %p112
      %p114 = scmp.ne.s32.totalorder %s103, %s104
      %p115 = scmp.eq.s32.totalorder %s31, 0
      %p116 = por %p114, %p115
      %p117 = scmp.ne.s32.totalorder %s103, %s104
      %p118 = scmp.eq.s32.totalorder %s32, 3
      %p119 = por %p117, %p118
      %p121 = scmp.ne.s32.totalorder %s104, %s120
      %p122 = scmp.eq.s32.totalorder %s32, 0
      %p123 = por %p121, %p122
      %s124 = ssub.s32 %s34, %s41
      %p125 = scmp.eq.s32.totalorder %s124, 0
      %s127 = sadd.s32 %s126, 1
      %s128 = scalar_select %p125, %s126, %s127
      %p131 = pneg %p125
      %p132 = scmp.eq.s32.totalorder %s26, 3
      %p133 = por %p131, %p132
      %p134 = scmp.ne.s32.totalorder %s126, %s129
      %p135 = scmp.eq.s32.totalorder %s26, 0
      %p136 = por %p134, %p135
      %p137 = scmp.ne.s32.totalorder %s126, %s129
      %p138 = scmp.eq.s32.totalorder %s31, 3
      %p139 = por %p137, %p138
      %p140 = scmp.ne.s32.totalorder %s129, %s130
      %p141 = scmp.eq.s32.totalorder %s31, 0
      %p142 = por %p140, %p141
      %p143 = scmp.ne.s32.totalorder %s129, %s130
      %p144 = scmp.eq.s32.totalorder %s32, 3
      %p145 = por %p143, %p144
      %p147 = scmp.ne.s32.totalorder %s130, %s146
      %p148 = scmp.eq.s32.totalorder %s32, 0
      %p149 = por %p147, %p148
      %s150 = ssub.s32 %s34, %s41
      %p151 = scmp.eq.s32.totalorder %s150, 0
      %s153 = sadd.s32 %s152, 1
      %s154 = scalar_select %p151, %s152, %s153
      %p157 = pneg %p151
      %p158 = scmp.eq.s32.totalorder %s26, 3
      %p159 = por %p157, %p158
      %p160 = scmp.ne.s32.totalorder %s152, %s155
      %p161 = scmp.eq.s32.totalorder %s26, 0
      %p162 = por %p160, %p161
      %p163 = scmp.ne.s32.totalorder %s152, %s155
      %p164 = scmp.eq.s32.totalorder %s31, 3
      %p165 = por %p163, %p164
      %p166 = scmp.ne.s32.totalorder %s155, %s156
      %p167 = scmp.eq.s32.totalorder %s31, 0
      %p168 = por %p166, %p167
      %p169 = scmp.ne.s32.totalorder %s155, %s156
      %p170 = scmp.eq.s32.totalorder %s32, 3
      %p171 = por %p169, %p170
      %p173 = scmp.ne.s32.totalorder %s156, %s172
      %p174 = scmp.eq.s32.totalorder %s32, 0
      %p175 = por %p173, %p174
      %s176 = ssub.s32 %s34, %s41
      %p177 = scmp.eq.s32.totalorder %s176, 0
      %s179 = sadd.s32 %s178, 1
      %s180 = scalar_select %p177, %s178, %s179
      %p183 = pneg %p177
      %p184 = scmp.eq.s32.totalorder %s26, 3
      %p185 = por %p183, %p184
      %p186 = scmp.ne.s32.totalorder %s178, %s181
      %p187 = scmp.eq.s32.totalorder %s26, 0
      %p188 = por %p186, %p187
      %p189 = scmp.ne.s32.totalorder %s178, %s181
      %p190 = scmp.eq.s32.totalorder %s31, 3
      %p191 = por %p189, %p190
      %p192 = scmp.ne.s32.totalorder %s181, %s182
      %p193 = scmp.eq.s32.totalorder %s31, 0
      %p194 = por %p192, %p193
      %p195 = scmp.ne.s32.totalorder %s181, %s182
      %p196 = scmp.eq.s32.totalorder %s32, 3
      %p197 = por %p195, %p196
      %p199 = scmp.ne.s32.totalorder %s182, %s198
      %p200 = scmp.eq.s32.totalorder %s32, 0
      %p201 = por %p199, %p200
      %s202 = ssub.s32 %s34, %s41
      %p203 = scmp.eq.s32.totalorder %s202, 0
      %s205 = sadd.s32 %s204, 1
      %s206 = scalar_select %p203, %s204, %s205
      %p209 = pneg %p203
      %p210 = scmp.eq.s32.totalorder %s26, 3
      %p211 = por %p209, %p210
      %p212 = scmp.ne.s32.totalorder %s204, %s207
      %p213 = scmp.eq.s32.totalorder %s26, 0
      %p214 = por %p212, %p213
      %p215 = scmp.ne.s32.totalorder %s204, %s207
      %p216 = scmp.eq.s32.totalorder %s31, 3
      %p217 = por %p215, %p216
      %p218 = scmp.ne.s32.totalorder %s207, %s208
      %p219 = scmp.eq.s32.totalorder %s31, 0
      %p220 = por %p218, %p219
      %p221 = scmp.ne.s32.totalorder %s207, %s208
      %p222 = scmp.eq.s32.totalorder %s32, 3
      %p223 = por %p221, %p222
      %p225 = scmp.ne.s32.totalorder %s208, %s224
      %p226 = scmp.eq.s32.totalorder %s32, 0
      %p227 = por %p225, %p226
      %s228 = ssub.s32 %s34, %s41
      %p229 = scmp.eq.s32.totalorder %s228, 0
      %s231 = sadd.s32 %s230, 1
      %s232 = scalar_select %p229, %s230, %s231
      %p235 = pneg %p229
      %p236 = scmp.eq.s32.totalorder %s26, 3
      %p237 = por %p235, %p236
      %p238 = scmp.ne.s32.totalorder %s230, %s233
      %p239 = scmp.eq.s32.totalorder %s26, 0
      %p240 = por %p238, %p239
      %p241 = scmp.ne.s32.totalorder %s230, %s233
      %p242 = scmp.eq.s32.totalorder %s31, 3
      %p243 = por %p241, %p242
      %p244 = scmp.ne.s32.totalorder %s233, %s234
      %p245 = scmp.eq.s32.totalorder %s31, 0
      %p246 = por %p244, %p245
      %p247 = scmp.ne.s32.totalorder %s233, %s234
      %p248 = scmp.eq.s32.totalorder %s32, 3
      %p249 = por %p247, %p248
      %p251 = scmp.ne.s32.totalorder %s234, %s250
      %p252 = scmp.eq.s32.totalorder %s32, 0
      %p253 = por %p251, %p252
      %s254 = ssub.s32 %s34, %s41
      %p255 = scmp.eq.s32.totalorder %s254, 0
      %s257 = sadd.s32 %s256, 1
      %s258 = scalar_select %p255, %s256, %s257
      %p261 = pneg %p255
      %p262 = scmp.eq.s32.totalorder %s26, 3
      %p263 = por %p261, %p262
      %p264 = scmp.ne.s32.totalorder %s256, %s259
      %p265 = scmp.eq.s32.totalorder %s26, 0
      %p266 = por %p264, %p265
      %p267 = scmp.ne.s32.totalorder %s256, %s259
      %p268 = scmp.eq.s32.totalorder %s31, 3
      %p269 = por %p267, %p268
      %p270 = scmp.ne.s32.totalorder %s259, %s260
      %p271 = scmp.eq.s32.totalorder %s31, 0
      %p272 = por %p270, %p271
      %p273 = scmp.ne.s32.totalorder %s259, %s260
      %p274 = scmp.eq.s32.totalorder %s32, 3
      %p275 = por %p273, %p274
      %p277 = scmp.ne.s32.totalorder %s260, %s276
      %p278 = scmp.eq.s32.totalorder %s32, 0
      %p279 = por %p277, %p278
      %s280 = ssub.s32 %s34, %s41
      %p281 = scmp.eq.s32.totalorder %s280, 0
      %s283 = sadd.s32 %s282, 1
      %s284 = scalar_select %p281, %s282, %s283
      %p287 = pneg %p281
      %p288 = scmp.eq.s32.totalorder %s26, 3
      %p289 = por %p287, %p288
      %p290 = scmp.ne.s32.totalorder %s282, %s285
      %p291 = scmp.eq.s32.totalorder %s26, 0
      %p292 = por %p290, %p291
      %p293 = scmp.ne.s32.totalorder %s282, %s285
      %p294 = scmp.eq.s32.totalorder %s31, 3
      %p295 = por %p293, %p294
      %p296 = scmp.ne.s32.totalorder %s285, %s286
      %p297 = scmp.eq.s32.totalorder %s31, 0
      %p298 = por %p296, %p297
      %p299 = scmp.ne.s32.totalorder %s285, %s286
      %p300 = scmp.eq.s32.totalorder %s32, 3
      %p301 = por %p299, %p300
      %p303 = scmp.ne.s32.totalorder %s286, %s302
      %p304 = scmp.eq.s32.totalorder %s32, 0
      %p305 = por %p303, %p304
      %s306 = ssub.s32 %s34, %s41
      %p307 = scmp.eq.s32.totalorder %s306, 0
      %s309 = sadd.s32 %s308, 1
      %s310 = scalar_select %p307, %s308, %s309
      %p313 = pneg %p307
      %p314 = scmp.eq.s32.totalorder %s26, 3
      %p315 = por %p313, %p314
      %p316 = scmp.ne.s32.totalorder %s308, %s311
      %p317 = scmp.eq.s32.totalorder %s26, 0
      %p318 = por %p316, %p317
      %p319 = scmp.ne.s32.totalorder %s308, %s311
      %p320 = scmp.eq.s32.totalorder %s31, 3
      %p321 = por %p319, %p320
      %p322 = scmp.ne.s32.totalorder %s311, %s312
      %p323 = scmp.eq.s32.totalorder %s31, 0
      %p324 = por %p322, %p323
      %p325 = scmp.ne.s32.totalorder %s311, %s312
      %p326 = scmp.eq.s32.totalorder %s32, 3
      %p327 = por %p325, %p326
      %p329 = scmp.ne.s32.totalorder %s312, %s328
      %p330 = scmp.eq.s32.totalorder %s32, 0
      %p331 = por %p329, %p330
      %s332 = ssub.s32 %s34, %s41
      %p333 = scmp.eq.s32.totalorder %s332, 0
      %s335 = sadd.s32 %s334, 1
      %s336 = scalar_select %p333, %s334, %s335
      %p339 = pneg %p333
      %p340 = scmp.eq.s32.totalorder %s26, 3
      %p341 = por %p339, %p340
      %p342 = scmp.ne.s32.totalorder %s334, %s337
      %p343 = scmp.eq.s32.totalorder %s26, 0
      %p344 = por %p342, %p343
      %p345 = scmp.ne.s32.totalorder %s334, %s337
      %p346 = scmp.eq.s32.totalorder %s31, 3
      %p347 = por %p345, %p346
      %p348 = scmp.ne.s32.totalorder %s337, %s338
      %p349 = scmp.eq.s32.totalorder %s31, 0
      %p350 = por %p348, %p349
      %p351 = scmp.ne.s32.totalorder %s337, %s338
      %p352 = scmp.eq.s32.totalorder %s32, 3
      %p353 = por %p351, %p352
      %p355 = scmp.ne.s32.totalorder %s338, %s354
      %p356 = scmp.eq.s32.totalorder %s32, 0
      %p357 = por %p355, %p356
      %s358 = ssub.s32 %s34, %s41
      %p359 = scmp.eq.s32.totalorder %s358, 0
      %s361 = sadd.s32 %s360, 1
      %s362 = scalar_select %p359, %s360, %s361
      %p365 = pneg %p359
      %p366 = scmp.eq.s32.totalorder %s26, 3
      %p367 = por %p365, %p366
      %p368 = scmp.ne.s32.totalorder %s360, %s363
      %p369 = scmp.eq.s32.totalorder %s26, 0
      %p370 = por %p368, %p369
      %p371 = scmp.ne.s32.totalorder %s360, %s363
      %p372 = scmp.eq.s32.totalorder %s31, 3
      %p373 = por %p371, %p372
      %p374 = scmp.ne.s32.totalorder %s363, %s364
      %p375 = scmp.eq.s32.totalorder %s31, 0
      %p376 = por %p374, %p375
      %p377 = scmp.ne.s32.totalorder %s363, %s364
      %p378 = scmp.eq.s32.totalorder %s32, 3
      %p379 = por %p377, %p378
      %p381 = scmp.ne.s32.totalorder %s364, %s380
      %p382 = scmp.eq.s32.totalorder %s32, 0
      %p383 = por %p381, %p382
      %s384 = ssub.s32 %s34, %s41
      %p385 = scmp.eq.s32.totalorder %s384, 0
      %s387 = sadd.s32 %s386, 1
      %s388 = scalar_select %p385, %s386, %s387
      %p391 = pneg %p385
      %p392 = scmp.eq.s32.totalorder %s26, 3
      %p393 = por %p391, %p392
      %p394 = scmp.ne.s32.totalorder %s386, %s389
      %p395 = scmp.eq.s32.totalorder %s26, 0
      %p396 = por %p394, %p395
      %p397 = scmp.ne.s32.totalorder %s386, %s389
      %p398 = scmp.eq.s32.totalorder %s31, 3
      %p399 = por %p397, %p398
      %p400 = scmp.ne.s32.totalorder %s389, %s390
      %p401 = scmp.eq.s32.totalorder %s31, 0
      %p402 = por %p400, %p401
      %p403 = scmp.ne.s32.totalorder %s389, %s390
      %p404 = scmp.eq.s32.totalorder %s32, 3
      %p405 = por %p403, %p404
      %p407 = scmp.ne.s32.totalorder %s390, %s406
      %p408 = scmp.eq.s32.totalorder %s32, 0
      %p409 = por %p407, %p408
      %s410 = ssub.s32 %s34, %s41
      %p411 = scmp.eq.s32.totalorder %s410, 0
      %s413 = sadd.s32 %s412, 1
      %s414 = scalar_select %p411, %s412, %s413
      %p417 = pneg %p411
      %p418 = scmp.eq.s32.totalorder %s26, 3
      %p419 = por %p417, %p418
      %p420 = scmp.ne.s32.totalorder %s412, %s415
      %p421 = scmp.eq.s32.totalorder %s26, 0
      %p422 = por %p420, %p421
      %p423 = scmp.ne.s32.totalorder %s412, %s415
      %p424 = scmp.eq.s32.totalorder %s31, 3
      %p425 = por %p423, %p424
      %p426 = scmp.ne.s32.totalorder %s415, %s416
      %p427 = scmp.eq.s32.totalorder %s31, 0
      %p428 = por %p426, %p427
      %p429 = scmp.ne.s32.totalorder %s415, %s416
      %p430 = scmp.eq.s32.totalorder %s32, 3
      %p431 = por %p429, %p430
      %p433 = scmp.ne.s32.totalorder %s416, %s432
      %p434 = scmp.eq.s32.totalorder %s32, 0
      %p435 = por %p433, %p434
      %s436 = ssub.s32 %s34, %s41
      %p437 = scmp.eq.s32.totalorder %s436, 0
      %s439 = sadd.s32 %s438, 1
      %s440 = scalar_select %p437, %s438, %s439
      %p443 = pneg %p437
      %p444 = scmp.eq.s32.totalorder %s26, 3
      %p445 = por %p443, %p444
      %p446 = scmp.ne.s32.totalorder %s438, %s441
      %p447 = scmp.eq.s32.totalorder %s26, 0
      %p448 = por %p446, %p447
      %p449 = scmp.ne.s32.totalorder %s438, %s441
      %p450 = scmp.eq.s32.totalorder %s31, 3
      %p451 = por %p449, %p450
      %p452 = scmp.ne.s32.totalorder %s441, %s442
      %p453 = scmp.eq.s32.totalorder %s31, 0
      %p454 = por %p452, %p453
      %p455 = scmp.ne.s32.totalorder %s441, %s442
      %p456 = scmp.eq.s32.totalorder %s32, 3
      %p457 = por %p455, %p456
      %p459 = scmp.ne.s32.totalorder %s442, %s458
      %p460 = scmp.eq.s32.totalorder %s32, 0
      %p461 = por %p459, %p460
      %s462 = ssub.s32 %s34, %s41
      %p463 = scmp.eq.s32.totalorder %s462, 0
      %s465 = sadd.s32 %s464, 1
      %s466 = scalar_select %p463, %s464, %s465
      %p469 = pneg %p463
      %p470 = scmp.eq.s32.totalorder %s26, 3
      %p471 = por %p469, %p470
      %p472 = scmp.ne.s32.totalorder %s464, %s467
      %p473 = scmp.eq.s32.totalorder %s26, 0
      %p474 = por %p472, %p473
      %p475 = scmp.ne.s32.totalorder %s464, %s467
      %p476 = scmp.eq.s32.totalorder %s31, 3
      %p477 = por %p475, %p476
      %p478 = scmp.ne.s32.totalorder %s467, %s468
      %p479 = scmp.eq.s32.totalorder %s31, 0
      %p480 = por %p478, %p479
      %p481 = scmp.ne.s32.totalorder %s467, %s468
      %p482 = scmp.eq.s32.totalorder %s32, 3
      %p483 = por %p481, %p482
      %p485 = scmp.ne.s32.totalorder %s468, %s484
      %p486 = scmp.eq.s32.totalorder %s32, 0
      %p487 = por %p485, %p486
      %s488 = ssub.s32 %s33, %s45
      %p489 = scmp.eq.s32.totalorder %s488, 0
      %s491 = sadd.s32 %s490, 1
      %s492 = scalar_select %p489, %s490, %s491
      %p495 = pneg %p489
      %p496 = scmp.eq.s32.totalorder %s26, 3
      %p497 = por %p495, %p496
      %p498 = scmp.ne.s32.totalorder %s490, %s493
      %p499 = scmp.eq.s32.totalorder %s26, 0
      %p500 = por %p498, %p499
      %p501 = scmp.ne.s32.totalorder %s490, %s493
      %p502 = scmp.eq.s32.totalorder %s31, 3
      %p503 = por %p501, %p502
      %p504 = scmp.ne.s32.totalorder %s493, %s494
      %p505 = scmp.eq.s32.totalorder %s31, 0
      %p506 = por %p504, %p505
      %p507 = scmp.ne.s32.totalorder %s493, %s494
      %p508 = scmp.eq.s32.totalorder %s32, 3
      %p509 = por %p507, %p508
      %p511 = scmp.ne.s32.totalorder %s494, %s510
      %p512 = scmp.eq.s32.totalorder %s32, 0
      %p513 = por %p511, %p512
      %p514 = scmp.le.s32.totalorder 1, %s26
      %p515 = scmp.lt.s32.totalorder %s26, 5
      %p516 = pnand %p514, %p515
      %p517 = pneg %p516
      // Predicated region
      $region9: #{tpu_custom_call.1} parent=5 // pred_check
        _
      $region10: #{tpu_custom_call.1} parent=5 // pred_check_branch
        %519 = sbr.rel (%p516) target = $region12
      $region11: #{tpu_custom_call.1} parent=5 // pred_region
        %s520 = ssub.s32 %s26, 1
      $region12: #{tpu_custom_call.1} parent=5 // pred_fallthru
        _
      %p521 = scmp.lt.s32.totalorder %s26, 4
      // Predicated region
      $region13: #{tpu_custom_call.1} parent=5 // pred_check
        %p522 = pneg %p521
      $region14: #{tpu_custom_call.1} parent=5 // pred_check_branch
        %524 = sbr.rel (%p522) target = $region16
      $region15: #{tpu_custom_call.1} parent=5 // pred_region
        // Predicated region
        $region17: #{tpu_custom_call.1} parent=15 // pred_check
          %p525 = pneg %p58
        $region18: #{tpu_custom_call.1} parent=15 // pred_check_branch
          %527 = sbr.rel (%p525) target = $region20
        $region19: #{tpu_custom_call.1} parent=15 // pred_region
          %p528 = scmp.lt.s32.totalorder %s33, 1
          %s529 = scalar_select %p528, %s33, 1
          %s530 = smul.addr %s529, 2
          %s531 = smul.addr %s530, 8
          %s532 = scalar_lea.vmem %s0, %s531
        $region20: #{tpu_custom_call.1} parent=15 // pred_fallthru
          _
        // Predicated region
        $region21: #{tpu_custom_call.1} parent=15 // pred_check
          %p533 = pneg %p84
        $region22: #{tpu_custom_call.1} parent=15 // pred_check_branch
          %535 = sbr.rel (%p533) target = $region24
        $region23: #{tpu_custom_call.1} parent=15 // pred_region
          %p536 = scmp.lt.s32.totalorder %s34, 1
          %s537 = scalar_select %p536, %s34, 1
          %s538 = scalar_lea.vmem %s1, %s537
        $region24: #{tpu_custom_call.1} parent=15 // pred_fallthru
          _
        // Predicated region
        $region25: #{tpu_custom_call.1} parent=15 // pred_check
          %p539 = pneg %p110
        $region26: #{tpu_custom_call.1} parent=15 // pred_check_branch
          %541 = sbr.rel (%p539) target = $region28
        $region27: #{tpu_custom_call.1} parent=15 // pred_region
          %p542 = scmp.lt.s32.totalorder %s34, 1
          %s543 = scalar_select %p542, %s34, 1
          %s544 = scalar_lea.vmem %s2, %s543
        $region28: #{tpu_custom_call.1} parent=15 // pred_fallthru
          _
        // Predicated region
        $region29: #{tpu_custom_call.1} parent=15 // pred_check
          %p545 = pneg %p136
        $region30: #{tpu_custom_call.1} parent=15 // pred_check_branch
          %547 = sbr.rel (%p545) target = $region32
        $region31: #{tpu_custom_call.1} parent=15 // pred_region
          %p548 = scmp.lt.s32.totalorder %s34, 1
          %s549 = scalar_select %p548, %s34, 1
          %s550 = smul.addr %s549, 16
          %s551 = smul.addr %s550, 4
          %s552 = scalar_lea.vmem %s3, %s551
        $region32: #{tpu_custom_call.1} parent=15 // pred_fallthru
          _
        // Predicated region
        $region33: #{tpu_custom_call.1} parent=15 // pred_check
          %p553 = pneg %p162
        $region34: #{tpu_custom_call.1} parent=15 // pred_check_branch
          %555 = sbr.rel (%p553) target = $region36
        $region35: #{tpu_custom_call.1} parent=15 // pred_region
          %p556 = scmp.lt.s32.totalorder %s34, 1
          %s557 = scalar_select %p556, %s34, 1
          %s558 = smul.addr %s557, 16
          %s559 = smul.addr %s558, 8
          %s560 = scalar_lea.vmem %s4, %s559
        $region36: #{tpu_custom_call.1} parent=15 // pred_fallthru
          _
        // Predicated region
        $region37: #{tpu_custom_call.1} parent=15 // pred_check
          %p561 = pneg %p188
        $region38: #{tpu_custom_call.1} parent=15 // pred_check_branch
          %563 = sbr.rel (%p561) target = $region40
        $region39: #{tpu_custom_call.1} parent=15 // pred_region
          %p564 = scmp.lt.s32.totalorder %s34, 1
          %s565 = scalar_select %p564, %s34, 1
          %s566 = smul.addr %s565, 16
          %s567 = smul.addr %s566, 4
          %s568 = scalar_lea.vmem %s5, %s567
        $region40: #{tpu_custom_call.1} parent=15 // pred_fallthru
          _
        // Predicated region
        $region41: #{tpu_custom_call.1} parent=15 // pred_check
          %p569 = pneg %p214
        $region42: #{tpu_custom_call.1} parent=15 // pred_check_branch
          %571 = sbr.rel (%p569) target = $region44
        $region43: #{tpu_custom_call.1} parent=15 // pred_region
          %p572 = scmp.lt.s32.totalorder %s34, 1
          %s573 = scalar_select %p572, %s34, 1
          %s574 = smul.addr %s573, 16
          %s575 = smul.addr %s574, 8
          %s576 = scalar_lea.vmem %s6, %s575
        $region44: #{tpu_custom_call.1} parent=15 // pred_fallthru
          _
        // Predicated region
        $region45: #{tpu_custom_call.1} parent=15 // pred_check
          %p577 = pneg %p240
        $region46: #{tpu_custom_call.1} parent=15 // pred_check_branch
          %579 = sbr.rel (%p577) target = $region48
        $region47: #{tpu_custom_call.1} parent=15 // pred_region
          %p580 = scmp.lt.s32.totalorder %s34, 1
          %s581 = scalar_select %p580, %s34, 1
          %s582 = smul.addr %s581, 16
          %s583 = smul.addr %s582, 4
          %s584 = scalar_lea.vmem %s7, %s583
        $region48: #{tpu_custom_call.1} parent=15 // pred_fallthru
          _
        // Predicated region
        $region49: #{tpu_custom_call.1} parent=15 // pred_check
          %p585 = pneg %p266
        $region50: #{tpu_custom_call.1} parent=15 // pred_check_branch
          %587 = sbr.rel (%p585) target = $region52
        $region51: #{tpu_custom_call.1} parent=15 // pred_region
          %p588 = scmp.lt.s32.totalorder %s34, 1
          %s589 = scalar_select %p588, %s34, 1
          %s590 = smul.addr %s589, 16
          %s591 = smul.addr %s590, 8
          %s592 = scalar_lea.vmem %s8, %s591
        $region52: #{tpu_custom_call.1} parent=15 // pred_fallthru
          _
        // Predicated region
        $region53: #{tpu_custom_call.1} parent=15 // pred_check
          %p593 = pneg %p292
        $region54: #{tpu_custom_call.1} parent=15 // pred_check_branch
          %595 = sbr.rel (%p593) target = $region56
        $region55: #{tpu_custom_call.1} parent=15 // pred_region
          %p596 = scmp.lt.s32.totalorder %s34, 1
          %s597 = scalar_select %p596, %s34, 1
          %s598 = smul.addr %s597, 4
          %s599 = smul.addr %s598, 4
          %s600 = scalar_lea.vmem %s9, %s599
        $region56: #{tpu_custom_call.1} parent=15 // pred_fallthru
          _
        // Predicated region
        $region57: #{tpu_custom_call.1} parent=15 // pred_check
          %p601 = pneg %p318
        $region58: #{tpu_custom_call.1} parent=15 // pred_check_branch
          %603 = sbr.rel (%p601) target = $region60
        $region59: #{tpu_custom_call.1} parent=15 // pred_region
          %p604 = scmp.lt.s32.totalorder %s34, 1
          %s605 = scalar_select %p604, %s34, 1
          %s606 = scalar_lea.vmem %s10, %s605
        $region60: #{tpu_custom_call.1} parent=15 // pred_fallthru
          _
        // Predicated region
        $region61: #{tpu_custom_call.1} parent=15 // pred_check
          %p607 = pneg %p344
        $region62: #{tpu_custom_call.1} parent=15 // pred_check_branch
          %609 = sbr.rel (%p607) target = $region64
        $region63: #{tpu_custom_call.1} parent=15 // pred_region
          %p610 = scmp.lt.s32.totalorder %s34, 1
          %s611 = scalar_select %p610, %s34, 1
          %s612 = scalar_lea.vmem %s11, %s611
        $region64: #{tpu_custom_call.1} parent=15 // pred_fallthru
          _
        // Predicated region
        $region65: #{tpu_custom_call.1} parent=15 // pred_check
          %p613 = pneg %p370
        $region66: #{tpu_custom_call.1} parent=15 // pred_check_branch
          %615 = sbr.rel (%p613) target = $region68
        $region67: #{tpu_custom_call.1} parent=15 // pred_region
          %p616 = scmp.lt.s32.totalorder %s34, 1
          %s617 = scalar_select %p616, %s34, 1
          %s618 = scalar_lea.vmem %s12, %s617
        $region68: #{tpu_custom_call.1} parent=15 // pred_fallthru
          _
        // Predicated region
        $region69: #{tpu_custom_call.1} parent=15 // pred_check
          %p619 = pneg %p396
        $region70: #{tpu_custom_call.1} parent=15 // pred_check_branch
          %621 = sbr.rel (%p619) target = $region72
        $region71: #{tpu_custom_call.1} parent=15 // pred_region
          %p622 = scmp.lt.s32.totalorder %s34, 1
          %s623 = scalar_select %p622, %s34, 1
          %s624 = smul.addr %s623, 16
          %s625 = smul.addr %s624, 4
          %s626 = scalar_lea.vmem %s13, %s625
        $region72: #{tpu_custom_call.1} parent=15 // pred_fallthru
          _
        // Predicated region
        $region73: #{tpu_custom_call.1} parent=15 // pred_check
          %p627 = pneg %p422
        $region74: #{tpu_custom_call.1} parent=15 // pred_check_branch
          %629 = sbr.rel (%p627) target = $region76
        $region75: #{tpu_custom_call.1} parent=15 // pred_region
          %p630 = scmp.lt.s32.totalorder %s34, 1
          %s631 = scalar_select %p630, %s34, 1
          %s632 = scalar_lea.vmem %s14, %s631
        $region76: #{tpu_custom_call.1} parent=15 // pred_fallthru
          _
        // Predicated region
        $region77: #{tpu_custom_call.1} parent=15 // pred_check
          %p633 = pneg %p448
        $region78: #{tpu_custom_call.1} parent=15 // pred_check_branch
          %635 = sbr.rel (%p633) target = $region80
        $region79: #{tpu_custom_call.1} parent=15 // pred_region
          %p636 = scmp.lt.s32.totalorder %s34, 1
          %s637 = scalar_select %p636, %s34, 1
          %s638 = smul.addr %s637, 16
          %s639 = smul.addr %s638, 4
          %s640 = scalar_lea.vmem %s15, %s639
        $region80: #{tpu_custom_call.1} parent=15 // pred_fallthru
          _
        // Predicated region
        $region81: #{tpu_custom_call.1} parent=15 // pred_check
          %p641 = pneg %p474
        $region82: #{tpu_custom_call.1} parent=15 // pred_check_branch
          %643 = sbr.rel (%p641) target = $region84
        $region83: #{tpu_custom_call.1} parent=15 // pred_region
          %p644 = scmp.lt.s32.totalorder %s34, 1
          %s645 = scalar_select %p644, %s34, 1
          %s646 = scalar_lea.vmem %s16, %s645
        $region84: #{tpu_custom_call.1} parent=15 // pred_fallthru
          _
      $region16: #{tpu_custom_call.1} parent=5 // pred_fallthru
        _
      %p647 = scmp.le.s32.totalorder 1, %s26
      %p648 = scmp.lt.s32.totalorder %s26, 5
      %p649 = pnand %p647, %p648
      %p650 = pneg %p649
      // Predicated region
      $region85: #{tpu_custom_call.1} parent=5 // pred_check
        _
      $region86: #{tpu_custom_call.1} parent=5 // pred_check_branch
        %652 = sbr.rel (%p649) target = $region88
      $region87: #{tpu_custom_call.1} parent=5 // pred_region
        %s653 = ssub.s32 %s26, 1
        %p654 = scmp.lt.s32.totalorder %s35, 1
        %s655 = scalar_select %p654, %s35, 1
        %s656 = smul.addr %s655, 2
        %s657 = smul.addr %s656, 8
        %s658 = scalar_lea.vmem %s0, %s657
        %p659 = pneg %p64
        %p660 = pneg %p61
        %p661 = scmp.lt.s32.totalorder %s36, 1
        %s662 = scalar_select %p661, %s36, 1
        %s663 = scalar_lea.vmem %s1, %s662
        %p664 = pneg %p90
        %p665 = pneg %p87
        %p666 = scmp.lt.s32.totalorder %s36, 1
        %s667 = scalar_select %p666, %s36, 1
        %s668 = scalar_lea.vmem %s2, %s667
        %p669 = pneg %p116
        %p670 = pneg %p113
        %p671 = scmp.lt.s32.totalorder %s36, 1
        %s672 = scalar_select %p671, %s36, 1
        %s673 = smul.addr %s672, 16
        %s674 = smul.addr %s673, 4
        %s675 = scalar_lea.vmem %s3, %s674
        %p676 = pneg %p142
        %p677 = pneg %p139
        %p678 = scmp.lt.s32.totalorder %s36, 1
        %s679 = scalar_select %p678, %s36, 1
        %s680 = smul.addr %s679, 16
        %s681 = smul.addr %s680, 8
        %s682 = scalar_lea.vmem %s4, %s681
        %p683 = pneg %p168
        %p684 = pneg %p165
        %p685 = scmp.lt.s32.totalorder %s36, 1
        %s686 = scalar_select %p685, %s36, 1
        %s687 = smul.addr %s686, 16
        %s688 = smul.addr %s687, 4
        %s689 = scalar_lea.vmem %s5, %s688
        %p690 = pneg %p194
        %p691 = pneg %p191
        %p692 = scmp.lt.s32.totalorder %s36, 1
        %s693 = scalar_select %p692, %s36, 1
        %s694 = smul.addr %s693, 16
        %s695 = smul.addr %s694, 8
        %s696 = scalar_lea.vmem %s6, %s695
        %p697 = pneg %p220
        %p698 = pneg %p217
        %p699 = scmp.lt.s32.totalorder %s36, 1
        %s700 = scalar_select %p699, %s36, 1
        %s701 = smul.addr %s700, 16
        %s702 = smul.addr %s701, 4
        %s703 = scalar_lea.vmem %s7, %s702
        %p704 = pneg %p246
        %p705 = pneg %p243
        %p706 = scmp.lt.s32.totalorder %s36, 1
        %s707 = scalar_select %p706, %s36, 1
        %s708 = smul.addr %s707, 16
        %s709 = smul.addr %s708, 8
        %s710 = scalar_lea.vmem %s8, %s709
        %p711 = pneg %p272
        %p712 = pneg %p269
        %p713 = scmp.lt.s32.totalorder %s36, 1
        %s714 = scalar_select %p713, %s36, 1
        %s715 = smul.addr %s714, 4
        %s716 = smul.addr %s715, 4
        %s717 = scalar_lea.vmem %s9, %s716
        %p718 = pneg %p298
        %p719 = pneg %p295
        %p720 = scmp.lt.s32.totalorder %s36, 1
        %s721 = scalar_select %p720, %s36, 1
        %s722 = scalar_lea.vmem %s10, %s721
        %p723 = pneg %p324
        %p724 = pneg %p321
        %p725 = scmp.lt.s32.totalorder %s36, 1
        %s726 = scalar_select %p725, %s36, 1
        %s727 = scalar_lea.vmem %s11, %s726
        %p728 = pneg %p350
        %p729 = pneg %p347
        %p730 = scmp.lt.s32.totalorder %s36, 1
        %s731 = scalar_select %p730, %s36, 1
        %s732 = scalar_lea.vmem %s12, %s731
        %p733 = pneg %p376
        %p734 = pneg %p373
        %p735 = scmp.lt.s32.totalorder %s36, 1
        %s736 = scalar_select %p735, %s36, 1
        %s737 = smul.addr %s736, 16
        %s738 = smul.addr %s737, 4
        %s739 = scalar_lea.vmem %s13, %s738
        %p740 = pneg %p402
        %p741 = pneg %p399
        %p742 = scmp.lt.s32.totalorder %s36, 1
        %s743 = scalar_select %p742, %s36, 1
        %s744 = scalar_lea.vmem %s14, %s743
        %p745 = pneg %p428
        %p746 = pneg %p425
        %p747 = scmp.lt.s32.totalorder %s36, 1
        %s748 = scalar_select %p747, %s36, 1
        %s749 = smul.addr %s748, 16
        %s750 = smul.addr %s749, 4
        %s751 = scalar_lea.vmem %s15, %s750
        %p752 = pneg %p454
        %p753 = pneg %p451
        %p754 = scmp.lt.s32.totalorder %s36, 1
        %s755 = scalar_select %p754, %s36, 1
        %s756 = scalar_lea.vmem %s16, %s755
        %p757 = pneg %p480
        %p758 = pneg %p477
        %p759 = pneg %p506
        %p760 = pneg %p503
        %s761 = sand.u32 %s493, 1
        %s762 = scalar_lea.sflag [#allocation4], %s761
        %s763 = sand.u32 %s493, 1
        %s764 = smul.addr %s763, 16
        %s765 = scalar_lea.vmem [#allocation3], %s764
        %p766 = scmp.lt.s32.totalorder %s35, 1
        %s767 = scalar_select %p766, %s35, 1
        %s768 = smul.addr %s767, 2
        %s769 = smul.addr %s768, 8
        %s770 = scalar_lea.vmem %s0, %s769
        %p771 = scmp.lt.s32.totalorder %s36, 1
        %s772 = scalar_select %p771, %s36, 1
        %s773 = scalar_lea.vmem %s1, %s772
        %p774 = scmp.lt.s32.totalorder %s36, 1
        %s775 = scalar_select %p774, %s36, 1
        %s776 = scalar_lea.vmem %s2, %s775
        %p777 = scmp.lt.s32.totalorder %s36, 1
        %s778 = scalar_select %p777, %s36, 1
        %s779 = smul.addr %s778, 16
        %s780 = smul.addr %s779, 4
        %s781 = scalar_lea.vmem %s3, %s780
        %p782 = scmp.lt.s32.totalorder %s36, 1
        %s783 = scalar_select %p782, %s36, 1
        %s784 = smul.addr %s783, 16
        %s785 = smul.addr %s784, 8
        %s786 = scalar_lea.vmem %s4, %s785
        %p787 = scmp.lt.s32.totalorder %s36, 1
        %s788 = scalar_select %p787, %s36, 1
        %s789 = smul.addr %s788, 16
        %s790 = smul.addr %s789, 4
        %s791 = scalar_lea.vmem %s5, %s790
        %p792 = scmp.lt.s32.totalorder %s36, 1
        %s793 = scalar_select %p792, %s36, 1
        %s794 = smul.addr %s793, 16
        %s795 = smul.addr %s794, 8
        %s796 = scalar_lea.vmem %s6, %s795
        %p797 = scmp.lt.s32.totalorder %s36, 1
        %s798 = scalar_select %p797, %s36, 1
        %s799 = smul.addr %s798, 16
        %s800 = smul.addr %s799, 4
        %s801 = scalar_lea.vmem %s7, %s800
        %p802 = scmp.lt.s32.totalorder %s36, 1
        %s803 = scalar_select %p802, %s36, 1
        %s804 = smul.addr %s803, 16
        %s805 = smul.addr %s804, 8
        %s806 = scalar_lea.vmem %s8, %s805
        %p807 = scmp.lt.s32.totalorder %s36, 1
        %s808 = scalar_select %p807, %s36, 1
        %s809 = smul.addr %s808, 4
        %s810 = smul.addr %s809, 4
        %s811 = scalar_lea.vmem %s9, %s810
        %p812 = scmp.lt.s32.totalorder %s36, 1
        %s813 = scalar_select %p812, %s36, 1
        %s814 = scalar_lea.vmem %s10, %s813
        %p815 = scmp.lt.s32.totalorder %s36, 1
        %s816 = scalar_select %p815, %s36, 1
        %s817 = scalar_lea.vmem %s11, %s816
        %p818 = scmp.lt.s32.totalorder %s36, 1
        %s819 = scalar_select %p818, %s36, 1
        %s820 = scalar_lea.vmem %s12, %s819
        %p821 = scmp.lt.s32.totalorder %s36, 1
        %s822 = scalar_select %p821, %s36, 1
        %s823 = smul.addr %s822, 16
        %s824 = smul.addr %s823, 4
        %s825 = scalar_lea.vmem %s13, %s824
        %p826 = scmp.lt.s32.totalorder %s36, 1
        %s827 = scalar_select %p826, %s36, 1
        %s828 = scalar_lea.vmem %s14, %s827
        %p829 = scmp.lt.s32.totalorder %s36, 1
        %s830 = scalar_select %p829, %s36, 1
        %s831 = smul.addr %s830, 16
        %s832 = smul.addr %s831, 4
        %s833 = scalar_lea.vmem %s15, %s832
        %p834 = scmp.lt.s32.totalorder %s36, 1
        %s835 = scalar_select %p834, %s36, 1
        %s836 = scalar_lea.vmem %s16, %s835
        %p838 = scmp.eq.s32.totalorder %s36, 0
        // Predicated region
        $region89: #{tpu_custom_call.1} parent=87 // pred_check
          %p839 = pneg %p838
        $region90: #{tpu_custom_call.1} parent=87 // pred_check_branch
          %841 = sbr.rel (%p839) target = $region92
        $region91: #{tpu_custom_call.1} parent=87 // pred_region
          %v842 = vld [vmem:[%s770] sm:$0xff]
          %v843 = vld [vmem:[%s770 + $0x8] sm:$0xff]
          %844 = vst [vmem:[#allocation2] sm:$0xff] %v842
          %845 = vst [vmem:[#allocation2 + $0x8] sm:$0xff] %v843
        $region92: #{tpu_custom_call.1} parent=87 // pred_fallthru
          _
        %v846 = vld [vmem:[#allocation2] sm:$0xff]
        %v847 = vld [vmem:[#allocation2 + $0x8] sm:$0xff]
        %v848 = vld [vmem:[%s773] sm:$0x1]
        %v849 = vld [vmem:[%s776] sm:$0x1]
        %850 = vadd.xlane.f32.xlu0 %v846
        %v851 = vpop.xlane.xlu0 %850
        %852 = vadd.xlane.f32.xlu0 %v847
        %v853 = vpop.xlane.xlu0 %852
        %v854 = vmul.f32 %v851, 0.03125
        %v855 = vmul.f32 %v853, 0.03125
        %v856 = vmul.f32 %v846, %v846
        %v857 = vmul.f32 %v847, %v847
        %858 = vadd.xlane.f32.xlu0 %v856
        %v859 = vpop.xlane.xlu0 %858
        %860 = vadd.xlane.f32.xlu0 %v857
        %v861 = vpop.xlane.xlu0 %860
        %v862 = vmul.f32 %v859, 0.03125
        %v863 = vmul.f32 %v861, 0.03125
        %v864 = vmul.f32 %v854, %v854
        %v865 = vmul.f32 %v855, %v855
        %v866 = vsub.f32 %v862, %v864
        %v867 = vsub.f32 %v863, %v865
        %v868 = vsub.f32 %v846, %v854
        %v869 = vsub.f32 %v847, %v855
        %v870 = vadd.f32 %v866, 1e-06
        %v871 = vadd.f32 %v867, 1e-06
        %v872 = vrsqrt.pop %v870
        %v873 = vrsqrt.pop %v871
        %v874 = vmul.f32 %v868, %v872
        %v875 = vmul.f32 %v869, %v873
        %v877 = vlaneseq
        %v878 = vshrl.u32 %v877, 7
        %v879 = vsub.s32 0, %v878
        %v880 = vrot.slane %v848, %v879
        %v882 = vmul.f32 %v874, %v880
        %v883 = vmul.f32 %v875, %v880
        %v885 = vlaneseq
        %v886 = vshrl.u32 %v885, 7
        %v887 = vsub.s32 0, %v886
        %v888 = vrot.slane %v849, %v887
        %v890 = vadd.f32 %v882, %v888
        %v891 = vadd.f32 %v883, %v888
        %v892 = vpack.c.bf16 %v891, %v890
        %v893 = vld [vmem:[%s781] sm:$0xf]
        %v894 = vld [vmem:[%s781 + $0x4] sm:$0xf]
        %v895 = vld [vmem:[%s781 + $0x8] sm:$0xf]
        %v896 = vld [vmem:[%s781 + $0xc] sm:$0xf]
        %v897 = vld [vmem:[%s781 + $0x10] sm:$0xf]
        %v898 = vld [vmem:[%s781 + $0x14] sm:$0xf]
        %v899 = vld [vmem:[%s781 + $0x18] sm:$0xf]
        %v900 = vld [vmem:[%s781 + $0x1c] sm:$0xf]
        %v901 = vld [vmem:[%s781 + $0x20] sm:$0xf]
        %v902 = vld [vmem:[%s781 + $0x24] sm:$0xf]
        %v903 = vld [vmem:[%s781 + $0x28] sm:$0xf]
        %v904 = vld [vmem:[%s781 + $0x2c] sm:$0xf]
        %v905 = vld [vmem:[%s781 + $0x30] sm:$0xf]
        %v906 = vld [vmem:[%s781 + $0x34] sm:$0xf]
        %v907 = vld [vmem:[%s781 + $0x38] sm:$0xf]
        %v908 = vld [vmem:[%s781 + $0x3c] sm:$0xf]
        %v909 = vld [vmem:[%s786] sm:$0xff]
        %v910 = vld [vmem:[%s786 + $0x8] sm:$0xff]
        %v911 = vld [vmem:[%s786 + $0x10] sm:$0xff]
        %v912 = vld [vmem:[%s786 + $0x18] sm:$0xff]
        %v913 = vld [vmem:[%s786 + $0x20] sm:$0xff]
        %v914 = vld [vmem:[%s786 + $0x28] sm:$0xff]
        %v915 = vld [vmem:[%s786 + $0x30] sm:$0xff]
        %v916 = vld [vmem:[%s786 + $0x38] sm:$0xff]
        %v917 = vld [vmem:[%s786 + $0x40] sm:$0xff]
        %v918 = vld [vmem:[%s786 + $0x48] sm:$0xff]
        %v919 = vld [vmem:[%s786 + $0x50] sm:$0xff]
        %v920 = vld [vmem:[%s786 + $0x58] sm:$0xff]
        %v921 = vld [vmem:[%s786 + $0x60] sm:$0xff]
        %v922 = vld [vmem:[%s786 + $0x68] sm:$0xff]
        %v923 = vld [vmem:[%s786 + $0x70] sm:$0xff]
        %v924 = vld [vmem:[%s786 + $0x78] sm:$0xff]
        %926 = vset.pattern.permute.xlu0 0
        %927 = vperm.xlu0 %926, %v909
        %v928 = vpop.permute.xlu0 %927
        %931 = vset.pattern.permute.xlu0 0
        %932 = vperm.xlu0 %931, %v910
        %v933 = vpop.permute.xlu0 %932
        %936 = vset.pattern.permute.xlu0 0
        %937 = vperm.xlu0 %936, %v911
        %v938 = vpop.permute.xlu0 %937
        %941 = vset.pattern.permute.xlu0 0
        %942 = vperm.xlu0 %941, %v912
        %v943 = vpop.permute.xlu0 %942
        %946 = vset.pattern.permute.xlu0 0
        %947 = vperm.xlu0 %946, %v913
        %v948 = vpop.permute.xlu0 %947
        %950 = vset.pattern.permute.xlu0 0
        %951 = vperm.xlu0 %950, %v914
        %v952 = vpop.permute.xlu0 %951
        %954 = vset.pattern.permute.xlu0 0
        %955 = vperm.xlu0 %954, %v915
        %v956 = vpop.permute.xlu0 %955
        %958 = vset.pattern.permute.xlu0 0
        %959 = vperm.xlu0 %958, %v916
        %v960 = vpop.permute.xlu0 %959
        %962 = vset.pattern.permute.xlu0 0
        %963 = vperm.xlu0 %962, %v917
        %v964 = vpop.permute.xlu0 %963
        %966 = vset.pattern.permute.xlu0 0
        %967 = vperm.xlu0 %966, %v918
        %v968 = vpop.permute.xlu0 %967
        %970 = vset.pattern.permute.xlu0 0
        %971 = vperm.xlu0 %970, %v919
        %v972 = vpop.permute.xlu0 %971
        %974 = vset.pattern.permute.xlu0 0
        %975 = vperm.xlu0 %974, %v920
        %v976 = vpop.permute.xlu0 %975
        %978 = vset.pattern.permute.xlu0 0
        %979 = vperm.xlu0 %978, %v921
        %v980 = vpop.permute.xlu0 %979
        %982 = vset.pattern.permute.xlu0 0
        %983 = vperm.xlu0 %982, %v922
        %v984 = vpop.permute.xlu0 %983
        %986 = vset.pattern.permute.xlu0 0
        %987 = vperm.xlu0 %986, %v923
        %v988 = vpop.permute.xlu0 %987
        %990 = vset.pattern.permute.xlu0 0
        %991 = vperm.xlu0 %990, %v924
        %v992 = vpop.permute.xlu0 %991
        %v1009 = vunpack.c.l.b16 %v893
        %v1010 = vunpack.c.l.b16 %v894
        %v1011 = vunpack.c.l.b16 %v895
        %v1012 = vunpack.c.l.b16 %v896
        %v1013 = vunpack.c.l.b16 %v897
        %v1014 = vunpack.c.l.b16 %v898
        %v1015 = vunpack.c.l.b16 %v899
        %v1016 = vunpack.c.l.b16 %v900
        %v1017 = vunpack.c.l.b16 %v901
        %v1018 = vunpack.c.l.b16 %v902
        %v1019 = vunpack.c.l.b16 %v903
        %v1020 = vunpack.c.l.b16 %v904
        %v1021 = vunpack.c.l.b16 %v905
        %v1022 = vunpack.c.l.b16 %v906
        %v1023 = vunpack.c.l.b16 %v907
        %v1024 = vunpack.c.l.b16 %v908
        %v1025 = vpack.c.b16 %v1010, %v1009
        %v1026 = vpack.c.b16 %v1012, %v1011
        %v1027 = vpack.c.b16 %v1014, %v1013
        %v1028 = vpack.c.b16 %v1016, %v1015
        %v1029 = vpack.c.b16 %v1018, %v1017
        %v1030 = vpack.c.b16 %v1020, %v1019
        %v1031 = vpack.c.b16 %v1022, %v1021
        %v1032 = vpack.c.b16 %v1024, %v1023
        %1041 = vmatprep.subr.bf16.mxu0 0
        %1042 = vmatpush1.bf16.xpose.msra.mxu0 %v892
        %1043 = vmatprep.subr.bf16.mxu0 0
        %1044 = vmatpush1.bf16.xpose.msra.mxu0 0
        %1045 = vmatprep.subr.bf16.mxu0 0
        %1046 = vmatpush1.bf16.xpose.msra.mxu0 0
        %1047 = vmatprep.subr.bf16.mxu0 0
        %1048 = vmatpush1.bf16.xpose.msra.mxu0 0
        %1049 = vmatprep.subr.bf16.mxu0 0
        %1050 = vmatpush1.bf16.xpose.msra.mxu0 0
        %1051 = vmatprep.subr.bf16.mxu0 0
        %1052 = vmatpush1.bf16.xpose.msra.mxu0 0
        %1053 = vmatprep.subr.bf16.mxu0 0
        %1054 = vmatpush1.bf16.xpose.msra.mxu0 0
        %1055 = vmatprep.subr.bf16.mxu0 0
        %1056 = vmatpush1.bf16.xpose.msra.mxu0 0
        %1057 = vmatprep.subr.bf16.mxu0 0
        %1058 = vmatpush1.bf16.xpose.msra.mxu0 0
        %1059 = vmatprep.subr.bf16.mxu0 0
        %1060 = vmatpush1.bf16.xpose.msra.mxu0 0
        %1061 = vmatprep.subr.bf16.mxu0 0
        %1062 = vmatpush1.bf16.xpose.msra.mxu0 0
        %1063 = vmatprep.subr.bf16.mxu0 0
        %1064 = vmatpush1.bf16.xpose.msra.mxu0 0
        %1065 = vmatprep.subr.bf16.mxu0 0
        %1066 = vmatpush1.bf16.xpose.msra.mxu0 0
        %1067 = vmatprep.subr.bf16.mxu0 0
        %1068 = vmatpush1.bf16.xpose.msra.mxu0 0
        %1069 = vmatprep.subr.bf16.mxu0 0
        %1070 = vmatpush1.bf16.xpose.msra.mxu0 0
        %1071 = vmatprep.subr.bf16.mxu0 0
        %1072 = vmatpush1.bf16.xpose.msra.mxu0 0
        %1073 = vmatprep.mubr.bf16.mxu0 0
        %1074 = vmatmul.mubr.bf16.gmra.mrb[0].mxu0 %v1025
        %v1075 = vpop.f32.mrb[0].mxu0
        %v1076 = vadd.f32 %v928, %v1075
        %v1077 = vpop.f32.mrb[0].mxu0
        %v1078 = vpop.f32.mrb[0].mxu0
        %v1079 = vadd.f32 %v933, %v1078
        %v1080 = vpop.f32.mrb[0].mxu0
        %1081 = vmatprep.mubr.bf16.mxu0 0
        %1082 = vmatmul.mubr.bf16.gmra.mrb[0].mxu0 %v1026
        %v1083 = vpop.f32.mrb[0].mxu0
        %v1084 = vadd.f32 %v938, %v1083
        %v1085 = vpop.f32.mrb[0].mxu0
        %v1086 = vpop.f32.mrb[0].mxu0
        %v1087 = vadd.f32 %v943, %v1086
        %v1088 = vpop.f32.mrb[0].mxu0
        %1089 = vmatprep.mubr.bf16.mxu0 0
        %1090 = vmatmul.mubr.bf16.gmra.mrb[0].mxu0 %v1027
        %v1091 = vpop.f32.mrb[0].mxu0
        %v1092 = vpop.f32.mrb[0].mxu0
        %v1093 = vpop.f32.mrb[0].mxu0
        %v1094 = vpop.f32.mrb[0].mxu0
        %1095 = vmatprep.mubr.bf16.mxu0 0
        %1096 = vmatmul.mubr.bf16.gmra.mrb[0].mxu0 %v1028
        %v1097 = vpop.f32.mrb[0].mxu0
        %v1098 = vpop.f32.mrb[0].mxu0
        %v1099 = vpop.f32.mrb[0].mxu0
        %v1100 = vpop.f32.mrb[0].mxu0
        %1101 = vmatprep.mubr.bf16.mxu0 0
        %1102 = vmatmul.mubr.bf16.gmra.mrb[0].mxu0 %v1029
        %v1103 = vpop.f32.mrb[0].mxu0
        %v1104 = vpop.f32.mrb[0].mxu0
        %v1105 = vpop.f32.mrb[0].mxu0
        %v1106 = vpop.f32.mrb[0].mxu0
        %1107 = vmatprep.mubr.bf16.mxu0 0
        %1108 = vmatmul.mubr.bf16.gmra.mrb[0].mxu0 %v1030
        %v1109 = vpop.f32.mrb[0].mxu0
        %v1110 = vpop.f32.mrb[0].mxu0
        %v1111 = vpop.f32.mrb[0].mxu0
        %v1112 = vpop.f32.mrb[0].mxu0
        %1113 = vmatprep.mubr.bf16.mxu0 0
        %1114 = vmatmul.mubr.bf16.gmra.mrb[0].mxu0 %v1031
        %v1115 = vpop.f32.mrb[0].mxu0
        %v1116 = vpop.f32.mrb[0].mxu0
        %v1117 = vpop.f32.mrb[0].mxu0
        %v1118 = vpop.f32.mrb[0].mxu0
        %1119 = vmatprep.mubr.bf16.mxu0 0
        %1120 = vmatmul.mubr.bf16.gmra.mrb[0].mxu0 %v1032
        %v1121 = vpop.f32.mrb[0].mxu0
        %v1122 = vpop.f32.mrb[0].mxu0
        %v1123 = vpop.f32.mrb[0].mxu0
        %v1124 = vpop.f32.mrb[0].mxu0
        %1125 = vdwg.mxu0
        %v1126 = vld [vmem:[%s791] sm:$0xf]
        %v1127 = vld [vmem:[%s791 + $0x4] sm:$0xf]
        %v1128 = vld [vmem:[%s791 + $0x8] sm:$0xf]
        %v1129 = vld [vmem:[%s791 + $0xc] sm:$0xf]
        %v1130 = vld [vmem:[%s791 + $0x10] sm:$0xf]
        %v1131 = vld [vmem:[%s791 + $0x14] sm:$0xf]
        %v1132 = vld [vmem:[%s791 + $0x18] sm:$0xf]
        %v1133 = vld [vmem:[%s791 + $0x1c] sm:$0xf]
        %v1134 = vld [vmem:[%s791 + $0x20] sm:$0xf]
        %v1135 = vld [vmem:[%s791 + $0x24] sm:$0xf]
        %v1136 = vld [vmem:[%s791 + $0x28] sm:$0xf]
        %v1137 = vld [vmem:[%s791 + $0x2c] sm:$0xf]
        %v1138 = vld [vmem:[%s791 + $0x30] sm:$0xf]
        %v1139 = vld [vmem:[%s791 + $0x34] sm:$0xf]
        %v1140 = vld [vmem:[%s791 + $0x38] sm:$0xf]
        %v1141 = vld [vmem:[%s791 + $0x3c] sm:$0xf]
        %v1142 = vld [vmem:[%s796] sm:$0xff]
        %v1143 = vld [vmem:[%s796 + $0x8] sm:$0xff]
        %v1144 = vld [vmem:[%s796 + $0x10] sm:$0xff]
        %v1145 = vld [vmem:[%s796 + $0x18] sm:$0xff]
        %v1146 = vld [vmem:[%s796 + $0x20] sm:$0xff]
        %v1147 = vld [vmem:[%s796 + $0x28] sm:$0xff]
        %v1148 = vld [vmem:[%s796 + $0x30] sm:$0xff]
        %v1149 = vld [vmem:[%s796 + $0x38] sm:$0xff]
        %v1150 = vld [vmem:[%s796 + $0x40] sm:$0xff]
        %v1151 = vld [vmem:[%s796 + $0x48] sm:$0xff]
        %v1152 = vld [vmem:[%s796 + $0x50] sm:$0xff]
        %v1153 = vld [vmem:[%s796 + $0x58] sm:$0xff]
        %v1154 = vld [vmem:[%s796 + $0x60] sm:$0xff]
        %v1155 = vld [vmem:[%s796 + $0x68] sm:$0xff]
        %v1156 = vld [vmem:[%s796 + $0x70] sm:$0xff]
        %v1157 = vld [vmem:[%s796 + $0x78] sm:$0xff]
        %1159 = vset.pattern.permute.xlu0 0
        %1160 = vperm.xlu0 %1159, %v1142
        %v1161 = vpop.permute.xlu0 %1160
        %1164 = vset.pattern.permute.xlu0 0
        %1165 = vperm.xlu0 %1164, %v1143
        %v1166 = vpop.permute.xlu0 %1165
        %1169 = vset.pattern.permute.xlu0 0
        %1170 = vperm.xlu0 %1169, %v1144
        %v1171 = vpop.permute.xlu0 %1170
        %1174 = vset.pattern.permute.xlu0 0
        %1175 = vperm.xlu0 %1174, %v1145
        %v1176 = vpop.permute.xlu0 %1175
        %1179 = vset.pattern.permute.xlu0 0
        %1180 = vperm.xlu0 %1179, %v1146
        %v1181 = vpop.permute.xlu0 %1180
        %1183 = vset.pattern.permute.xlu0 0
        %1184 = vperm.xlu0 %1183, %v1147
        %v1185 = vpop.permute.xlu0 %1184
        %1187 = vset.pattern.permute.xlu0 0
        %1188 = vperm.xlu0 %1187, %v1148
        %v1189 = vpop.permute.xlu0 %1188
        %1191 = vset.pattern.permute.xlu0 0
        %1192 = vperm.xlu0 %1191, %v1149
        %v1193 = vpop.permute.xlu0 %1192
        %1195 = vset.pattern.permute.xlu0 0
        %1196 = vperm.xlu0 %1195, %v1150
        %v1197 = vpop.permute.xlu0 %1196
        %1199 = vset.pattern.permute.xlu0 0
        %1200 = vperm.xlu0 %1199, %v1151
        %v1201 = vpop.permute.xlu0 %1200
        %1203 = vset.pattern.permute.xlu0 0
        %1204 = vperm.xlu0 %1203, %v1152
        %v1205 = vpop.permute.xlu0 %1204
        %1207 = vset.pattern.permute.xlu0 0
        %1208 = vperm.xlu0 %1207, %v1153
        %v1209 = vpop.permute.xlu0 %1208
        %1211 = vset.pattern.permute.xlu0 0
        %1212 = vperm.xlu0 %1211, %v1154
        %v1213 = vpop.permute.xlu0 %1212
        %1215 = vset.pattern.permute.xlu0 0
        %1216 = vperm.xlu0 %1215, %v1155
        %v1217 = vpop.permute.xlu0 %1216
        %1219 = vset.pattern.permute.xlu0 0
        %1220 = vperm.xlu0 %1219, %v1156
        %v1221 = vpop.permute.xlu0 %1220
        %1223 = vset.pattern.permute.xlu0 0
        %1224 = vperm.xlu0 %1223, %v1157
        %v1225 = vpop.permute.xlu0 %1224
        %v1242 = vunpack.c.l.b16 %v1126
        %v1243 = vunpack.c.l.b16 %v1127
        %v1244 = vunpack.c.l.b16 %v1128
        %v1245 = vunpack.c.l.b16 %v1129
        %v1246 = vunpack.c.l.b16 %v1130
        %v1247 = vunpack.c.l.b16 %v1131
        %v1248 = vunpack.c.l.b16 %v1132
        %v1249 = vunpack.c.l.b16 %v1133
        %v1250 = vunpack.c.l.b16 %v1134
        %v1251 = vunpack.c.l.b16 %v1135
        %v1252 = vunpack.c.l.b16 %v1136
        %v1253 = vunpack.c.l.b16 %v1137
        %v1254 = vunpack.c.l.b16 %v1138
        %v1255 = vunpack.c.l.b16 %v1139
        %v1256 = vunpack.c.l.b16 %v1140
        %v1257 = vunpack.c.l.b16 %v1141
        %v1258 = vpack.c.b16 %v1243, %v1242
        %v1259 = vpack.c.b16 %v1245, %v1244
        %v1260 = vpack.c.b16 %v1247, %v1246
        %v1261 = vpack.c.b16 %v1249, %v1248
        %v1262 = vpack.c.b16 %v1251, %v1250
        %v1263 = vpack.c.b16 %v1253, %v1252
        %v1264 = vpack.c.b16 %v1255, %v1254
        %v1265 = vpack.c.b16 %v1257, %v1256
        %1274 = vmatprep.subr.bf16.mxu0 0
        %1275 = vmatpush1.bf16.xpose.msra.mxu0 %v892
        %1276 = vmatprep.subr.bf16.mxu0 0
        %1277 = vmatpush1.bf16.xpose.msra.mxu0 0
        %1278 = vmatprep.subr.bf16.mxu0 0
        %1279 = vmatpush1.bf16.xpose.msra.mxu0 0
        %1280 = vmatprep.subr.bf16.mxu0 0
        %1281 = vmatpush1.bf16.xpose.msra.mxu0 0
        %1282 = vmatprep.subr.bf16.mxu0 0
        %1283 = vmatpush1.bf16.xpose.msra.mxu0 0
        %1284 = vmatprep.subr.bf16.mxu0 0
        %1285 = vmatpush1.bf16.xpose.msra.mxu0 0
        %1286 = vmatprep.subr.bf16.mxu0 0
        %1287 = vmatpush1.bf16.xpose.msra.mxu0 0
        %1288 = vmatprep.subr.bf16.mxu0 0
        %1289 = vmatpush1.bf16.xpose.msra.mxu0 0
        %1290 = vmatprep.subr.bf16.mxu0 0
        %1291 = vmatpush1.bf16.xpose.msra.mxu0 0
        %1292 = vmatprep.subr.bf16.mxu0 0
        %1293 = vmatpush1.bf16.xpose.msra.mxu0 0
        %1294 = vmatprep.subr.bf16.mxu0 0
        %1295 = vmatpush1.bf16.xpose.msra.mxu0 0
        %1296 = vmatprep.subr.bf16.mxu0 0
        %1297 = vmatpush1.bf16.xpose.msra.mxu0 0
        %1298 = vmatprep.subr.bf16.mxu0 0
        %1299 = vmatpush1.bf16.xpose.msra.mxu0 0
        %1300 = vmatprep.subr.bf16.mxu0 0
        %1301 = vmatpush1.bf16.xpose.msra.mxu0 0
        %1302 = vmatprep.subr.bf16.mxu0 0
        %1303 = vmatpush1.bf16.xpose.msra.mxu0 0
        %1304 = vmatprep.subr.bf16.mxu0 0
        %1305 = vmatpush1.bf16.xpose.msra.mxu0 0
        %1306 = vmatprep.mubr.bf16.mxu0 0
        %1307 = vmatmul.mubr.bf16.gmra.mrb[0].mxu0 %v1258
        %v1308 = vpop.f32.mrb[0].mxu0
        %v1309 = vadd.f32 %v1161, %v1308
        %v1310 = vpop.f32.mrb[0].mxu0
        %v1311 = vpop.f32.mrb[0].mxu0
        %v1312 = vadd.f32 %v1166, %v1311
        %v1313 = vpop.f32.mrb[0].mxu0
        %1314 = vmatprep.mubr.bf16.mxu0 0
        %1315 = vmatmul.mubr.bf16.gmra.mrb[0].mxu0 %v1259
        %v1316 = vpop.f32.mrb[0].mxu0
        %v1317 = vadd.f32 %v1171, %v1316
        %v1318 = vpop.f32.mrb[0].mxu0
        %v1319 = vpop.f32.mrb[0].mxu0
        %v1320 = vadd.f32 %v1176, %v1319
        %v1321 = vpop.f32.mrb[0].mxu0
        %1322 = vmatprep.mubr.bf16.mxu0 0
        %1323 = vmatmul.mubr.bf16.gmra.mrb[0].mxu0 %v1260
        %v1324 = vpop.f32.mrb[0].mxu0
        %v1325 = vpop.f32.mrb[0].mxu0
        %v1326 = vpop.f32.mrb[0].mxu0
        %v1327 = vpop.f32.mrb[0].mxu0
        %1328 = vmatprep.mubr.bf16.mxu0 0
        %1329 = vmatmul.mubr.bf16.gmra.mrb[0].mxu0 %v1261
        %v1330 = vpop.f32.mrb[0].mxu0
        %v1331 = vpop.f32.mrb[0].mxu0
        %v1332 = vpop.f32.mrb[0].mxu0
        %v1333 = vpop.f32.mrb[0].mxu0
        %1334 = vmatprep.mubr.bf16.mxu0 0
        %1335 = vmatmul.mubr.bf16.gmra.mrb[0].mxu0 %v1262
        %v1336 = vpop.f32.mrb[0].mxu0
        %v1337 = vpop.f32.mrb[0].mxu0
        %v1338 = vpop.f32.mrb[0].mxu0
        %v1339 = vpop.f32.mrb[0].mxu0
        %1340 = vmatprep.mubr.bf16.mxu0 0
        %1341 = vmatmul.mubr.bf16.gmra.mrb[0].mxu0 %v1263
        %v1342 = vpop.f32.mrb[0].mxu0
        %v1343 = vpop.f32.mrb[0].mxu0
        %v1344 = vpop.f32.mrb[0].mxu0
        %v1345 = vpop.f32.mrb[0].mxu0
        %1346 = vmatprep.mubr.bf16.mxu0 0
        %1347 = vmatmul.mubr.bf16.gmra.mrb[0].mxu0 %v1264
        %v1348 = vpop.f32.mrb[0].mxu0
        %v1349 = vpop.f32.mrb[0].mxu0
        %v1350 = vpop.f32.mrb[0].mxu0
        %v1351 = vpop.f32.mrb[0].mxu0
        %1352 = vmatprep.mubr.bf16.mxu0 0
        %1353 = vmatmul.mubr.bf16.gmra.mrb[0].mxu0 %v1265
        %v1354 = vpop.f32.mrb[0].mxu0
        %v1355 = vpop.f32.mrb[0].mxu0
        %v1356 = vpop.f32.mrb[0].mxu0
        %v1357 = vpop.f32.mrb[0].mxu0
        %1358 = vdwg.mxu0
        %v1359 = vld [vmem:[%s801] sm:$0xf]
        %v1360 = vld [vmem:[%s801 + $0x4] sm:$0xf]
        %v1361 = vld [vmem:[%s801 + $0x8] sm:$0xf]
        %v1362 = vld [vmem:[%s801 + $0xc] sm:$0xf]
        %v1363 = vld [vmem:[%s801 + $0x10] sm:$0xf]
        %v1364 = vld [vmem:[%s801 + $0x14] sm:$0xf]
        %v1365 = vld [vmem:[%s801 + $0x18] sm:$0xf]
        %v1366 = vld [vmem:[%s801 + $0x1c] sm:$0xf]
        %v1367 = vld [vmem:[%s801 + $0x20] sm:$0xf]
        %v1368 = vld [vmem:[%s801 + $0x24] sm:$0xf]
        %v1369 = vld [vmem:[%s801 + $0x28] sm:$0xf]
        %v1370 = vld [vmem:[%s801 + $0x2c] sm:$0xf]
        %v1371 = vld [vmem:[%s801 + $0x30] sm:$0xf]
        %v1372 = vld [vmem:[%s801 + $0x34] sm:$0xf]
        %v1373 = vld [vmem:[%s801 + $0x38] sm:$0xf]
        %v1374 = vld [vmem:[%s801 + $0x3c] sm:$0xf]
        %v1375 = vld [vmem:[%s806] sm:$0xff]
        %v1376 = vld [vmem:[%s806 + $0x8] sm:$0xff]
        %v1377 = vld [vmem:[%s806 + $0x10] sm:$0xff]
        %v1378 = vld [vmem:[%s806 + $0x18] sm:$0xff]
        %v1379 = vld [vmem:[%s806 + $0x20] sm:$0xff]
        %v1380 = vld [vmem:[%s806 + $0x28] sm:$0xff]
        %v1381 = vld [vmem:[%s806 + $0x30] sm:$0xff]
        %v1382 = vld [vmem:[%s806 + $0x38] sm:$0xff]
        %v1383 = vld [vmem:[%s806 + $0x40] sm:$0xff]
        %v1384 = vld [vmem:[%s806 + $0x48] sm:$0xff]
        %v1385 = vld [vmem:[%s806 + $0x50] sm:$0xff]
        %v1386 = vld [vmem:[%s806 + $0x58] sm:$0xff]
        %v1387 = vld [vmem:[%s806 + $0x60] sm:$0xff]
        %v1388 = vld [vmem:[%s806 + $0x68] sm:$0xff]
        %v1389 = vld [vmem:[%s806 + $0x70] sm:$0xff]
        %v1390 = vld [vmem:[%s806 + $0x78] sm:$0xff]
        %1392 = vset.pattern.permute.xlu0 0
        %1393 = vperm.xlu0 %1392, %v1375
        %v1394 = vpop.permute.xlu0 %1393
        %1397 = vset.pattern.permute.xlu0 0
        %1398 = vperm.xlu0 %1397, %v1376
        %v1399 = vpop.permute.xlu0 %1398
        %1402 = vset.pattern.permute.xlu0 0
        %1403 = vperm.xlu0 %1402, %v1377
        %v1404 = vpop.permute.xlu0 %1403
        %1407 = vset.pattern.permute.xlu0 0
        %1408 = vperm.xlu0 %1407, %v1378
        %v1409 = vpop.permute.xlu0 %1408
        %1412 = vset.pattern.permute.xlu0 0
        %1413 = vperm.xlu0 %1412, %v1379
        %v1414 = vpop.permute.xlu0 %1413
        %1416 = vset.pattern.permute.xlu0 0
        %1417 = vperm.xlu0 %1416, %v1380
        %v1418 = vpop.permute.xlu0 %1417
        %1420 = vset.pattern.permute.xlu0 0
        %1421 = vperm.xlu0 %1420, %v1381
        %v1422 = vpop.permute.xlu0 %1421
        %1424 = vset.pattern.permute.xlu0 0
        %1425 = vperm.xlu0 %1424, %v1382
        %v1426 = vpop.permute.xlu0 %1425
        %1428 = vset.pattern.permute.xlu0 0
        %1429 = vperm.xlu0 %1428, %v1383
        %v1430 = vpop.permute.xlu0 %1429
        %1432 = vset.pattern.permute.xlu0 0
        %1433 = vperm.xlu0 %1432, %v1384
        %v1434 = vpop.permute.xlu0 %1433
        %1436 = vset.pattern.permute.xlu0 0
        %1437 = vperm.xlu0 %1436, %v1385
        %v1438 = vpop.permute.xlu0 %1437
        %1440 = vset.pattern.permute.xlu0 0
        %1441 = vperm.xlu0 %1440, %v1386
        %v1442 = vpop.permute.xlu0 %1441
        %1444 = vset.pattern.permute.xlu0 0
        %1445 = vperm.xlu0 %1444, %v1387
        %v1446 = vpop.permute.xlu0 %1445
        %1448 = vset.pattern.permute.xlu0 0
        %1449 = vperm.xlu0 %1448, %v1388
        %v1450 = vpop.permute.xlu0 %1449
        %1452 = vset.pattern.permute.xlu0 0
        %1453 = vperm.xlu0 %1452, %v1389
        %v1454 = vpop.permute.xlu0 %1453
        %1456 = vset.pattern.permute.xlu0 0
        %1457 = vperm.xlu0 %1456, %v1390
        %v1458 = vpop.permute.xlu0 %1457
        %v1475 = vunpack.c.l.b16 %v1359
        %v1476 = vunpack.c.l.b16 %v1360
        %v1477 = vunpack.c.l.b16 %v1361
        %v1478 = vunpack.c.l.b16 %v1362
        %v1479 = vunpack.c.l.b16 %v1363
        %v1480 = vunpack.c.l.b16 %v1364
        %v1481 = vunpack.c.l.b16 %v1365
        %v1482 = vunpack.c.l.b16 %v1366
        %v1483 = vunpack.c.l.b16 %v1367
        %v1484 = vunpack.c.l.b16 %v1368
        %v1485 = vunpack.c.l.b16 %v1369
        %v1486 = vunpack.c.l.b16 %v1370
        %v1487 = vunpack.c.l.b16 %v1371
        %v1488 = vunpack.c.l.b16 %v1372
        %v1489 = vunpack.c.l.b16 %v1373
        %v1490 = vunpack.c.l.b16 %v1374
        %v1491 = vpack.c.b16 %v1476, %v1475
        %v1492 = vpack.c.b16 %v1478, %v1477
        %v1493 = vpack.c.b16 %v1480, %v1479
        %v1494 = vpack.c.b16 %v1482, %v1481
        %v1495 = vpack.c.b16 %v1484, %v1483
        %v1496 = vpack.c.b16 %v1486, %v1485
        %v1497 = vpack.c.b16 %v1488, %v1487
        %v1498 = vpack.c.b16 %v1490, %v1489
        %1507 = vmatprep.subr.bf16.mxu0 0
        %1508 = vmatpush1.bf16.xpose.msra.mxu0 %v892
        %1509 = vmatprep.subr.bf16.mxu0 0
        %1510 = vmatpush1.bf16.xpose.msra.mxu0 0
        %1511 = vmatprep.subr.bf16.mxu0 0
        %1512 = vmatpush1.bf16.xpose.msra.mxu0 0
        %1513 = vmatprep.subr.bf16.mxu0 0
        %1514 = vmatpush1.bf16.xpose.msra.mxu0 0
        %1515 = vmatprep.subr.bf16.mxu0 0
        %1516 = vmatpush1.bf16.xpose.msra.mxu0 0
        %1517 = vmatprep.subr.bf16.mxu0 0
        %1518 = vmatpush1.bf16.xpose.msra.mxu0 0
        %1519 = vmatprep.subr.bf16.mxu0 0
        %1520 = vmatpush1.bf16.xpose.msra.mxu0 0
        %1521 = vmatprep.subr.bf16.mxu0 0
        %1522 = vmatpush1.bf16.xpose.msra.mxu0 0
        %1523 = vmatprep.subr.bf16.mxu0 0
        %1524 = vmatpush1.bf16.xpose.msra.mxu0 0
        %1525 = vmatprep.subr.bf16.mxu0 0
        %1526 = vmatpush1.bf16.xpose.msra.mxu0 0
        %1527 = vmatprep.subr.bf16.mxu0 0
        %1528 = vmatpush1.bf16.xpose.msra.mxu0 0
        %1529 = vmatprep.subr.bf16.mxu0 0
        %1530 = vmatpush1.bf16.xpose.msra.mxu0 0
        %1531 = vmatprep.subr.bf16.mxu0 0
        %1532 = vmatpush1.bf16.xpose.msra.mxu0 0
        %1533 = vmatprep.subr.bf16.mxu0 0
        %1534 = vmatpush1.bf16.xpose.msra.mxu0 0
        %1535 = vmatprep.subr.bf16.mxu0 0
        %1536 = vmatpush1.bf16.xpose.msra.mxu0 0
        %1537 = vmatprep.subr.bf16.mxu0 0
        %1538 = vmatpush1.bf16.xpose.msra.mxu0 0
        %1539 = vmatprep.mubr.bf16.mxu0 0
        %1540 = vmatmul.mubr.bf16.gmra.mrb[0].mxu0 %v1491
        %v1541 = vpop.f32.mrb[0].mxu0
        %v1542 = vadd.f32 %v1394, %v1541
        %v1543 = vpop.f32.mrb[0].mxu0
        %v1544 = vpop.f32.mrb[0].mxu0
        %v1545 = vadd.f32 %v1399, %v1544
        %v1546 = vpop.f32.mrb[0].mxu0
        %1547 = vmatprep.mubr.bf16.mxu0 0
        %1548 = vmatmul.mubr.bf16.gmra.mrb[0].mxu0 %v1492
        %v1549 = vpop.f32.mrb[0].mxu0
        %v1550 = vadd.f32 %v1404, %v1549
        %v1551 = vpop.f32.mrb[0].mxu0
        %v1552 = vpop.f32.mrb[0].mxu0
        %v1553 = vadd.f32 %v1409, %v1552
        %v1554 = vpop.f32.mrb[0].mxu0
        %1555 = vmatprep.mubr.bf16.mxu0 0
        %1556 = vmatmul.mubr.bf16.gmra.mrb[0].mxu0 %v1493
        %v1557 = vpop.f32.mrb[0].mxu0
        %v1558 = vpop.f32.mrb[0].mxu0
        %v1559 = vpop.f32.mrb[0].mxu0
        %v1560 = vpop.f32.mrb[0].mxu0
        %1561 = vmatprep.mubr.bf16.mxu0 0
        %1562 = vmatmul.mubr.bf16.gmra.mrb[0].mxu0 %v1494
        %v1563 = vpop.f32.mrb[0].mxu0
        %v1564 = vpop.f32.mrb[0].mxu0
        %v1565 = vpop.f32.mrb[0].mxu0
        %v1566 = vpop.f32.mrb[0].mxu0
        %1567 = vmatprep.mubr.bf16.mxu0 0
        %1568 = vmatmul.mubr.bf16.gmra.mrb[0].mxu0 %v1495
        %v1569 = vpop.f32.mrb[0].mxu0
        %v1570 = vpop.f32.mrb[0].mxu0
        %v1571 = vpop.f32.mrb[0].mxu0
        %v1572 = vpop.f32.mrb[0].mxu0
        %1573 = vmatprep.mubr.bf16.mxu0 0
        %1574 = vmatmul.mubr.bf16.gmra.mrb[0].mxu0 %v1496
        %v1575 = vpop.f32.mrb[0].mxu0
        %v1576 = vpop.f32.mrb[0].mxu0
        %v1577 = vpop.f32.mrb[0].mxu0
        %v1578 = vpop.f32.mrb[0].mxu0
        %1579 = vmatprep.mubr.bf16.mxu0 0
        %1580 = vmatmul.mubr.bf16.gmra.mrb[0].mxu0 %v1497
        %v1581 = vpop.f32.mrb[0].mxu0
        %v1582 = vpop.f32.mrb[0].mxu0
        %v1583 = vpop.f32.mrb[0].mxu0
        %v1584 = vpop.f32.mrb[0].mxu0
        %1585 = vmatprep.mubr.bf16.mxu0 0
        %1586 = vmatmul.mubr.bf16.gmra.mrb[0].mxu0 %v1498
        %v1587 = vpop.f32.mrb[0].mxu0
        %v1588 = vpop.f32.mrb[0].mxu0
        %v1589 = vpop.f32.mrb[0].mxu0
        %v1590 = vpop.f32.mrb[0].mxu0
        %1591 = vdwg.mxu0
        %v1592 = vpack.c.bf16 %v1076, %v1076
        %v1593 = vpack.c.bf16 %v1079, %v1079
        %v1594 = vpack.c.bf16 %v1084, %v1084
        %v1595 = vpack.c.bf16 %v1087, %v1087
        %v1596 = vpack.c.bf16 %v1309, %v1309
        %v1597 = vpack.c.bf16 %v1312, %v1312
        %v1598 = vpack.c.bf16 %v1317, %v1317
        %v1599 = vpack.c.bf16 %v1320, %v1320
        %v1600 = vpack.c.bf16 %v1542, %v1542
        %v1601 = vpack.c.bf16 %v1545, %v1545
        %v1602 = vpack.c.bf16 %v1550, %v1550
        %v1603 = vpack.c.bf16 %v1553, %v1553
        %v1604 = vld [vmem:[%s811] sm:$0xf]
        %v1605 = vld [vmem:[%s811 + $0x4] sm:$0xf]
        %v1606 = vld [vmem:[%s811 + $0x8] sm:$0xf]
        %v1607 = vld [vmem:[%s811 + $0xc] sm:$0xf]
        %1608 = vxpose.xlu0.c.b16.start [1/8] %v1592, 128
        %1609 = vxpose.xlu0.c.b16.cont [2/8] 0, 128
        %1610 = vxpose.xlu0.c.b16.cont [3/8] 0, 128
        %1611 = vxpose.xlu0.c.b16.cont [4/8] 0, 128
        %1612 = vxpose.xlu0.c.b16.cont [5/8] 0, 128
        %1613 = vxpose.xlu0.c.b16.cont [6/8] 0, 128
        %1614 = vxpose.xlu0.c.b16.cont [7/8] 0, 128
        %1615 = vxpose.xlu0.c.b16.end [8/8] 0, 128
        %v1616 = vpop.trf.xlu0
        %v1617 = vpop.trf.xlu0
        %v1618 = vpop.trf.xlu0
        %v1619 = vpop.trf.xlu0
        %v1620 = vpop.trf.xlu0
        %v1621 = vpop.trf.xlu0
        %v1622 = vpop.trf.xlu0
        %v1623 = vpop.trf.xlu0
        %vm1624 = vcmask 64512
        %v1626 = vsel %vm1624, %v1616, 0
        %vm1628 = vcmask 1043456
        %v1630 = vsel %vm1628, %v1596, 0
        %1632 = vmatprep.subr.bf16.mxu0 0
        %1633 = vmatpush1.bf16.msra.mxu0 %v1630
        %1634 = vmatprep.subr.bf16.mxu0 0
        %1635 = vmatpush1.bf16.msra.mxu0 0
        %1636 = vmatprep.subr.bf16.mxu0 0
        %1637 = vmatpush1.bf16.msra.mxu0 0
        %1638 = vmatprep.subr.bf16.mxu0 0
        %1639 = vmatpush1.bf16.msra.mxu0 0
        %1640 = vmatprep.subr.bf16.mxu0 0
        %1641 = vmatpush1.bf16.msra.mxu0 0
        %1642 = vmatprep.subr.bf16.mxu0 0
        %1643 = vmatpush1.bf16.msra.mxu0 0
        %1644 = vmatprep.subr.bf16.mxu0 0
        %1645 = vmatpush1.bf16.msra.mxu0 0
        %1646 = vmatprep.subr.bf16.mxu0 0
        %1647 = vmatpush1.bf16.msra.mxu0 0
        %1648 = vmatprep.subr.bf16.mxu0 0
        %1649 = vmatpush1.bf16.msra.mxu0 0
        %1650 = vmatprep.subr.bf16.mxu0 0
        %1651 = vmatpush1.bf16.msra.mxu0 0
        %1652 = vmatprep.subr.bf16.mxu0 0
        %1653 = vmatpush1.bf16.msra.mxu0 0
        %1654 = vmatprep.subr.bf16.mxu0 0
        %1655 = vmatpush1.bf16.msra.mxu0 0
        %1656 = vmatprep.subr.bf16.mxu0 0
        %1657 = vmatpush1.bf16.msra.mxu0 0
        %1658 = vmatprep.subr.bf16.mxu0 0
        %1659 = vmatpush1.bf16.msra.mxu0 0
        %1660 = vmatprep.subr.bf16.mxu0 0
        %1661 = vmatpush1.bf16.msra.mxu0 0
        %1662 = vmatprep.subr.bf16.mxu0 0
        %1663 = vmatpush1.bf16.msra.mxu0 0
        %1664 = vmatprep.mubr.bf16.mxu0 0
        %1665 = vmatmul.mubr.bf16.gmra.mrb[0].mxu0 %v1626
        %v1666 = vpop.f32.mrb[0].mxu0
        %v1667 = vadd.f32 0.0, %v1666
        %v1668 = vpop.f32.mrb[0].mxu0
        %v1669 = vpop.f32.mrb[0].mxu0
        %v1670 = vadd.f32 0.0, %v1669
        %v1671 = vpop.f32.mrb[0].mxu0
        %1672 = vdwg.mxu0
        %1673 = vxpose.xlu0.c.b16.start [1/8] %v1593, 128
        %1674 = vxpose.xlu0.c.b16.cont [2/8] 0, 128
        %1675 = vxpose.xlu0.c.b16.cont [3/8] 0, 128
        %1676 = vxpose.xlu0.c.b16.cont [4/8] 0, 128
        %1677 = vxpose.xlu0.c.b16.cont [5/8] 0, 128
        %1678 = vxpose.xlu0.c.b16.cont [6/8] 0, 128
        %1679 = vxpose.xlu0.c.b16.cont [7/8] 0, 128
        %1680 = vxpose.xlu0.c.b16.end [8/8] 0, 128
        %v1681 = vpop.trf.xlu0
        %v1682 = vpop.trf.xlu0
        %v1683 = vpop.trf.xlu0
        %v1684 = vpop.trf.xlu0
        %v1685 = vpop.trf.xlu0
        %v1686 = vpop.trf.xlu0
        %v1687 = vpop.trf.xlu0
        %v1688 = vpop.trf.xlu0
        %v1690 = vsel %vm1624, %v1681, 0
        %v1693 = vsel %vm1628, %v1597, 0
        %1695 = vmatprep.subr.bf16.mxu0 0
        %1696 = vmatpush1.bf16.msra.mxu0 %v1693
        %1697 = vmatprep.subr.bf16.mxu0 0
        %1698 = vmatpush1.bf16.msra.mxu0 0
        %1699 = vmatprep.subr.bf16.mxu0 0
        %1700 = vmatpush1.bf16.msra.mxu0 0
        %1701 = vmatprep.subr.bf16.mxu0 0
        %1702 = vmatpush1.bf16.msra.mxu0 0
        %1703 = vmatprep.subr.bf16.mxu0 0
        %1704 = vmatpush1.bf16.msra.mxu0 0
        %1705 = vmatprep.subr.bf16.mxu0 0
        %1706 = vmatpush1.bf16.msra.mxu0 0
        %1707 = vmatprep.subr.bf16.mxu0 0
        %1708 = vmatpush1.bf16.msra.mxu0 0
        %1709 = vmatprep.subr.bf16.mxu0 0
        %1710 = vmatpush1.bf16.msra.mxu0 0
        %1711 = vmatprep.subr.bf16.mxu0 0
        %1712 = vmatpush1.bf16.msra.mxu0 0
        %1713 = vmatprep.subr.bf16.mxu0 0
        %1714 = vmatpush1.bf16.msra.mxu0 0
        %1715 = vmatprep.subr.bf16.mxu0 0
        %1716 = vmatpush1.bf16.msra.mxu0 0
        %1717 = vmatprep.subr.bf16.mxu0 0
        %1718 = vmatpush1.bf16.msra.mxu0 0
        %1719 = vmatprep.subr.bf16.mxu0 0
        %1720 = vmatpush1.bf16.msra.mxu0 0
        %1721 = vmatprep.subr.bf16.mxu0 0
        %1722 = vmatpush1.bf16.msra.mxu0 0
        %1723 = vmatprep.subr.bf16.mxu0 0
        %1724 = vmatpush1.bf16.msra.mxu0 0
        %1725 = vmatprep.subr.bf16.mxu0 0
        %1726 = vmatpush1.bf16.msra.mxu0 0
        %1727 = vmatprep.mubr.bf16.mxu0 0
        %1728 = vmatmul.mubr.bf16.gmra.mrb[0].mxu0 %v1690
        %v1729 = vpop.f32.mrb[0].mxu0
        %v1730 = vadd.f32 0.0, %v1729
        %v1731 = vpop.f32.mrb[0].mxu0
        %v1732 = vpop.f32.mrb[0].mxu0
        %v1733 = vadd.f32 0.0, %v1732
        %v1734 = vpop.f32.mrb[0].mxu0
        %1735 = vdwg.mxu0
        %1736 = vxpose.xlu0.c.b16.start [1/8] %v1594, 128
        %1737 = vxpose.xlu0.c.b16.cont [2/8] 0, 128
        %1738 = vxpose.xlu0.c.b16.cont [3/8] 0, 128
        %1739 = vxpose.xlu0.c.b16.cont [4/8] 0, 128
        %1740 = vxpose.xlu0.c.b16.cont [5/8] 0, 128
        %1741 = vxpose.xlu0.c.b16.cont [6/8] 0, 128
        %1742 = vxpose.xlu0.c.b16.cont [7/8] 0, 128
        %1743 = vxpose.xlu0.c.b16.end [8/8] 0, 128
        %v1744 = vpop.trf.xlu0
        %v1745 = vpop.trf.xlu0
        %v1746 = vpop.trf.xlu0
        %v1747 = vpop.trf.xlu0
        %v1748 = vpop.trf.xlu0
        %v1749 = vpop.trf.xlu0
        %v1750 = vpop.trf.xlu0
        %v1751 = vpop.trf.xlu0
        %v1753 = vsel %vm1624, %v1744, 0
        %v1756 = vsel %vm1628, %v1598, 0
        %1758 = vmatprep.subr.bf16.mxu0 0
        %1759 = vmatpush1.bf16.msra.mxu0 %v1756
        %1760 = vmatprep.subr.bf16.mxu0 0
        %1761 = vmatpush1.bf16.msra.mxu0 0
        %1762 = vmatprep.subr.bf16.mxu0 0
        %1763 = vmatpush1.bf16.msra.mxu0 0
        %1764 = vmatprep.subr.bf16.mxu0 0
        %1765 = vmatpush1.bf16.msra.mxu0 0
        %1766 = vmatprep.subr.bf16.mxu0 0
        %1767 = vmatpush1.bf16.msra.mxu0 0
        %1768 = vmatprep.subr.bf16.mxu0 0
        %1769 = vmatpush1.bf16.msra.mxu0 0
        %1770 = vmatprep.subr.bf16.mxu0 0
        %1771 = vmatpush1.bf16.msra.mxu0 0
        %1772 = vmatprep.subr.bf16.mxu0 0
        %1773 = vmatpush1.bf16.msra.mxu0 0
        %1774 = vmatprep.subr.bf16.mxu0 0
        %1775 = vmatpush1.bf16.msra.mxu0 0
        %1776 = vmatprep.subr.bf16.mxu0 0
        %1777 = vmatpush1.bf16.msra.mxu0 0
        %1778 = vmatprep.subr.bf16.mxu0 0
        %1779 = vmatpush1.bf16.msra.mxu0 0
        %1780 = vmatprep.subr.bf16.mxu0 0
        %1781 = vmatpush1.bf16.msra.mxu0 0
        %1782 = vmatprep.subr.bf16.mxu0 0
        %1783 = vmatpush1.bf16.msra.mxu0 0
        %1784 = vmatprep.subr.bf16.mxu0 0
        %1785 = vmatpush1.bf16.msra.mxu0 0
        %1786 = vmatprep.subr.bf16.mxu0 0
        %1787 = vmatpush1.bf16.msra.mxu0 0
        %1788 = vmatprep.subr.bf16.mxu0 0
        %1789 = vmatpush1.bf16.msra.mxu0 0
        %1790 = vmatprep.mubr.bf16.mxu0 0
        %1791 = vmatmul.mubr.bf16.gmra.mrb[0].mxu0 %v1753
        %v1792 = vpop.f32.mrb[0].mxu0
        %v1793 = vadd.f32 0.0, %v1792
        %v1794 = vpop.f32.mrb[0].mxu0
        %v1795 = vpop.f32.mrb[0].mxu0
        %v1796 = vadd.f32 0.0, %v1795
        %v1797 = vpop.f32.mrb[0].mxu0
        %1798 = vdwg.mxu0
        %1799 = vxpose.xlu0.c.b16.start [1/8] %v1595, 128
        %1800 = vxpose.xlu0.c.b16.cont [2/8] 0, 128
        %1801 = vxpose.xlu0.c.b16.cont [3/8] 0, 128
        %1802 = vxpose.xlu0.c.b16.cont [4/8] 0, 128
        %1803 = vxpose.xlu0.c.b16.cont [5/8] 0, 128
        %1804 = vxpose.xlu0.c.b16.cont [6/8] 0, 128
        %1805 = vxpose.xlu0.c.b16.cont [7/8] 0, 128
        %1806 = vxpose.xlu0.c.b16.end [8/8] 0, 128
        %v1807 = vpop.trf.xlu0
        %v1808 = vpop.trf.xlu0
        %v1809 = vpop.trf.xlu0
        %v1810 = vpop.trf.xlu0
        %v1811 = vpop.trf.xlu0
        %v1812 = vpop.trf.xlu0
        %v1813 = vpop.trf.xlu0
        %v1814 = vpop.trf.xlu0
        %v1816 = vsel %vm1624, %v1807, 0
        %v1819 = vsel %vm1628, %v1599, 0
        %1821 = vmatprep.subr.bf16.mxu0 0
        %1822 = vmatpush1.bf16.msra.mxu0 %v1819
        %1823 = vmatprep.subr.bf16.mxu0 0
        %1824 = vmatpush1.bf16.msra.mxu0 0
        %1825 = vmatprep.subr.bf16.mxu0 0
        %1826 = vmatpush1.bf16.msra.mxu0 0
        %1827 = vmatprep.subr.bf16.mxu0 0
        %1828 = vmatpush1.bf16.msra.mxu0 0
        %1829 = vmatprep.subr.bf16.mxu0 0
        %1830 = vmatpush1.bf16.msra.mxu0 0
        %1831 = vmatprep.subr.bf16.mxu0 0
        %1832 = vmatpush1.bf16.msra.mxu0 0
        %1833 = vmatprep.subr.bf16.mxu0 0
        %1834 = vmatpush1.bf16.msra.mxu0 0
        %1835 = vmatprep.subr.bf16.mxu0 0
        %1836 = vmatpush1.bf16.msra.mxu0 0
        %1837 = vmatprep.subr.bf16.mxu0 0
        %1838 = vmatpush1.bf16.msra.mxu0 0
        %1839 = vmatprep.subr.bf16.mxu0 0
        %1840 = vmatpush1.bf16.msra.mxu0 0
        %1841 = vmatprep.subr.bf16.mxu0 0
        %1842 = vmatpush1.bf16.msra.mxu0 0
        %1843 = vmatprep.subr.bf16.mxu0 0
        %1844 = vmatpush1.bf16.msra.mxu0 0
        %1845 = vmatprep.subr.bf16.mxu0 0
        %1846 = vmatpush1.bf16.msra.mxu0 0
        %1847 = vmatprep.subr.bf16.mxu0 0
        %1848 = vmatpush1.bf16.msra.mxu0 0
        %1849 = vmatprep.subr.bf16.mxu0 0
        %1850 = vmatpush1.bf16.msra.mxu0 0
        %1851 = vmatprep.subr.bf16.mxu0 0
        %1852 = vmatpush1.bf16.msra.mxu0 0
        %1853 = vmatprep.mubr.bf16.mxu0 0
        %1854 = vmatmul.mubr.bf16.gmra.mrb[0].mxu0 %v1816
        %v1855 = vpop.f32.mrb[0].mxu0
        %v1856 = vadd.f32 0.0, %v1855
        %v1857 = vpop.f32.mrb[0].mxu0
        %v1858 = vpop.f32.mrb[0].mxu0
        %v1859 = vadd.f32 0.0, %v1858
        %v1860 = vpop.f32.mrb[0].mxu0
        %1861 = vdwg.mxu0
        %vm1862 = vcmask 130048
        %v1863 = vsel %vm1862, %v1667, -inf
        %1864 = vmax.xlane.f32.xlu0 %v1863
        %v1865 = vpop.xlane.xlu0 %1864
        %v1866 = vsel %vm1862, %v1670, -inf
        %1867 = vmax.xlane.f32.xlu0 %v1866
        %v1868 = vpop.xlane.xlu0 %1867
        %v1869 = vsel %vm1862, %v1730, -inf
        %1870 = vmax.xlane.f32.xlu0 %v1869
        %v1871 = vpop.xlane.xlu0 %1870
        %v1872 = vsel %vm1862, %v1733, -inf
        %1873 = vmax.xlane.f32.xlu0 %v1872
        %v1874 = vpop.xlane.xlu0 %1873
        %v1875 = vsel %vm1862, %v1793, -inf
        %1876 = vmax.xlane.f32.xlu0 %v1875
        %v1877 = vpop.xlane.xlu0 %1876
        %v1878 = vsel %vm1862, %v1796, -inf
        %1879 = vmax.xlane.f32.xlu0 %v1878
        %v1880 = vpop.xlane.xlu0 %1879
        %v1881 = vsel %vm1862, %v1856, -inf
        %1882 = vmax.xlane.f32.xlu0 %v1881
        %v1883 = vpop.xlane.xlu0 %1882
        %v1884 = vsel %vm1862, %v1859, -inf
        %1885 = vmax.xlane.f32.xlu0 %v1884
        %v1886 = vpop.xlane.xlu0 %1885
        %v1887 = vsub.f32 %v1667, %v1865
        %v1888 = vsub.f32 %v1670, %v1868
        %v1889 = vsub.f32 %v1730, %v1871
        %v1890 = vsub.f32 %v1733, %v1874
        %v1891 = vsub.f32 %v1793, %v1877
        %v1892 = vsub.f32 %v1796, %v1880
        %v1893 = vsub.f32 %v1856, %v1883
        %v1894 = vsub.f32 %v1859, %v1886
        %v1895 = vmul.f32 %v1887, 1.442695
        %v1896 = vpow.pop %v1895
        %v1897 = vmul.f32 %v1888, 1.442695
        %v1898 = vpow.pop %v1897
        %v1899 = vmul.f32 %v1889, 1.442695
        %v1900 = vpow.pop %v1899
        %v1901 = vmul.f32 %v1890, 1.442695
        %v1902 = vpow.pop %v1901
        %v1903 = vmul.f32 %v1891, 1.442695
        %v1904 = vpow.pop %v1903
        %v1905 = vmul.f32 %v1892, 1.442695
        %v1906 = vpow.pop %v1905
        %v1907 = vmul.f32 %v1893, 1.442695
        %v1908 = vpow.pop %v1907
        %v1909 = vmul.f32 %v1894, 1.442695
        %v1910 = vpow.pop %v1909
        %v1911 = vsel %vm1862, %v1896, 0.0
        %1912 = vadd.xlane.f32.xlu0 %v1911
        %v1913 = vpop.xlane.xlu0 %1912
        %v1914 = vsel %vm1862, %v1898, 0.0
        %1915 = vadd.xlane.f32.xlu0 %v1914
        %v1916 = vpop.xlane.xlu0 %1915
        %v1917 = vsel %vm1862, %v1900, 0.0
        %1918 = vadd.xlane.f32.xlu0 %v1917
        %v1919 = vpop.xlane.xlu0 %1918
        %v1920 = vsel %vm1862, %v1902, 0.0
        %1921 = vadd.xlane.f32.xlu0 %v1920
        %v1922 = vpop.xlane.xlu0 %1921
        %v1923 = vsel %vm1862, %v1904, 0.0
        %1924 = vadd.xlane.f32.xlu0 %v1923
        %v1925 = vpop.xlane.xlu0 %1924
        %v1926 = vsel %vm1862, %v1906, 0.0
        %1927 = vadd.xlane.f32.xlu0 %v1926
        %v1928 = vpop.xlane.xlu0 %1927
        %v1929 = vsel %vm1862, %v1908, 0.0
        %1930 = vadd.xlane.f32.xlu0 %v1929
        %v1931 = vpop.xlane.xlu0 %1930
        %v1932 = vsel %vm1862, %v1910, 0.0
        %1933 = vadd.xlane.f32.xlu0 %v1932
        %v1934 = vpop.xlane.xlu0 %1933
        %v1935 = vrcp.pop %v1913
        %v1936 = vrcp.pop %v1916
        %v1937 = vrcp.pop %v1919
        %v1938 = vrcp.pop %v1922
        %v1939 = vrcp.pop %v1925
        %v1940 = vrcp.pop %v1928
        %v1941 = vrcp.pop %v1931
        %v1942 = vrcp.pop %v1934
        %v1943 = vmul.f32 %v1896, %v1935
        %v1944 = vmul.f32 %v1898, %v1936
        %v1945 = vmul.f32 %v1900, %v1937
        %v1946 = vmul.f32 %v1902, %v1938
        %v1947 = vmul.f32 %v1904, %v1939
        %v1948 = vmul.f32 %v1906, %v1940
        %v1949 = vmul.f32 %v1908, %v1941
        %v1950 = vmul.f32 %v1910, %v1942
        %v1951 = vpack.c.bf16 %v1944, %v1943
        %v1952 = vpack.c.bf16 %v1946, %v1945
        %v1953 = vpack.c.bf16 %v1948, %v1947
        %v1954 = vpack.c.bf16 %v1950, %v1949
        %v1956 = vsel %vm1862, %v1951, 0
        %v1959 = vsel %vm1862, %v1600, 0
        %1961 = vmatprep.subr.bf16.mxu0 0
        %1962 = vmatpush1.bf16.xpose.msra.mxu0 %v1959
        %1963 = vmatprep.subr.bf16.mxu0 0
        %1964 = vmatpush1.bf16.xpose.msra.mxu0 0
        %1965 = vmatprep.subr.bf16.mxu0 0
        %1966 = vmatpush1.bf16.xpose.msra.mxu0 0
        %1967 = vmatprep.subr.bf16.mxu0 0
        %1968 = vmatpush1.bf16.xpose.msra.mxu0 0
        %1969 = vmatprep.subr.bf16.mxu0 0
        %1970 = vmatpush1.bf16.xpose.msra.mxu0 0
        %1971 = vmatprep.subr.bf16.mxu0 0
        %1972 = vmatpush1.bf16.xpose.msra.mxu0 0
        %1973 = vmatprep.subr.bf16.mxu0 0
        %1974 = vmatpush1.bf16.xpose.msra.mxu0 0
        %1975 = vmatprep.subr.bf16.mxu0 0
        %1976 = vmatpush1.bf16.xpose.msra.mxu0 0
        %1977 = vmatprep.subr.bf16.mxu0 0
        %1978 = vmatpush1.bf16.xpose.msra.mxu0 0
        %1979 = vmatprep.subr.bf16.mxu0 0
        %1980 = vmatpush1.bf16.xpose.msra.mxu0 0
        %1981 = vmatprep.subr.bf16.mxu0 0
        %1982 = vmatpush1.bf16.xpose.msra.mxu0 0
        %1983 = vmatprep.subr.bf16.mxu0 0
        %1984 = vmatpush1.bf16.xpose.msra.mxu0 0
        %1985 = vmatprep.subr.bf16.mxu0 0
        %1986 = vmatpush1.bf16.xpose.msra.mxu0 0
        %1987 = vmatprep.subr.bf16.mxu0 0
        %1988 = vmatpush1.bf16.xpose.msra.mxu0 0
        %1989 = vmatprep.subr.bf16.mxu0 0
        %1990 = vmatpush1.bf16.xpose.msra.mxu0 0
        %1991 = vmatprep.subr.bf16.mxu0 0
        %1992 = vmatpush1.bf16.xpose.msra.mxu0 0
        %1993 = vmatprep.mubr.bf16.mxu0 0
        %1994 = vmatmul.mubr.bf16.gmra.mrb[0].mxu0 %v1956
        %v1995 = vpop.f32.mrb[0].mxu0
        %v1996 = vadd.f32 0.0, %v1995
        %v1997 = vpop.f32.mrb[0].mxu0
        %v1998 = vpop.f32.mrb[0].mxu0
        %v1999 = vadd.f32 0.0, %v1998
        %v2000 = vpop.f32.mrb[0].mxu0
        %2001 = vdwg.mxu0
        %v2003 = vsel %vm1862, %v1952, 0
        %v2006 = vsel %vm1862, %v1601, 0
        %2008 = vmatprep.subr.bf16.mxu0 0
        %2009 = vmatpush1.bf16.xpose.msra.mxu0 %v2006
        %2010 = vmatprep.subr.bf16.mxu0 0
        %2011 = vmatpush1.bf16.xpose.msra.mxu0 0
        %2012 = vmatprep.subr.bf16.mxu0 0
        %2013 = vmatpush1.bf16.xpose.msra.mxu0 0
        %2014 = vmatprep.subr.bf16.mxu0 0
        %2015 = vmatpush1.bf16.xpose.msra.mxu0 0
        %2016 = vmatprep.subr.bf16.mxu0 0
        %2017 = vmatpush1.bf16.xpose.msra.mxu0 0
        %2018 = vmatprep.subr.bf16.mxu0 0
        %2019 = vmatpush1.bf16.xpose.msra.mxu0 0
        %2020 = vmatprep.subr.bf16.mxu0 0
        %2021 = vmatpush1.bf16.xpose.msra.mxu0 0
        %2022 = vmatprep.subr.bf16.mxu0 0
        %2023 = vmatpush1.bf16.xpose.msra.mxu0 0
        %2024 = vmatprep.subr.bf16.mxu0 0
        %2025 = vmatpush1.bf16.xpose.msra.mxu0 0
        %2026 = vmatprep.subr.bf16.mxu0 0
        %2027 = vmatpush1.bf16.xpose.msra.mxu0 0
        %2028 = vmatprep.subr.bf16.mxu0 0
        %2029 = vmatpush1.bf16.xpose.msra.mxu0 0
        %2030 = vmatprep.subr.bf16.mxu0 0
        %2031 = vmatpush1.bf16.xpose.msra.mxu0 0
        %2032 = vmatprep.subr.bf16.mxu0 0
        %2033 = vmatpush1.bf16.xpose.msra.mxu0 0
        %2034 = vmatprep.subr.bf16.mxu0 0
        %2035 = vmatpush1.bf16.xpose.msra.mxu0 0
        %2036 = vmatprep.subr.bf16.mxu0 0
        %2037 = vmatpush1.bf16.xpose.msra.mxu0 0
        %2038 = vmatprep.subr.bf16.mxu0 0
        %2039 = vmatpush1.bf16.xpose.msra.mxu0 0
        %2040 = vmatprep.mubr.bf16.mxu0 0
        %2041 = vmatmul.mubr.bf16.gmra.mrb[0].mxu0 %v2003
        %v2042 = vpop.f32.mrb[0].mxu0
        %v2043 = vadd.f32 0.0, %v2042
        %v2044 = vpop.f32.mrb[0].mxu0
        %v2045 = vpop.f32.mrb[0].mxu0
        %v2046 = vadd.f32 0.0, %v2045
        %v2047 = vpop.f32.mrb[0].mxu0
        %2048 = vdwg.mxu0
        %v2050 = vsel %vm1862, %v1953, 0
        %v2053 = vsel %vm1862, %v1602, 0
        %2055 = vmatprep.subr.bf16.mxu0 0
        %2056 = vmatpush1.bf16.xpose.msra.mxu0 %v2053
        %2057 = vmatprep.subr.bf16.mxu0 0
        %2058 = vmatpush1.bf16.xpose.msra.mxu0 0
        %2059 = vmatprep.subr.bf16.mxu0 0
        %2060 = vmatpush1.bf16.xpose.msra.mxu0 0
        %2061 = vmatprep.subr.bf16.mxu0 0
        %2062 = vmatpush1.bf16.xpose.msra.mxu0 0
        %2063 = vmatprep.subr.bf16.mxu0 0
        %2064 = vmatpush1.bf16.xpose.msra.mxu0 0
        %2065 = vmatprep.subr.bf16.mxu0 0
        %2066 = vmatpush1.bf16.xpose.msra.mxu0 0
        %2067 = vmatprep.subr.bf16.mxu0 0
        %2068 = vmatpush1.bf16.xpose.msra.mxu0 0
        %2069 = vmatprep.subr.bf16.mxu0 0
        %2070 = vmatpush1.bf16.xpose.msra.mxu0 0
        %2071 = vmatprep.subr.bf16.mxu0 0
        %2072 = vmatpush1.bf16.xpose.msra.mxu0 0
        %2073 = vmatprep.subr.bf16.mxu0 0
        %2074 = vmatpush1.bf16.xpose.msra.mxu0 0
        %2075 = vmatprep.subr.bf16.mxu0 0
        %2076 = vmatpush1.bf16.xpose.msra.mxu0 0
        %2077 = vmatprep.subr.bf16.mxu0 0
        %2078 = vmatpush1.bf16.xpose.msra.mxu0 0
        %2079 = vmatprep.subr.bf16.mxu0 0
        %2080 = vmatpush1.bf16.xpose.msra.mxu0 0
        %2081 = vmatprep.subr.bf16.mxu0 0
        %2082 = vmatpush1.bf16.xpose.msra.mxu0 0
        %2083 = vmatprep.subr.bf16.mxu0 0
        %2084 = vmatpush1.bf16.xpose.msra.mxu0 0
        %2085 = vmatprep.subr.bf16.mxu0 0
        %2086 = vmatpush1.bf16.xpose.msra.mxu0 0
        %2087 = vmatprep.mubr.bf16.mxu0 0
        %2088 = vmatmul.mubr.bf16.gmra.mrb[0].mxu0 %v2050
        %v2089 = vpop.f32.mrb[0].mxu0
        %v2090 = vadd.f32 0.0, %v2089
        %v2091 = vpop.f32.mrb[0].mxu0
        %v2092 = vpop.f32.mrb[0].mxu0
        %v2093 = vadd.f32 0.0, %v2092
        %v2094 = vpop.f32.mrb[0].mxu0
        %2095 = vdwg.mxu0
        %v2097 = vsel %vm1862, %v1954, 0
        %v2100 = vsel %vm1862, %v1603, 0
        %2102 = vmatprep.subr.bf16.mxu0 0
        %2103 = vmatpush1.bf16.xpose.msra.mxu0 %v2100
        %2104 = vmatprep.subr.bf16.mxu0 0
        %2105 = vmatpush1.bf16.xpose.msra.mxu0 0
        %2106 = vmatprep.subr.bf16.mxu0 0
        %2107 = vmatpush1.bf16.xpose.msra.mxu0 0
        %2108 = vmatprep.subr.bf16.mxu0 0
        %2109 = vmatpush1.bf16.xpose.msra.mxu0 0
        %2110 = vmatprep.subr.bf16.mxu0 0
        %2111 = vmatpush1.bf16.xpose.msra.mxu0 0
        %2112 = vmatprep.subr.bf16.mxu0 0
        %2113 = vmatpush1.bf16.xpose.msra.mxu0 0
        %2114 = vmatprep.subr.bf16.mxu0 0
        %2115 = vmatpush1.bf16.xpose.msra.mxu0 0
        %2116 = vmatprep.subr.bf16.mxu0 0
        %2117 = vmatpush1.bf16.xpose.msra.mxu0 0
        %2118 = vmatprep.subr.bf16.mxu0 0
        %2119 = vmatpush1.bf16.xpose.msra.mxu0 0
        %2120 = vmatprep.subr.bf16.mxu0 0
        %2121 = vmatpush1.bf16.xpose.msra.mxu0 0
        %2122 = vmatprep.subr.bf16.mxu0 0
        %2123 = vmatpush1.bf16.xpose.msra.mxu0 0
        %2124 = vmatprep.subr.bf16.mxu0 0
        %2125 = vmatpush1.bf16.xpose.msra.mxu0 0
        %2126 = vmatprep.subr.bf16.mxu0 0
        %2127 = vmatpush1.bf16.xpose.msra.mxu0 0
        %2128 = vmatprep.subr.bf16.mxu0 0
        %2129 = vmatpush1.bf16.xpose.msra.mxu0 0
        %2130 = vmatprep.subr.bf16.mxu0 0
        %2131 = vmatpush1.bf16.xpose.msra.mxu0 0
        %2132 = vmatprep.subr.bf16.mxu0 0
        %2133 = vmatpush1.bf16.xpose.msra.mxu0 0
        %2134 = vmatprep.mubr.bf16.mxu0 0
        %2135 = vmatmul.mubr.bf16.gmra.mrb[0].mxu0 %v2097
        %v2136 = vpop.f32.mrb[0].mxu0
        %v2137 = vadd.f32 0.0, %v2136
        %v2138 = vpop.f32.mrb[0].mxu0
        %v2139 = vpop.f32.mrb[0].mxu0
        %v2140 = vadd.f32 0.0, %v2139
        %v2141 = vpop.f32.mrb[0].mxu0
        %2142 = vdwg.mxu0
        %v2143 = vpack.c.bf16 %v1999, %v1996
        %v2144 = vpack.c.bf16 %v2046, %v2043
        %v2145 = vpack.c.bf16 %v2093, %v2090
        %v2146 = vpack.c.bf16 %v2140, %v2137
        %v2148 = vsel %vm1624, %v2143, 0
        %v2151 = vsel %vm1628, %v1604, 0
        %2153 = vmatprep.subr.bf16.mxu0 0
        %2154 = vmatpush1.bf16.msra.mxu0 %v2151
        %2155 = vmatprep.subr.bf16.mxu0 0
        %2156 = vmatpush1.bf16.msra.mxu0 0
        %2157 = vmatprep.subr.bf16.mxu0 0
        %2158 = vmatpush1.bf16.msra.mxu0 0
        %2159 = vmatprep.subr.bf16.mxu0 0
        %2160 = vmatpush1.bf16.msra.mxu0 0
        %2161 = vmatprep.subr.bf16.mxu0 0
        %2162 = vmatpush1.bf16.msra.mxu0 0
        %2163 = vmatprep.subr.bf16.mxu0 0
        %2164 = vmatpush1.bf16.msra.mxu0 0
        %2165 = vmatprep.subr.bf16.mxu0 0
        %2166 = vmatpush1.bf16.msra.mxu0 0
        %2167 = vmatprep.subr.bf16.mxu0 0
        %2168 = vmatpush1.bf16.msra.mxu0 0
        %2169 = vmatprep.subr.bf16.mxu0 0
        %2170 = vmatpush1.bf16.msra.mxu0 0
        %2171 = vmatprep.subr.bf16.mxu0 0
        %2172 = vmatpush1.bf16.msra.mxu0 0
        %2173 = vmatprep.subr.bf16.mxu0 0
        %2174 = vmatpush1.bf16.msra.mxu0 0
        %2175 = vmatprep.subr.bf16.mxu0 0
        %2176 = vmatpush1.bf16.msra.mxu0 0
        %2177 = vmatprep.subr.bf16.mxu0 0
        %2178 = vmatpush1.bf16.msra.mxu0 0
        %2179 = vmatprep.subr.bf16.mxu0 0
        %2180 = vmatpush1.bf16.msra.mxu0 0
        %2181 = vmatprep.subr.bf16.mxu0 0
        %2182 = vmatpush1.bf16.msra.mxu0 0
        %2183 = vmatprep.subr.bf16.mxu0 0
        %2184 = vmatpush1.bf16.msra.mxu0 0
        %2185 = vmatprep.mubr.bf16.mxu0 0
        %2186 = vmatmul.mubr.bf16.gmra.mrb[0].mxu0 %v2148
        %v2187 = vpop.f32.mrb[0].mxu0
        %v2188 = vadd.f32 0.0, %v2187
        %v2189 = vpop.f32.mrb[0].mxu0
        %v2190 = vpop.f32.mrb[0].mxu0
        %v2191 = vadd.f32 0.0, %v2190
        %v2192 = vpop.f32.mrb[0].mxu0
        %2193 = vdwg.mxu0
        %v2195 = vsel %vm1624, %v2144, 0
        %v2198 = vsel %vm1628, %v1605, 0
        %2200 = vmatprep.subr.bf16.mxu0 0
        %2201 = vmatpush1.bf16.msra.mxu0 %v2198
        %2202 = vmatprep.subr.bf16.mxu0 0
        %2203 = vmatpush1.bf16.msra.mxu0 0
        %2204 = vmatprep.subr.bf16.mxu0 0
        %2205 = vmatpush1.bf16.msra.mxu0 0
        %2206 = vmatprep.subr.bf16.mxu0 0
        %2207 = vmatpush1.bf16.msra.mxu0 0
        %2208 = vmatprep.subr.bf16.mxu0 0
        %2209 = vmatpush1.bf16.msra.mxu0 0
        %2210 = vmatprep.subr.bf16.mxu0 0
        %2211 = vmatpush1.bf16.msra.mxu0 0
        %2212 = vmatprep.subr.bf16.mxu0 0
        %2213 = vmatpush1.bf16.msra.mxu0 0
        %2214 = vmatprep.subr.bf16.mxu0 0
        %2215 = vmatpush1.bf16.msra.mxu0 0
        %2216 = vmatprep.subr.bf16.mxu0 0
        %2217 = vmatpush1.bf16.msra.mxu0 0
        %2218 = vmatprep.subr.bf16.mxu0 0
        %2219 = vmatpush1.bf16.msra.mxu0 0
        %2220 = vmatprep.subr.bf16.mxu0 0
        %2221 = vmatpush1.bf16.msra.mxu0 0
        %2222 = vmatprep.subr.bf16.mxu0 0
        %2223 = vmatpush1.bf16.msra.mxu0 0
        %2224 = vmatprep.subr.bf16.mxu0 0
        %2225 = vmatpush1.bf16.msra.mxu0 0
        %2226 = vmatprep.subr.bf16.mxu0 0
        %2227 = vmatpush1.bf16.msra.mxu0 0
        %2228 = vmatprep.subr.bf16.mxu0 0
        %2229 = vmatpush1.bf16.msra.mxu0 0
        %2230 = vmatprep.subr.bf16.mxu0 0
        %2231 = vmatpush1.bf16.msra.mxu0 0
        %2232 = vmatprep.mubr.bf16.mxu0 0
        %2233 = vmatmul.mubr.bf16.gmra.mrb[0].mxu0 %v2195
        %v2234 = vpop.f32.mrb[0].mxu0
        %v2235 = vadd.f32 0.0, %v2234
        %v2236 = vpop.f32.mrb[0].mxu0
        %v2237 = vpop.f32.mrb[0].mxu0
        %v2238 = vadd.f32 0.0, %v2237
        %v2239 = vpop.f32.mrb[0].mxu0
        %2240 = vdwg.mxu0
        %v2242 = vsel %vm1624, %v2145, 0
        %v2245 = vsel %vm1628, %v1606, 0
        %2247 = vmatprep.subr.bf16.mxu0 0
        %2248 = vmatpush1.bf16.msra.mxu0 %v2245
        %2249 = vmatprep.subr.bf16.mxu0 0
        %2250 = vmatpush1.bf16.msra.mxu0 0
        %2251 = vmatprep.subr.bf16.mxu0 0
        %2252 = vmatpush1.bf16.msra.mxu0 0
        %2253 = vmatprep.subr.bf16.mxu0 0
        %2254 = vmatpush1.bf16.msra.mxu0 0
        %2255 = vmatprep.subr.bf16.mxu0 0
        %2256 = vmatpush1.bf16.msra.mxu0 0
        %2257 = vmatprep.subr.bf16.mxu0 0
        %2258 = vmatpush1.bf16.msra.mxu0 0
        %2259 = vmatprep.subr.bf16.mxu0 0
        %2260 = vmatpush1.bf16.msra.mxu0 0
        %2261 = vmatprep.subr.bf16.mxu0 0
        %2262 = vmatpush1.bf16.msra.mxu0 0
        %2263 = vmatprep.subr.bf16.mxu0 0
        %2264 = vmatpush1.bf16.msra.mxu0 0
        %2265 = vmatprep.subr.bf16.mxu0 0
        %2266 = vmatpush1.bf16.msra.mxu0 0
        %2267 = vmatprep.subr.bf16.mxu0 0
        %2268 = vmatpush1.bf16.msra.mxu0 0
        %2269 = vmatprep.subr.bf16.mxu0 0
        %2270 = vmatpush1.bf16.msra.mxu0 0
        %2271 = vmatprep.subr.bf16.mxu0 0
        %2272 = vmatpush1.bf16.msra.mxu0 0
        %2273 = vmatprep.subr.bf16.mxu0 0
        %2274 = vmatpush1.bf16.msra.mxu0 0
        %2275 = vmatprep.subr.bf16.mxu0 0
        %2276 = vmatpush1.bf16.msra.mxu0 0
        %2277 = vmatprep.subr.bf16.mxu0 0
        %2278 = vmatpush1.bf16.msra.mxu0 0
        %2279 = vmatprep.mubr.bf16.mxu0 0
        %2280 = vmatmul.mubr.bf16.gmra.mrb[0].mxu0 %v2242
        %v2281 = vpop.f32.mrb[0].mxu0
        %v2282 = vadd.f32 0.0, %v2281
        %v2283 = vpop.f32.mrb[0].mxu0
        %v2284 = vpop.f32.mrb[0].mxu0
        %v2285 = vadd.f32 0.0, %v2284
        %v2286 = vpop.f32.mrb[0].mxu0
        %2287 = vdwg.mxu0
        %v2289 = vsel %vm1624, %v2146, 0
        %v2292 = vsel %vm1628, %v1607, 0
        %2294 = vmatprep.subr.bf16.mxu0 0
        %2295 = vmatpush1.bf16.msra.mxu0 %v2292
        %2296 = vmatprep.subr.bf16.mxu0 0
        %2297 = vmatpush1.bf16.msra.mxu0 0
        %2298 = vmatprep.subr.bf16.mxu0 0
        %2299 = vmatpush1.bf16.msra.mxu0 0
        %2300 = vmatprep.subr.bf16.mxu0 0
        %2301 = vmatpush1.bf16.msra.mxu0 0
        %2302 = vmatprep.subr.bf16.mxu0 0
        %2303 = vmatpush1.bf16.msra.mxu0 0
        %2304 = vmatprep.subr.bf16.mxu0 0
        %2305 = vmatpush1.bf16.msra.mxu0 0
        %2306 = vmatprep.subr.bf16.mxu0 0
        %2307 = vmatpush1.bf16.msra.mxu0 0
        %2308 = vmatprep.subr.bf16.mxu0 0
        %2309 = vmatpush1.bf16.msra.mxu0 0
        %2310 = vmatprep.subr.bf16.mxu0 0
        %2311 = vmatpush1.bf16.msra.mxu0 0
        %2312 = vmatprep.subr.bf16.mxu0 0
        %2313 = vmatpush1.bf16.msra.mxu0 0
        %2314 = vmatprep.subr.bf16.mxu0 0
        %2315 = vmatpush1.bf16.msra.mxu0 0
        %2316 = vmatprep.subr.bf16.mxu0 0
        %2317 = vmatpush1.bf16.msra.mxu0 0
        %2318 = vmatprep.subr.bf16.mxu0 0
        %2319 = vmatpush1.bf16.msra.mxu0 0
        %2320 = vmatprep.subr.bf16.mxu0 0
        %2321 = vmatpush1.bf16.msra.mxu0 0
        %2322 = vmatprep.subr.bf16.mxu0 0
        %2323 = vmatpush1.bf16.msra.mxu0 0
        %2324 = vmatprep.subr.bf16.mxu0 0
        %2325 = vmatpush1.bf16.msra.mxu0 0
        %2326 = vmatprep.mubr.bf16.mxu0 0
        %2327 = vmatmul.mubr.bf16.gmra.mrb[0].mxu0 %v2289
        %v2328 = vpop.f32.mrb[0].mxu0
        %v2329 = vadd.f32 0.0, %v2328
        %v2330 = vpop.f32.mrb[0].mxu0
        %v2331 = vpop.f32.mrb[0].mxu0
        %v2332 = vadd.f32 0.0, %v2331
        %v2333 = vpop.f32.mrb[0].mxu0
        %2334 = vdwg.mxu0
        %v2335 = vadd.f32 %v2188, %v2235
        %v2336 = vadd.f32 %v2335, %v2282
        %v2337 = vadd.f32 %v2336, %v2329
        %v2338 = vadd.f32 %v2191, %v2238
        %v2339 = vadd.f32 %v2338, %v2285
        %v2340 = vadd.f32 %v2339, %v2332
        %v2341 = vadd.f32 %v846, %v2337
        %v2342 = vadd.f32 %v847, %v2340
        %v2343 = vld [vmem:[%s814] sm:$0x1]
        %v2345 = vlaneseq
        %v2346 = vshrl.u32 %v2345, 7
        %v2347 = vsub.s32 0, %v2346
        %v2348 = vrot.slane %v2343, %v2347
        %v2350 = vadd.f32 %v2341, %v2348
        %v2351 = vadd.f32 %v2342, %v2348
        %v2352 = vld [vmem:[%s817] sm:$0x1]
        %v2353 = vld [vmem:[%s820] sm:$0x1]
        %2354 = vadd.xlane.f32.xlu0 %v2350
        %v2355 = vpop.xlane.xlu0 %2354
        %2356 = vadd.xlane.f32.xlu0 %v2351
        %v2357 = vpop.xlane.xlu0 %2356
        %v2358 = vmul.f32 %v2355, 0.03125
        %v2359 = vmul.f32 %v2357, 0.03125
        %v2360 = vmul.f32 %v2350, %v2350
        %v2361 = vmul.f32 %v2351, %v2351
        %2362 = vadd.xlane.f32.xlu0 %v2360
        %v2363 = vpop.xlane.xlu0 %2362
        %2364 = vadd.xlane.f32.xlu0 %v2361
        %v2365 = vpop.xlane.xlu0 %2364
        %v2366 = vmul.f32 %v2363, 0.03125
        %v2367 = vmul.f32 %v2365, 0.03125
        %v2368 = vmul.f32 %v2358, %v2358
        %v2369 = vmul.f32 %v2359, %v2359
        %v2370 = vsub.f32 %v2366, %v2368
        %v2371 = vsub.f32 %v2367, %v2369
        %v2372 = vsub.f32 %v2350, %v2358
        %v2373 = vsub.f32 %v2351, %v2359
        %v2374 = vadd.f32 %v2370, 1e-06
        %v2375 = vadd.f32 %v2371, 1e-06
        %v2376 = vrsqrt.pop %v2374
        %v2377 = vrsqrt.pop %v2375
        %v2378 = vmul.f32 %v2372, %v2376
        %v2379 = vmul.f32 %v2373, %v2377
        %v2381 = vlaneseq
        %v2382 = vshrl.u32 %v2381, 7
        %v2383 = vsub.s32 0, %v2382
        %v2384 = vrot.slane %v2352, %v2383
        %v2386 = vmul.f32 %v2378, %v2384
        %v2387 = vmul.f32 %v2379, %v2384
        %v2389 = vlaneseq
        %v2390 = vshrl.u32 %v2389, 7
        %v2391 = vsub.s32 0, %v2390
        %v2392 = vrot.slane %v2353, %v2391
        %v2394 = vadd.f32 %v2386, %v2392
        %v2395 = vadd.f32 %v2387, %v2392
        %v2396 = vpack.c.bf16 %v2395, %v2394
        %v2397 = vld [vmem:[%s825] sm:$0xf]
        %v2398 = vld [vmem:[%s825 + $0x4] sm:$0xf]
        %v2399 = vld [vmem:[%s825 + $0x8] sm:$0xf]
        %v2400 = vld [vmem:[%s825 + $0xc] sm:$0xf]
        %v2401 = vld [vmem:[%s825 + $0x10] sm:$0xf]
        %v2402 = vld [vmem:[%s825 + $0x14] sm:$0xf]
        %v2403 = vld [vmem:[%s825 + $0x18] sm:$0xf]
        %v2404 = vld [vmem:[%s825 + $0x1c] sm:$0xf]
        %v2405 = vld [vmem:[%s825 + $0x20] sm:$0xf]
        %v2406 = vld [vmem:[%s825 + $0x24] sm:$0xf]
        %v2407 = vld [vmem:[%s825 + $0x28] sm:$0xf]
        %v2408 = vld [vmem:[%s825 + $0x2c] sm:$0xf]
        %v2409 = vld [vmem:[%s825 + $0x30] sm:$0xf]
        %v2410 = vld [vmem:[%s825 + $0x34] sm:$0xf]
        %v2411 = vld [vmem:[%s825 + $0x38] sm:$0xf]
        %v2412 = vld [vmem:[%s825 + $0x3c] sm:$0xf]
        %v2413 = vld [vmem:[%s828] sm:$0x1]
        %v2415 = vlaneseq
        %v2416 = vshrl.u32 %v2415, 7
        %v2417 = vsub.s32 0, %v2416
        %v2418 = vrot.slane %v2413, %v2417
        %v2436 = vunpack.c.l.b16 %v2397
        %v2437 = vunpack.c.l.b16 %v2398
        %v2438 = vunpack.c.l.b16 %v2399
        %v2439 = vunpack.c.l.b16 %v2400
        %v2440 = vunpack.c.l.b16 %v2401
        %v2441 = vunpack.c.l.b16 %v2402
        %v2442 = vunpack.c.l.b16 %v2403
        %v2443 = vunpack.c.l.b16 %v2404
        %v2444 = vunpack.c.l.b16 %v2405
        %v2445 = vunpack.c.l.b16 %v2406
        %v2446 = vunpack.c.l.b16 %v2407
        %v2447 = vunpack.c.l.b16 %v2408
        %v2448 = vunpack.c.l.b16 %v2409
        %v2449 = vunpack.c.l.b16 %v2410
        %v2450 = vunpack.c.l.b16 %v2411
        %v2451 = vunpack.c.l.b16 %v2412
        %v2452 = vpack.c.b16 %v2437, %v2436
        %v2453 = vpack.c.b16 %v2439, %v2438
        %v2454 = vpack.c.b16 %v2441, %v2440
        %v2455 = vpack.c.b16 %v2443, %v2442
        %v2456 = vpack.c.b16 %v2445, %v2444
        %v2457 = vpack.c.b16 %v2447, %v2446
        %v2458 = vpack.c.b16 %v2449, %v2448
        %v2459 = vpack.c.b16 %v2451, %v2450
        %2468 = vmatprep.subr.bf16.mxu0 0
        %2469 = vmatpush1.bf16.msra.mxu0 %v2452
        %2470 = vmatprep.subr.bf16.mxu0 0
        %2471 = vmatpush1.bf16.msra.mxu0 %v2453
        %2472 = vmatprep.subr.bf16.mxu0 0
        %2473 = vmatpush1.bf16.msra.mxu0 %v2454
        %2474 = vmatprep.subr.bf16.mxu0 0
        %2475 = vmatpush1.bf16.msra.mxu0 %v2455
        %2476 = vmatprep.subr.bf16.mxu0 0
        %2477 = vmatpush1.bf16.msra.mxu0 %v2456
        %2478 = vmatprep.subr.bf16.mxu0 0
        %2479 = vmatpush1.bf16.msra.mxu0 %v2457
        %2480 = vmatprep.subr.bf16.mxu0 0
        %2481 = vmatpush1.bf16.msra.mxu0 %v2458
        %2482 = vmatprep.subr.bf16.mxu0 0
        %2483 = vmatpush1.bf16.msra.mxu0 %v2459
        %2484 = vmatprep.subr.bf16.mxu0 0
        %2485 = vmatpush1.bf16.msra.mxu0 0
        %2486 = vmatprep.subr.bf16.mxu0 0
        %2487 = vmatpush1.bf16.msra.mxu0 0
        %2488 = vmatprep.subr.bf16.mxu0 0
        %2489 = vmatpush1.bf16.msra.mxu0 0
        %2490 = vmatprep.subr.bf16.mxu0 0
        %2491 = vmatpush1.bf16.msra.mxu0 0
        %2492 = vmatprep.subr.bf16.mxu0 0
        %2493 = vmatpush1.bf16.msra.mxu0 0
        %2494 = vmatprep.subr.bf16.mxu0 0
        %2495 = vmatpush1.bf16.msra.mxu0 0
        %2496 = vmatprep.subr.bf16.mxu0 0
        %2497 = vmatpush1.bf16.msra.mxu0 0
        %2498 = vmatprep.subr.bf16.mxu0 0
        %2499 = vmatpush1.bf16.msra.mxu0 0
        %2500 = vmatprep.mubr.bf16.mxu0 0
        %2501 = vmatmul.mubr.bf16.gmra.mrb[0].mxu0 %v2396
        %v2502 = vpop.f32.mrb[0].mxu0
        %v2503 = vadd.f32 %v2418, %v2502
        %v2504 = vpop.f32.mrb[0].mxu0
        %v2505 = vpop.f32.mrb[0].mxu0
        %v2506 = vadd.f32 %v2418, %v2505
        %v2507 = vpop.f32.mrb[0].mxu0
        %2508 = vdwg.mxu0
        %v2509 = vmul.f32 %v2503, 0.5
        %v2510 = vmul.f32 %v2506, 0.5
        %v2511 = vmul.f32 %v2503, 0.044715
        %v2512 = vmul.f32 %v2506, 0.044715
        %v2513 = vmul.f32 %v2511, %v2503
        %v2514 = vmul.f32 %v2512, %v2506
        %v2515 = vmul.f32 %v2513, %v2503
        %v2516 = vmul.f32 %v2514, %v2506
        %v2517 = vadd.f32 %v2503, %v2515
        %v2518 = vadd.f32 %v2506, %v2516
        %v2519 = vmul.f32 %v2517, 0.7978846
        %v2520 = vmul.f32 %v2518, 0.7978846
        %v2521 = vtanh.pop %v2519
        %v2522 = vtanh.pop %v2520
        %v2523 = vadd.f32 %v2521, 1.0
        %v2524 = vadd.f32 %v2522, 1.0
        %v2525 = vmul.f32 %v2509, %v2523
        %v2526 = vmul.f32 %v2510, %v2524
        %v2527 = vpack.c.bf16 %v2526, %v2525
        %v2528 = vld [vmem:[%s833] sm:$0xf]
        %v2529 = vld [vmem:[%s833 + $0x4] sm:$0xf]
        %v2530 = vld [vmem:[%s833 + $0x8] sm:$0xf]
        %v2531 = vld [vmem:[%s833 + $0xc] sm:$0xf]
        %v2532 = vld [vmem:[%s833 + $0x10] sm:$0xf]
        %v2533 = vld [vmem:[%s833 + $0x14] sm:$0xf]
        %v2534 = vld [vmem:[%s833 + $0x18] sm:$0xf]
        %v2535 = vld [vmem:[%s833 + $0x1c] sm:$0xf]
        %v2536 = vld [vmem:[%s833 + $0x20] sm:$0xf]
        %v2537 = vld [vmem:[%s833 + $0x24] sm:$0xf]
        %v2538 = vld [vmem:[%s833 + $0x28] sm:$0xf]
        %v2539 = vld [vmem:[%s833 + $0x2c] sm:$0xf]
        %v2540 = vld [vmem:[%s833 + $0x30] sm:$0xf]
        %v2541 = vld [vmem:[%s833 + $0x34] sm:$0xf]
        %v2542 = vld [vmem:[%s833 + $0x38] sm:$0xf]
        %v2543 = vld [vmem:[%s833 + $0x3c] sm:$0xf]
        %v2544 = vld [vmem:[%s836] sm:$0x1]
        %v2546 = vlaneseq
        %v2547 = vshrl.u32 %v2546, 7
        %v2548 = vsub.s32 0, %v2547
        %v2549 = vrot.slane %v2544, %v2548
        %v2567 = vunpack.c.l.b16 %v2528
        %v2568 = vunpack.c.l.b16 %v2529
        %v2569 = vunpack.c.l.b16 %v2530
        %v2570 = vunpack.c.l.b16 %v2531
        %v2571 = vunpack.c.l.b16 %v2532
        %v2572 = vunpack.c.l.b16 %v2533
        %v2573 = vunpack.c.l.b16 %v2534
        %v2574 = vunpack.c.l.b16 %v2535
        %v2575 = vunpack.c.l.b16 %v2536
        %v2576 = vunpack.c.l.b16 %v2537
        %v2577 = vunpack.c.l.b16 %v2538
        %v2578 = vunpack.c.l.b16 %v2539
        %v2579 = vunpack.c.l.b16 %v2540
        %v2580 = vunpack.c.l.b16 %v2541
        %v2581 = vunpack.c.l.b16 %v2542
        %v2582 = vunpack.c.l.b16 %v2543
        %v2583 = vpack.c.b16 %v2568, %v2567
        %v2584 = vpack.c.b16 %v2570, %v2569
        %v2585 = vpack.c.b16 %v2572, %v2571
        %v2586 = vpack.c.b16 %v2574, %v2573
        %v2587 = vpack.c.b16 %v2576, %v2575
        %v2588 = vpack.c.b16 %v2578, %v2577
        %v2589 = vpack.c.b16 %v2580, %v2579
        %v2590 = vpack.c.b16 %v2582, %v2581
        %2599 = vmatprep.subr.bf16.mxu0 0
        %2600 = vmatpush1.bf16.msra.mxu0 %v2583
        %2601 = vmatprep.subr.bf16.mxu0 0
        %2602 = vmatpush1.bf16.msra.mxu0 %v2584
        %2603 = vmatprep.subr.bf16.mxu0 0
        %2604 = vmatpush1.bf16.msra.mxu0 %v2585
        %2605 = vmatprep.subr.bf16.mxu0 0
        %2606 = vmatpush1.bf16.msra.mxu0 %v2586
        %2607 = vmatprep.subr.bf16.mxu0 0
        %2608 = vmatpush1.bf16.msra.mxu0 %v2587
        %2609 = vmatprep.subr.bf16.mxu0 0
        %2610 = vmatpush1.bf16.msra.mxu0 %v2588
        %2611 = vmatprep.subr.bf16.mxu0 0
        %2612 = vmatpush1.bf16.msra.mxu0 %v2589
        %2613 = vmatprep.subr.bf16.mxu0 0
        %2614 = vmatpush1.bf16.msra.mxu0 %v2590
        %2615 = vmatprep.subr.bf16.mxu0 0
        %2616 = vmatpush1.bf16.msra.mxu0 0
        %2617 = vmatprep.subr.bf16.mxu0 0
        %2618 = vmatpush1.bf16.msra.mxu0 0
        %2619 = vmatprep.subr.bf16.mxu0 0
        %2620 = vmatpush1.bf16.msra.mxu0 0
        %2621 = vmatprep.subr.bf16.mxu0 0
        %2622 = vmatpush1.bf16.msra.mxu0 0
        %2623 = vmatprep.subr.bf16.mxu0 0
        %2624 = vmatpush1.bf16.msra.mxu0 0
        %2625 = vmatprep.subr.bf16.mxu0 0
        %2626 = vmatpush1.bf16.msra.mxu0 0
        %2627 = vmatprep.subr.bf16.mxu0 0
        %2628 = vmatpush1.bf16.msra.mxu0 0
        %2629 = vmatprep.subr.bf16.mxu0 0
        %2630 = vmatpush1.bf16.msra.mxu0 0
        %2631 = vmatprep.mubr.bf16.mxu0 0
        %2632 = vmatmul.mubr.bf16.gmra.mrb[0].mxu0 %v2527
        %v2633 = vpop.f32.mrb[0].mxu0
        %v2634 = vadd.f32 %v2549, %v2633
        %v2635 = vpop.f32.mrb[0].mxu0
        %v2636 = vpop.f32.mrb[0].mxu0
        %v2637 = vadd.f32 %v2549, %v2636
        %v2638 = vpop.f32.mrb[0].mxu0
        %2639 = vdwg.mxu0
        %v2640 = vadd.f32 %v2350, %v2634
        %v2641 = vadd.f32 %v2351, %v2637
        %2642 = vst [vmem:[#allocation2] sm:$0xff] %v2640
        %2643 = vst [vmem:[#allocation2 + $0x8] sm:$0xff] %v2641
        %p2644 = scmp.eq.s32.totalorder %s36, 1
        // Predicated region
        $region93: #{tpu_custom_call.1} parent=87 // pred_check
          %p2645 = pneg %p2644
        $region94: #{tpu_custom_call.1} parent=87 // pred_check_branch
          %2647 = sbr.rel (%p2645) target = $region96
        $region95: #{tpu_custom_call.1} parent=87 // pred_region
          %2648 = vst [vmem:[%s765] sm:$0xff] %v2640
          %2649 = vst [vmem:[%s765 + $0x8] sm:$0xff] %v2641
        $region96: #{tpu_custom_call.1} parent=87 // pred_fallthru
          _
        %s2650 = sand.u32 %s493, 1
        %s2651 = scalar_lea.sflag [#allocation4], %s2650
        %s2652 = sand.u32 %s493, 1
        %s2653 = smul.addr %s2652, 16
        %s2654 = scalar_lea.vmem [#allocation3], %s2653
        // Predicated region
        $region97: #{tpu_custom_call.1} parent=87 // pred_check
          %p2655 = pneg %p503
        $region98: #{tpu_custom_call.1} parent=87 // pred_check_branch
          %2657 = sbr.rel (%p2655) target = $region100
        $region99: #{tpu_custom_call.1} parent=87 // pred_region
          %s2659 = ssub.s32 256, 256
          %2660 = vsyncadd %s2651, %s2659
          %s2661 = smul.addr %s35, 2
          %s2662 = smul.addr %s2661, 128
          %s2663 = scalar_lea.hbm %s17, %s2662
          %s2664 = sshll.u32 %s2654, 4
          %s2665 = int_to_ptr.vmem [resolvable:$true] %s2664
          %2670 = dma.vmem_to_hbm [thread:$0]  %s2665, 256, %s2663, %s2651, 128, 128, 8
        $region100: #{tpu_custom_call.1} parent=87 // pred_fallthru
          _
      $region88: #{tpu_custom_call.1} parent=5 // pred_fallthru
        _
      %p2671 = scmp.le.s32.totalorder 2, %s26
      // Predicated region
      $region101: #{tpu_custom_call.1} parent=5 // pred_check
        %p2672 = pneg %p2671
      $region102: #{tpu_custom_call.1} parent=5 // pred_check_branch
        %2674 = sbr.rel (%p2672) target = $region104
      $region103: #{tpu_custom_call.1} parent=5 // pred_region
        %s2675 = ssub.s32 %s26, 2
        // Predicated region
        $region105: #{tpu_custom_call.1} parent=103 // pred_check
          %p2676 = pneg %p509
        $region106: #{tpu_custom_call.1} parent=103 // pred_check_branch
          %2678 = sbr.rel (%p2676) target = $region108
        $region107: #{tpu_custom_call.1} parent=103 // pred_region
          %s2679 = sand.u32 %s494, 1
          %s2680 = scalar_lea.sflag [#allocation4], %s2679
          %s2681 = sand.u32 %s494, 1
          %s2682 = smul.addr %s2681, 16
          %s2683 = scalar_lea.vmem [#allocation3], %s2682
          %2684 = dma.done %s2680, 256
        $region108: #{tpu_custom_call.1} parent=103 // pred_fallthru
          _
      $region104: #{tpu_custom_call.1} parent=5 // pred_fallthru
        _
    $region6: #{tpu_custom_call.1} parent=1 // loop_footer
      %s30 = sadd.s32 1, %s26
    $region7: #{tpu_custom_call.1} parent=1 // loop_footer_branch
      %25 = sbr.rel target = $region3
    $region8: #{tpu_custom_call.1} parent=1 // loop_exit
      _
    %2685 = vsyncpa [#allocation4], 1
    %s2686 = scalar_lea.sflag [#allocation4], 1
    %2687 = vsyncpa %s2686, 1

// kernel: tpu_custom_call.1
$region0: #{tpu_custom_call.1}
  #allocation0 [shape = 'u32[]', space=smem, size = 0x4, offset = 0x4, fixed_abs, tag = 'smem constant byte address 0x4 - core index']
  #allocation1 [shape = 'u32[144,128]{1,0:T(1,128)}', space=vmem, size = 0x12000, scoped, tag = 'internal scratch']
  #allocation2 [shape = 'f32[16,128]{1,0:T(8,128)}', space=vmem, size = 0x2000, scoped, tag = 'scratch operand']
  %s0 = inlined_call_operand.vmem [shape: f32[2,16,128], index: 0, kind: input, shape index: {}]
  %s1 = inlined_call_operand.vmem [shape: f32[2,1,128], index: 1, kind: input, shape index: {}]
  %s2 = inlined_call_operand.vmem [shape: f32[2,1,128], index: 2, kind: input, shape index: {}]
  %s3 = inlined_call_operand.vmem [shape: bf16[2,128,128], index: 3, kind: input, shape index: {}]
  %s4 = inlined_call_operand.vmem [shape: f32[2,128,1], index: 4, kind: input, shape index: {}]
  %s5 = inlined_call_operand.vmem [shape: bf16[2,128,128], index: 5, kind: input, shape index: {}]
  %s6 = inlined_call_operand.vmem [shape: f32[2,128,1], index: 6, kind: input, shape index: {}]
  %s7 = inlined_call_operand.vmem [shape: bf16[2,128,128], index: 7, kind: input, shape index: {}]
  %s8 = inlined_call_operand.vmem [shape: f32[2,128,1], index: 8, kind: input, shape index: {}]
  %s9 = inlined_call_operand.vmem [shape: bf16[2,4,8,128], index: 9, kind: input, shape index: {}]
  %s10 = inlined_call_operand.vmem [shape: f32[2,1,128], index: 10, kind: input, shape index: {}]
  %s11 = inlined_call_operand.vmem [shape: f32[2,1,128], index: 11, kind: input, shape index: {}]
  %s12 = inlined_call_operand.vmem [shape: f32[2,1,128], index: 12, kind: input, shape index: {}]
  %s13 = inlined_call_operand.vmem [shape: bf16[2,128,128], index: 13, kind: input, shape index: {}]
  %s14 = inlined_call_operand.vmem [shape: f32[2,1,128], index: 14, kind: input, shape index: {}]
  %s15 = inlined_call_operand.vmem [shape: bf16[2,128,128], index: 15, kind: input, shape index: {}]
  %s16 = inlined_call_operand.vmem [shape: f32[2,1,128], index: 16, kind: input, shape index: {}]
  %s17 = inlined_call_operand.hbm [shape: f32[2,16,128], index: 17, kind: output, shape index: {}]
  %s18 = sld [smem:[#allocation0]]
  $region109: #{tpu_custom_call.1} parent=0
    _
  %s20 = ssub.s32 1, %s18
  %s21 = scalar_select 0, %s20, %s18
  $region1: #{tpu_custom_call.1} parent=0
    #allocation3 [shape = 'u8[16384]{0}', space=vmem, size = 0x4000, scoped, tag = 'output window, operand 0']
    #allocation4 [shape = 's32[2]{0}', space=sflag, size = 0x8, scoped, tag = 'scoped memory for tpu_custom_call.1']
    %22 = vsyncpa [#allocation4], 0
    %s23 = scalar_lea.sflag [#allocation4], 1
    %24 = vsyncpa %s23, 0
    loop: start=0, step=1, limit=6
    $region2: #{tpu_custom_call.1} parent=1 // loop_pre_header
      _
    $region3: #{tpu_custom_call.1} parent=1 // loop_header
      %s26 = sphi 0, %s30
      %p27 = scmp.ge.s32.totalorder %s26, 6
      %s33 = sphi 0, %s45
      %s34 = sphi 0, %s41
      %s35 = sphi 0, %s33
      %s36 = sphi 0, %s34
      %s37 = sphi 0, %s35
      %s38 = sphi 0, %s36
      %s48 = sphi 0, %s50
      %s51 = sphi 0, %s48
      %s52 = sphi 0, %s51
      %s68 = sphi 0, %s52
      %s74 = sphi 0, %s76
      %s77 = sphi 0, %s74
      %s78 = sphi 0, %s77
      %s94 = sphi 0, %s78
      %s100 = sphi 0, %s102
      %s103 = sphi 0, %s100
      %s104 = sphi 0, %s103
      %s120 = sphi 0, %s104
      %s126 = sphi 0, %s128
      %s129 = sphi 0, %s126
      %s130 = sphi 0, %s129
      %s146 = sphi 0, %s130
      %s152 = sphi 0, %s154
      %s155 = sphi 0, %s152
      %s156 = sphi 0, %s155
      %s172 = sphi 0, %s156
      %s178 = sphi 0, %s180
      %s181 = sphi 0, %s178
      %s182 = sphi 0, %s181
      %s198 = sphi 0, %s182
      %s204 = sphi 0, %s206
      %s207 = sphi 0, %s204
      %s208 = sphi 0, %s207
      %s224 = sphi 0, %s208
      %s230 = sphi 0, %s232
      %s233 = sphi 0, %s230
      %s234 = sphi 0, %s233
      %s250 = sphi 0, %s234
      %s256 = sphi 0, %s258
      %s259 = sphi 0, %s256
      %s260 = sphi 0, %s259
      %s276 = sphi 0, %s260
      %s282 = sphi 0, %s284
      %s285 = sphi 0, %s282
      %s286 = sphi 0, %s285
      %s302 = sphi 0, %s286
      %s308 = sphi 0, %s310
      %s311 = sphi 0, %s308
      %s312 = sphi 0, %s311
      %s328 = sphi 0, %s312
      %s334 = sphi 0, %s336
      %s337 = sphi 0, %s334
      %s338 = sphi 0, %s337
      %s354 = sphi 0, %s338
      %s360 = sphi 0, %s362
      %s363 = sphi 0, %s360
      %s364 = sphi 0, %s363
      %s380 = sphi 0, %s364
      %s386 = sphi 0, %s388
      %s389 = sphi 0, %s386
      %s390 = sphi 0, %s389
      %s406 = sphi 0, %s390
      %s412 = sphi 0, %s414
      %s415 = sphi 0, %s412
      %s416 = sphi 0, %s415
      %s432 = sphi 0, %s416
      %s438 = sphi 0, %s440
      %s441 = sphi 0, %s438
      %s442 = sphi 0, %s441
      %s458 = sphi 0, %s442
      %s464 = sphi 0, %s466
      %s467 = sphi 0, %s464
      %s468 = sphi 0, %s467
      %s484 = sphi 0, %s468
      %s490 = sphi 0, %s492
      %s493 = sphi 0, %s490
      %s494 = sphi 0, %s493
      %s510 = sphi 0, %s494
    $region4: #{tpu_custom_call.1} parent=1 // loop_header_branch
      %29 = sbr.rel (%p27) target = $region8
    $region5: #{tpu_custom_call.1} parent=1 // loop_body
      %s31 = ssub.s32 %s26, 1
      %s32 = ssub.s32 %s26, 2
      %s39 = sadd.s32 1, %s34
      %p40 = scmp.ge.s32.totalorder %s39, 2
      %s41 = scalar_select %p40, 0, %s39
      %s42 = sadd.s32 1, %s33
      %s43 = scalar_select %p40, %s42, %s33
      %p44 = scmp.ge.s32.totalorder %s43, 2
      %s45 = scalar_select %p44, 0, %s43
      %s46 = ssub.s32 %s33, %s45
      %p47 = scmp.eq.s32.totalorder %s46, 0
      %s49 = sadd.s32 %s48, 1
      %s50 = scalar_select %p47, %s48, %s49
      %p53 = pneg %p47
      %p54 = scmp.eq.s32.totalorder %s26, 3
      %p55 = por %p53, %p54
      %p56 = scmp.ne.s32.totalorder %s48, %s51
      %p57 = scmp.eq.s32.totalorder %s26, 0
      %p58 = por %p56, %p57
      %p59 = scmp.ne.s32.totalorder %s48, %s51
      %p60 = scmp.eq.s32.totalorder %s31, 3
      %p61 = por %p59, %p60
      %p62 = scmp.ne.s32.totalorder %s51, %s52
      %p63 = scmp.eq.s32.totalorder %s31, 0
      %p64 = por %p62, %p63
      %p65 = scmp.ne.s32.totalorder %s51, %s52
      %p66 = scmp.eq.s32.totalorder %s32, 3
      %p67 = por %p65, %p66
      %p69 = scmp.ne.s32.totalorder %s52, %s68
      %p70 = scmp.eq.s32.totalorder %s32, 0
      %p71 = por %p69, %p70
      %s72 = ssub.s32 %s34, %s41
      %p73 = scmp.eq.s32.totalorder %s72, 0
      %s75 = sadd.s32 %s74, 1
      %s76 = scalar_select %p73, %s74, %s75
      %p79 = pneg %p73
      %p80 = scmp.eq.s32.totalorder %s26, 3
      %p81 = por %p79, %p80
      %p82 = scmp.ne.s32.totalorder %s74, %s77
      %p83 = scmp.eq.s32.totalorder %s26, 0
      %p84 = por %p82, %p83
      %p85 = scmp.ne.s32.totalorder %s74, %s77
      %p86 = scmp.eq.s32.totalorder %s31, 3
      %p87 = por %p85, %p86
      %p88 = scmp.ne.s32.totalorder %s77, %s78
      %p89 = scmp.eq.s32.totalorder %s31, 0
      %p90 = por %p88, %p89
      %p91 = scmp.ne.s32.totalorder %s77, %s78
      %p92 = scmp.eq.s32.totalorder %s32, 3
      %p93 = por %p91, %p92
      %p95 = scmp.ne.s32.totalorder %s78, %s94
      %p96 = scmp.eq.s32.totalorder %s32, 0
      %p97 = por %p95, %p96
      %s98 = ssub.s32 %s34, %s41
      %p99 = scmp.eq.s32.totalorder %s98, 0
      %s101 = sadd.s32 %s100, 1
      %s102 = scalar_select %p99, %s100, %s101
      %p105 = pneg %p99
      %p106 = scmp.eq.s32.totalorder %s26, 3
      %p107 = por %p105, %p106
      %p108 = scmp.ne.s32.totalorder %s100, %s103
      %p109 = scmp.eq.s32.totalorder %s26, 0
      %p110 = por %p108, %p109
      %p111 = scmp.ne.s32.totalorder %s100, %s103
      %p112 = scmp.eq.s32.totalorder %s31, 3
      %p113 = por %p111, %p112
      %p114 = scmp.ne.s32.totalorder %s103, %s104
      %p115 = scmp.eq.s32.totalorder %s31, 0
      %p116 = por %p114, %p115
      %p117 = scmp.ne.s32.totalorder %s103, %s104
      %p118 = scmp.eq.s32.totalorder %s32, 3
      %p119 = por %p117, %p118
      %p121 = scmp.ne.s32.totalorder %s104, %s120
      %p122 = scmp.eq.s32.totalorder %s32, 0
      %p123 = por %p121, %p122
      %s124 = ssub.s32 %s34, %s41
      %p125 = scmp.eq.s32.totalorder %s124, 0
      %s127 = sadd.s32 %s126, 1
      %s128 = scalar_select %p125, %s126, %s127
      %p131 = pneg %p125
      %p132 = scmp.eq.s32.totalorder %s26, 3
      %p133 = por %p131, %p132
      %p134 = scmp.ne.s32.totalorder %s126, %s129
      %p135 = scmp.eq.s32.totalorder %s26, 0
      %p136 = por %p134, %p135
      %p137 = scmp.ne.s32.totalorder %s126, %s129
      %p138 = scmp.eq.s32.totalorder %s31, 3
      %p139 = por %p137, %p138
      %p140 = scmp.ne.s32.totalorder %s129, %s130
      %p141 = scmp.eq.s32.totalorder %s31, 0
      %p142 = por %p140, %p141
      %p143 = scmp.ne.s32.totalorder %s129, %s130
      %p144 = scmp.eq.s32.totalorder %s32, 3
      %p145 = por %p143, %p144
      %p147 = scmp.ne.s32.totalorder %s130, %s146
      %p148 = scmp.eq.s32.totalorder %s32, 0
      %p149 = por %p147, %p148
      %s150 = ssub.s32 %s34, %s41
      %p151 = scmp.eq.s32.totalorder %s150, 0
      %s153 = sadd.s32 %s152, 1
      %s154 = scalar_select %p151, %s152, %s153
      %p157 = pneg %p151
      %p158 = scmp.eq.s32.totalorder %s26, 3
      %p159 = por %p157, %p158
      %p160 = scmp.ne.s32.totalorder %s152, %s155
      %p161 = scmp.eq.s32.totalorder %s26, 0
      %p162 = por %p160, %p161
      %p163 = scmp.ne.s32.totalorder %s152, %s155
      %p164 = scmp.eq.s32.totalorder %s31, 3
      %p165 = por %p163, %p164
      %p166 = scmp.ne.s32.totalorder %s155, %s156
      %p167 = scmp.eq.s32.totalorder %s31, 0
      %p168 = por %p166, %p167
      %p169 = scmp.ne.s32.totalorder %s155, %s156
      %p170 = scmp.eq.s32.totalorder %s32, 3
      %p171 = por %p169, %p170
      %p173 = scmp.ne.s32.totalorder %s156, %s172
      %p174 = scmp.eq.s32.totalorder %s32, 0
      %p175 = por %p173, %p174
      %s176 = ssub.s32 %s34, %s41
      %p177 = scmp.eq.s32.totalorder %s176, 0
      %s179 = sadd.s32 %s178, 1
      %s180 = scalar_select %p177, %s178, %s179
      %p183 = pneg %p177
      %p184 = scmp.eq.s32.totalorder %s26, 3
      %p185 = por %p183, %p184
      %p186 = scmp.ne.s32.totalorder %s178, %s181
      %p187 = scmp.eq.s32.totalorder %s26, 0
      %p188 = por %p186, %p187
      %p189 = scmp.ne.s32.totalorder %s178, %s181
      %p190 = scmp.eq.s32.totalorder %s31, 3
      %p191 = por %p189, %p190
      %p192 = scmp.ne.s32.totalorder %s181, %s182
      %p193 = scmp.eq.s32.totalorder %s31, 0
      %p194 = por %p192, %p193
      %p195 = scmp.ne.s32.totalorder %s181, %s182
      %p196 = scmp.eq.s32.totalorder %s32, 3
      %p197 = por %p195, %p196
      %p199 = scmp.ne.s32.totalorder %s182, %s198
      %p200 = scmp.eq.s32.totalorder %s32, 0
      %p201 = por %p199, %p200
      %s202 = ssub.s32 %s34, %s41
      %p203 = scmp.eq.s32.totalorder %s202, 0
      %s205 = sadd.s32 %s204, 1
      %s206 = scalar_select %p203, %s204, %s205
      %p209 = pneg %p203
      %p210 = scmp.eq.s32.totalorder %s26, 3
      %p211 = por %p209, %p210
      %p212 = scmp.ne.s32.totalorder %s204, %s207
      %p213 = scmp.eq.s32.totalorder %s26, 0
      %p214 = por %p212, %p213
      %p215 = scmp.ne.s32.totalorder %s204, %s207
      %p216 = scmp.eq.s32.totalorder %s31, 3
      %p217 = por %p215, %p216
      %p218 = scmp.ne.s32.totalorder %s207, %s208
      %p219 = scmp.eq.s32.totalorder %s31, 0
      %p220 = por %p218, %p219
      %p221 = scmp.ne.s32.totalorder %s207, %s208
      %p222 = scmp.eq.s32.totalorder %s32, 3
      %p223 = por %p221, %p222
      %p225 = scmp.ne.s32.totalorder %s208, %s224
      %p226 = scmp.eq.s32.totalorder %s32, 0
      %p227 = por %p225, %p226
      %s228 = ssub.s32 %s34, %s41
      %p229 = scmp.eq.s32.totalorder %s228, 0
      %s231 = sadd.s32 %s230, 1
      %s232 = scalar_select %p229, %s230, %s231
      %p235 = pneg %p229
      %p236 = scmp.eq.s32.totalorder %s26, 3
      %p237 = por %p235, %p236
      %p238 = scmp.ne.s32.totalorder %s230, %s233
      %p239 = scmp.eq.s32.totalorder %s26, 0
      %p240 = por %p238, %p239
      %p241 = scmp.ne.s32.totalorder %s230, %s233
      %p242 = scmp.eq.s32.totalorder %s31, 3
      %p243 = por %p241, %p242
      %p244 = scmp.ne.s32.totalorder %s233, %s234
      %p245 = scmp.eq.s32.totalorder %s31, 0
      %p246 = por %p244, %p245
      %p247 = scmp.ne.s32.totalorder %s233, %s234
      %p248 = scmp.eq.s32.totalorder %s32, 3
      %p249 = por %p247, %p248
      %p251 = scmp.ne.s32.totalorder %s234, %s250
      %p252 = scmp.eq.s32.totalorder %s32, 0
      %p253 = por %p251, %p252
      %s254 = ssub.s32 %s34, %s41
      %p255 = scmp.eq.s32.totalorder %s254, 0
      %s257 = sadd.s32 %s256, 1
      %s258 = scalar_select %p255, %s256, %s257
      %p261 = pneg %p255
      %p262 = scmp.eq.s32.totalorder %s26, 3
      %p263 = por %p261, %p262
      %p264 = scmp.ne.s32.totalorder %s256, %s259
      %p265 = scmp.eq.s32.totalorder %s26, 0
      %p266 = por %p264, %p265
      %p267 = scmp.ne.s32.totalorder %s256, %s259
      %p268 = scmp.eq.s32.totalorder %s31, 3
      %p269 = por %p267, %p268
      %p270 = scmp.ne.s32.totalorder %s259, %s260
      %p271 = scmp.eq.s32.totalorder %s31, 0
      %p272 = por %p270, %p271
      %p273 = scmp.ne.s32.totalorder %s259, %s260
      %p274 = scmp.eq.s32.totalorder %s32, 3
      %p275 = por %p273, %p274
      %p277 = scmp.ne.s32.totalorder %s260, %s276
      %p278 = scmp.eq.s32.totalorder %s32, 0
      %p279 = por %p277, %p278
      %s280 = ssub.s32 %s34, %s41
      %p281 = scmp.eq.s32.totalorder %s280, 0
      %s283 = sadd.s32 %s282, 1
      %s284 = scalar_select %p281, %s282, %s283
      %p287 = pneg %p281
      %p288 = scmp.eq.s32.totalorder %s26, 3
      %p289 = por %p287, %p288
      %p290 = scmp.ne.s32.totalorder %s282, %s285
      %p291 = scmp.eq.s32.totalorder %s26, 0
      %p292 = por %p290, %p291
      %p293 = scmp.ne.s32.totalorder %s282, %s285
      %p294 = scmp.eq.s32.totalorder %s31, 3
      %p295 = por %p293, %p294
      %p296 = scmp.ne.s32.totalorder %s285, %s286
      %p297 = scmp.eq.s32.totalorder %s31, 0
      %p298 = por %p296, %p297
      %p299 = scmp.ne.s32.totalorder %s285, %s286
      %p300 = scmp.eq.s32.totalorder %s32, 3
      %p301 = por %p299, %p300
      %p303 = scmp.ne.s32.totalorder %s286, %s302
      %p304 = scmp.eq.s32.totalorder %s32, 0
      %p305 = por %p303, %p304
      %s306 = ssub.s32 %s34, %s41
      %p307 = scmp.eq.s32.totalorder %s306, 0
      %s309 = sadd.s32 %s308, 1
      %s310 = scalar_select %p307, %s308, %s309
      %p313 = pneg %p307
      %p314 = scmp.eq.s32.totalorder %s26, 3
      %p315 = por %p313, %p314
      %p316 = scmp.ne.s32.totalorder %s308, %s311
      %p317 = scmp.eq.s32.totalorder %s26, 0
      %p318 = por %p316, %p317
      %p319 = scmp.ne.s32.totalorder %s308, %s311
      %p320 = scmp.eq.s32.totalorder %s31, 3
      %p321 = por %p319, %p320
      %p322 = scmp.ne.s32.totalorder %s311, %s312
      %p323 = scmp.eq.s32.totalorder %s31, 0
      %p324 = por %p322, %p323
      %p325 = scmp.ne.s32.totalorder %s311, %s312
      %p326 = scmp.eq.s32.totalorder %s32, 3
      %p327 = por %p325, %p326
      %p329 = scmp.ne.s32.totalorder %s312, %s328
      %p330 = scmp.eq.s32.totalorder %s32, 0
      %p331 = por %p329, %p330
      %s332 = ssub.s32 %s34, %s41
      %p333 = scmp.eq.s32.totalorder %s332, 0
      %s335 = sadd.s32 %s334, 1
      %s336 = scalar_select %p333, %s334, %s335
      %p339 = pneg %p333
      %p340 = scmp.eq.s32.totalorder %s26, 3
      %p341 = por %p339, %p340
      %p342 = scmp.ne.s32.totalorder %s334, %s337
      %p343 = scmp.eq.s32.totalorder %s26, 0
      %p344 = por %p342, %p343
      %p345 = scmp.ne.s32.totalorder %s334, %s337
      %p346 = scmp.eq.s32.totalorder %s31, 3
      %p347 = por %p345, %p346
      %p348 = scmp.ne.s32.totalorder %s337, %s338
      %p349 = scmp.eq.s32.totalorder %s31, 0
      %p350 = por %p348, %p349
      %p351 = scmp.ne.s32.totalorder %s337, %s338
      %p352 = scmp.eq.s32.totalorder %s32, 3
      %p353 = por %p351, %p352
      %p355 = scmp.ne.s32.totalorder %s338, %s354
      %p356 = scmp.eq.s32.totalorder %s32, 0
      %p357 = por %p355, %p356
      %s358 = ssub.s32 %s34, %s41
      %p359 = scmp.eq.s32.totalorder %s358, 0
      %s361 = sadd.s32 %s360, 1
      %s362 = scalar_select %p359, %s360, %s361
      %p365 = pneg %p359
      %p366 = scmp.eq.s32.totalorder %s26, 3
      %p367 = por %p365, %p366
      %p368 = scmp.ne.s32.totalorder %s360, %s363
      %p369 = scmp.eq.s32.totalorder %s26, 0
      %p370 = por %p368, %p369
      %p371 = scmp.ne.s32.totalorder %s360, %s363
      %p372 = scmp.eq.s32.totalorder %s31, 3
      %p373 = por %p371, %p372
      %p374 = scmp.ne.s32.totalorder %s363, %s364
      %p375 = scmp.eq.s32.totalorder %s31, 0
      %p376 = por %p374, %p375
      %p377 = scmp.ne.s32.totalorder %s363, %s364
      %p378 = scmp.eq.s32.totalorder %s32, 3
      %p379 = por %p377, %p378
      %p381 = scmp.ne.s32.totalorder %s364, %s380
      %p382 = scmp.eq.s32.totalorder %s32, 0
      %p383 = por %p381, %p382
      %s384 = ssub.s32 %s34, %s41
      %p385 = scmp.eq.s32.totalorder %s384, 0
      %s387 = sadd.s32 %s386, 1
      %s388 = scalar_select %p385, %s386, %s387
      %p391 = pneg %p385
      %p392 = scmp.eq.s32.totalorder %s26, 3
      %p393 = por %p391, %p392
      %p394 = scmp.ne.s32.totalorder %s386, %s389
      %p395 = scmp.eq.s32.totalorder %s26, 0
      %p396 = por %p394, %p395
      %p397 = scmp.ne.s32.totalorder %s386, %s389
      %p398 = scmp.eq.s32.totalorder %s31, 3
      %p399 = por %p397, %p398
      %p400 = scmp.ne.s32.totalorder %s389, %s390
      %p401 = scmp.eq.s32.totalorder %s31, 0
      %p402 = por %p400, %p401
      %p403 = scmp.ne.s32.totalorder %s389, %s390
      %p404 = scmp.eq.s32.totalorder %s32, 3
      %p405 = por %p403, %p404
      %p407 = scmp.ne.s32.totalorder %s390, %s406
      %p408 = scmp.eq.s32.totalorder %s32, 0
      %p409 = por %p407, %p408
      %s410 = ssub.s32 %s34, %s41
      %p411 = scmp.eq.s32.totalorder %s410, 0
      %s413 = sadd.s32 %s412, 1
      %s414 = scalar_select %p411, %s412, %s413
      %p417 = pneg %p411
      %p418 = scmp.eq.s32.totalorder %s26, 3
      %p419 = por %p417, %p418
      %p420 = scmp.ne.s32.totalorder %s412, %s415
      %p421 = scmp.eq.s32.totalorder %s26, 0
      %p422 = por %p420, %p421
      %p423 = scmp.ne.s32.totalorder %s412, %s415
      %p424 = scmp.eq.s32.totalorder %s31, 3
      %p425 = por %p423, %p424
      %p426 = scmp.ne.s32.totalorder %s415, %s416
      %p427 = scmp.eq.s32.totalorder %s31, 0
      %p428 = por %p426, %p427
      %p429 = scmp.ne.s32.totalorder %s415, %s416
      %p430 = scmp.eq.s32.totalorder %s32, 3
      %p431 = por %p429, %p430
      %p433 = scmp.ne.s32.totalorder %s416, %s432
      %p434 = scmp.eq.s32.totalorder %s32, 0
      %p435 = por %p433, %p434
      %s436 = ssub.s32 %s34, %s41
      %p437 = scmp.eq.s32.totalorder %s436, 0
      %s439 = sadd.s32 %s438, 1
      %s440 = scalar_select %p437, %s438, %s439
      %p443 = pneg %p437
      %p444 = scmp.eq.s32.totalorder %s26, 3
      %p445 = por %p443, %p444
      %p446 = scmp.ne.s32.totalorder %s438, %s441
      %p447 = scmp.eq.s32.totalorder %s26, 0
      %p448 = por %p446, %p447
      %p449 = scmp.ne.s32.totalorder %s438, %s441
      %p450 = scmp.eq.s32.totalorder %s31, 3
      %p451 = por %p449, %p450
      %p452 = scmp.ne.s32.totalorder %s441, %s442
      %p453 = scmp.eq.s32.totalorder %s31, 0
      %p454 = por %p452, %p453
      %p455 = scmp.ne.s32.totalorder %s441, %s442
      %p456 = scmp.eq.s32.totalorder %s32, 3
      %p457 = por %p455, %p456
      %p459 = scmp.ne.s32.totalorder %s442, %s458
      %p460 = scmp.eq.s32.totalorder %s32, 0
      %p461 = por %p459, %p460
      %s462 = ssub.s32 %s34, %s41
      %p463 = scmp.eq.s32.totalorder %s462, 0
      %s465 = sadd.s32 %s464, 1
      %s466 = scalar_select %p463, %s464, %s465
      %p469 = pneg %p463
      %p470 = scmp.eq.s32.totalorder %s26, 3
      %p471 = por %p469, %p470
      %p472 = scmp.ne.s32.totalorder %s464, %s467
      %p473 = scmp.eq.s32.totalorder %s26, 0
      %p474 = por %p472, %p473
      %p475 = scmp.ne.s32.totalorder %s464, %s467
      %p476 = scmp.eq.s32.totalorder %s31, 3
      %p477 = por %p475, %p476
      %p478 = scmp.ne.s32.totalorder %s467, %s468
      %p479 = scmp.eq.s32.totalorder %s31, 0
      %p480 = por %p478, %p479
      %p481 = scmp.ne.s32.totalorder %s467, %s468
      %p482 = scmp.eq.s32.totalorder %s32, 3
      %p483 = por %p481, %p482
      %p485 = scmp.ne.s32.totalorder %s468, %s484
      %p486 = scmp.eq.s32.totalorder %s32, 0
      %p487 = por %p485, %p486
      %s488 = ssub.s32 %s33, %s45
      %p489 = scmp.eq.s32.totalorder %s488, 0
      %s491 = sadd.s32 %s490, 1
      %s492 = scalar_select %p489, %s490, %s491
      %p495 = pneg %p489
      %p496 = scmp.eq.s32.totalorder %s26, 3
      %p497 = por %p495, %p496
      %p498 = scmp.ne.s32.totalorder %s490, %s493
      %p499 = scmp.eq.s32.totalorder %s26, 0
      %p500 = por %p498, %p499
      %p501 = scmp.ne.s32.totalorder %s490, %s493
      %p502 = scmp.eq.s32.totalorder %s31, 3
      %p503 = por %p501, %p502
      %p504 = scmp.ne.s32.totalorder %s493, %s494
      %p505 = scmp.eq.s32.totalorder %s31, 0
      %p506 = por %p504, %p505
      %p507 = scmp.ne.s32.totalorder %s493, %s494
      %p508 = scmp.eq.s32.totalorder %s32, 3
      %p509 = por %p507, %p508
      %p511 = scmp.ne.s32.totalorder %s494, %s510
      %p512 = scmp.eq.s32.totalorder %s32, 0
      %p513 = por %p511, %p512
      %p514 = scmp.le.s32.totalorder 1, %s26
      %p515 = scmp.lt.s32.totalorder %s26, 5
      %p516 = pnand %p514, %p515
      %p517 = pneg %p516
      // Predicated region
      $region9: #{tpu_custom_call.1} parent=5 // pred_check
        _
      $region10: #{tpu_custom_call.1} parent=5 // pred_check_branch
        %519 = sbr.rel (%p516) target = $region12
      $region11: #{tpu_custom_call.1} parent=5 // pred_region
        %s520 = ssub.s32 %s26, 1
      $region12: #{tpu_custom_call.1} parent=5 // pred_fallthru
        _
      %p521 = scmp.lt.s32.totalorder %s26, 4
      // Predicated region
      $region13: #{tpu_custom_call.1} parent=5 // pred_check
        %p522 = pneg %p521
      $region14: #{tpu_custom_call.1} parent=5 // pred_check_branch
        %524 = sbr.rel (%p522) target = $region16
      $region15: #{tpu_custom_call.1} parent=5 // pred_region
        // Predicated region
        $region17: #{tpu_custom_call.1} parent=15 // pred_check
          %p525 = pneg %p58
        $region18: #{tpu_custom_call.1} parent=15 // pred_check_branch
          %527 = sbr.rel (%p525) target = $region20
        $region19: #{tpu_custom_call.1} parent=15 // pred_region
          %p528 = scmp.lt.s32.totalorder %s33, 1
          %s529 = scalar_select %p528, %s33, 1
          %s530 = smul.addr %s529, 2
          %s531 = smul.addr %s530, 8
          %s532 = scalar_lea.vmem %s0, %s531
        $region20: #{tpu_custom_call.1} parent=15 // pred_fallthru
          _
        // Predicated region
        $region21: #{tpu_custom_call.1} parent=15 // pred_check
          %p533 = pneg %p84
        $region22: #{tpu_custom_call.1} parent=15 // pred_check_branch
          %535 = sbr.rel (%p533) target = $region24
        $region23: #{tpu_custom_call.1} parent=15 // pred_region
          %p536 = scmp.lt.s32.totalorder %s34, 1
          %s537 = scalar_select %p536, %s34, 1
          %s538 = scalar_lea.vmem %s1, %s537
        $region24: #{tpu_custom_call.1} parent=15 // pred_fallthru
          _
        // Predicated region
        $region25: #{tpu_custom_call.1} parent=15 // pred_check
          %p539 = pneg %p110
        $region26: #{tpu_custom_call.1} parent=15 // pred_check_branch
          %541 = sbr.rel (%p539) target = $region28
        $region27: #{tpu_custom_call.1} parent=15 // pred_region
          %p542 = scmp.lt.s32.totalorder %s34, 1
          %s543 = scalar_select %p542, %s34, 1
          %s544 = scalar_lea.vmem %s2, %s543
        $region28: #{tpu_custom_call.1} parent=15 // pred_fallthru
          _
        // Predicated region
        $region29: #{tpu_custom_call.1} parent=15 // pred_check
          %p545 = pneg %p136
        $region30: #{tpu_custom_call.1} parent=15 // pred_check_branch
          %547 = sbr.rel (%p545) target = $region32
        $region31: #{tpu_custom_call.1} parent=15 // pred_region
          %p548 = scmp.lt.s32.totalorder %s34, 1
          %s549 = scalar_select %p548, %s34, 1
          %s550 = smul.addr %s549, 16
          %s551 = smul.addr %s550, 4
          %s552 = scalar_lea.vmem %s3, %s551
        $region32: #{tpu_custom_call.1} parent=15 // pred_fallthru
          _
        // Predicated region
        $region33: #{tpu_custom_call.1} parent=15 // pred_check
          %p553 = pneg %p162
        $region34: #{tpu_custom_call.1} parent=15 // pred_check_branch
          %555 = sbr.rel (%p553) target = $region36
        $region35: #{tpu_custom_call.1} parent=15 // pred_region
          %p556 = scmp.lt.s32.totalorder %s34, 1
          %s557 = scalar_select %p556, %s34, 1
          %s558 = smul.addr %s557, 16
          %s559 = smul.addr %s558, 8
          %s560 = scalar_lea.vmem %s4, %s559
        $region36: #{tpu_custom_call.1} parent=15 // pred_fallthru
          _
        // Predicated region
        $region37: #{tpu_custom_call.1} parent=15 // pred_check
          %p561 = pneg %p188
        $region38: #{tpu_custom_call.1} parent=15 // pred_check_branch
          %563 = sbr.rel (%p561) target = $region40
        $region39: #{tpu_custom_call.1} parent=15 // pred_region
          %p564 = scmp.lt.s32.totalorder %s34, 1
          %s565 = scalar_select %p564, %s34, 1
          %s566 = smul.addr %s565, 16
          %s567 = smul.addr %s566, 4
          %s568 = scalar_lea.vmem %s5, %s567
        $region40: #{tpu_custom_call.1} parent=15 // pred_fallthru
          _
        // Predicated region
        $region41: #{tpu_custom_call.1} parent=15 // pred_check
          %p569 = pneg %p214
        $region42: #{tpu_custom_call.1} parent=15 // pred_check_branch
          %571 = sbr.rel (%p569) target = $region44
        $region43: #{tpu_custom_call.1} parent=15 // pred_region
          %p572 = scmp.lt.s32.totalorder %s34, 1
          %s573 = scalar_select %p572, %s34, 1
          %s574 = smul.addr %s573, 16
          %s575 = smul.addr %s574, 8
          %s576 = scalar_lea.vmem %s6, %s575
        $region44: #{tpu_custom_call.1} parent=15 // pred_fallthru
          _
        // Predicated region
        $region45: #{tpu_custom_call.1} parent=15 // pred_check
          %p577 = pneg %p240
        $region46: #{tpu_custom_call.1} parent=15 // pred_check_branch
          %579 = sbr.rel (%p577) target = $region48
        $region47: #{tpu_custom_call.1} parent=15 // pred_region
          %p580 = scmp.lt.s32.totalorder %s34, 1
          %s581 = scalar_select %p580, %s34, 1
          %s582 = smul.addr %s581, 16
          %s583 = smul.addr %s582, 4
          %s584 = scalar_lea.vmem %s7, %s583
        $region48: #{tpu_custom_call.1} parent=15 // pred_fallthru
          _
        // Predicated region
        $region49: #{tpu_custom_call.1} parent=15 // pred_check
          %p585 = pneg %p266
        $region50: #{tpu_custom_call.1} parent=15 // pred_check_branch
          %587 = sbr.rel (%p585) target = $region52
        $region51: #{tpu_custom_call.1} parent=15 // pred_region
          %p588 = scmp.lt.s32.totalorder %s34, 1
          %s589 = scalar_select %p588, %s34, 1
          %s590 = smul.addr %s589, 16
          %s591 = smul.addr %s590, 8
          %s592 = scalar_lea.vmem %s8, %s591
        $region52: #{tpu_custom_call.1} parent=15 // pred_fallthru
          _
        // Predicated region
        $region53: #{tpu_custom_call.1} parent=15 // pred_check
          %p593 = pneg %p292
        $region54: #{tpu_custom_call.1} parent=15 // pred_check_branch
          %595 = sbr.rel (%p593) target = $region56
        $region55: #{tpu_custom_call.1} parent=15 // pred_region
          %p596 = scmp.lt.s32.totalorder %s34, 1
          %s597 = scalar_select %p596, %s34, 1
          %s598 = smul.addr %s597, 4
          %s599 = smul.addr %s598, 4
          %s600 = scalar_lea.vmem %s9, %s599
        $region56: #{tpu_custom_call.1} parent=15 // pred_fallthru
          _
        // Predicated region
        $region57: #{tpu_custom_call.1} parent=15 // pred_check
          %p601 = pneg %p318
        $region58: #{tpu_custom_call.1} parent=15 // pred_check_branch
          %603 = sbr.rel (%p601) target = $region60
        $region59: #{tpu_custom_call.1} parent=15 // pred_region
          %p604 = scmp.lt.s32.totalorder %s34, 1
          %s605 = scalar_select %p604, %s34, 1
          %s606 = scalar_lea.vmem %s10, %s605
        $region60: #{tpu_custom_call.1} parent=15 // pred_fallthru
          _
        // Predicated region
        $region61: #{tpu_custom_call.1} parent=15 // pred_check
          %p607 = pneg %p344
        $region62: #{tpu_custom_call.1} parent=15 // pred_check_branch
          %609 = sbr.rel (%p607) target = $region64
        $region63: #{tpu_custom_call.1} parent=15 // pred_region
          %p610 = scmp.lt.s32.totalorder %s34, 1
          %s611 = scalar_select %p610, %s34, 1
          %s612 = scalar_lea.vmem %s11, %s611
        $region64: #{tpu_custom_call.1} parent=15 // pred_fallthru
          _
        // Predicated region
        $region65: #{tpu_custom_call.1} parent=15 // pred_check
          %p613 = pneg %p370
        $region66: #{tpu_custom_call.1} parent=15 // pred_check_branch
          %615 = sbr.rel (%p613) target = $region68
        $region67: #{tpu_custom_call.1} parent=15 // pred_region
          %p616 = scmp.lt.s32.totalorder %s34, 1
          %s617 = scalar_select %p616, %s34, 1
          %s618 = scalar_lea.vmem %s12, %s617
        $region68: #{tpu_custom_call.1} parent=15 // pred_fallthru
          _
        // Predicated region
        $region69: #{tpu_custom_call.1} parent=15 // pred_check
          %p619 = pneg %p396
        $region70: #{tpu_custom_call.1} parent=15 // pred_check_branch
          %621 = sbr.rel (%p619) target = $region72
        $region71: #{tpu_custom_call.1} parent=15 // pred_region
          %p622 = scmp.lt.s32.totalorder %s34, 1
          %s623 = scalar_select %p622, %s34, 1
          %s624 = smul.addr %s623, 16
          %s625 = smul.addr %s624, 4
          %s626 = scalar_lea.vmem %s13, %s625
        $region72: #{tpu_custom_call.1} parent=15 // pred_fallthru
          _
        // Predicated region
        $region73: #{tpu_custom_call.1} parent=15 // pred_check
          %p627 = pneg %p422
        $region74: #{tpu_custom_call.1} parent=15 // pred_check_branch
          %629 = sbr.rel (%p627) target = $region76
        $region75: #{tpu_custom_call.1} parent=15 // pred_region
          %p630 = scmp.lt.s32.totalorder %s34, 1
          %s631 = scalar_select %p630, %s34, 1
          %s632 = scalar_lea.vmem %s14, %s631
        $region76: #{tpu_custom_call.1} parent=15 // pred_fallthru
          _
        // Predicated region
        $region77: #{tpu_custom_call.1} parent=15 // pred_check
          %p633 = pneg %p448
        $region78: #{tpu_custom_call.1} parent=15 // pred_check_branch
          %635 = sbr.rel (%p633) target = $region80
        $region79: #{tpu_custom_call.1} parent=15 // pred_region
          %p636 = scmp.lt.s32.totalorder %s34, 1
          %s637 = scalar_select %p636, %s34, 1
          %s638 = smul.addr %s637, 16
          %s639 = smul.addr %s638, 4
          %s640 = scalar_lea.vmem %s15, %s639
        $region80: #{tpu_custom_call.1} parent=15 // pred_fallthru
          _
        // Predicated region
        $region81: #{tpu_custom_call.1} parent=15 // pred_check
          %p641 = pneg %p474
        $region82: #{tpu_custom_call.1} parent=15 // pred_check_branch
          %643 = sbr.rel (%p641) target = $region84
        $region83: #{tpu_custom_call.1} parent=15 // pred_region
          %p644 = scmp.lt.s32.totalorder %s34, 1
          %s645 = scalar_select %p644, %s34, 1
          %s646 = scalar_lea.vmem %s16, %s645
        $region84: #{tpu_custom_call.1} parent=15 // pred_fallthru
          _
      $region16: #{tpu_custom_call.1} parent=5 // pred_fallthru
        _
      %p647 = scmp.le.s32.totalorder 1, %s26
      %p648 = scmp.lt.s32.totalorder %s26, 5
      %p649 = pnand %p647, %p648
      %p650 = pneg %p649
      // Predicated region
      $region85: #{tpu_custom_call.1} parent=5 // pred_check
        _
      $region86: #{tpu_custom_call.1} parent=5 // pred_check_branch
        %652 = sbr.rel (%p649) target = $region88
      $region87: #{tpu_custom_call.1} parent=5 // pred_region
        %s653 = ssub.s32 %s26, 1
        %p654 = scmp.lt.s32.totalorder %s35, 1
        %s655 = scalar_select %p654, %s35, 1
        %s656 = smul.addr %s655, 2
        %s657 = smul.addr %s656, 8
        %s658 = scalar_lea.vmem %s0, %s657
        %p659 = pneg %p64
        %p660 = pneg %p61
        %p661 = scmp.lt.s32.totalorder %s36, 1
        %s662 = scalar_select %p661, %s36, 1
        %s663 = scalar_lea.vmem %s1, %s662
        %p664 = pneg %p90
        %p665 = pneg %p87
        %p666 = scmp.lt.s32.totalorder %s36, 1
        %s667 = scalar_select %p666, %s36, 1
        %s668 = scalar_lea.vmem %s2, %s667
        %p669 = pneg %p116
        %p670 = pneg %p113
        %p671 = scmp.lt.s32.totalorder %s36, 1
        %s672 = scalar_select %p671, %s36, 1
        %s673 = smul.addr %s672, 16
        %s674 = smul.addr %s673, 4
        %s675 = scalar_lea.vmem %s3, %s674
        %p676 = pneg %p142
        %p677 = pneg %p139
        %p678 = scmp.lt.s32.totalorder %s36, 1
        %s679 = scalar_select %p678, %s36, 1
        %s680 = smul.addr %s679, 16
        %s681 = smul.addr %s680, 8
        %s682 = scalar_lea.vmem %s4, %s681
        %p683 = pneg %p168
        %p684 = pneg %p165
        %p685 = scmp.lt.s32.totalorder %s36, 1
        %s686 = scalar_select %p685, %s36, 1
        %s687 = smul.addr %s686, 16
        %s688 = smul.addr %s687, 4
        %s689 = scalar_lea.vmem %s5, %s688
        %p690 = pneg %p194
        %p691 = pneg %p191
        %p692 = scmp.lt.s32.totalorder %s36, 1
        %s693 = scalar_select %p692, %s36, 1
        %s694 = smul.addr %s693, 16
        %s695 = smul.addr %s694, 8
        %s696 = scalar_lea.vmem %s6, %s695
        %p697 = pneg %p220
        %p698 = pneg %p217
        %p699 = scmp.lt.s32.totalorder %s36, 1
        %s700 = scalar_select %p699, %s36, 1
        %s701 = smul.addr %s700, 16
        %s702 = smul.addr %s701, 4
        %s703 = scalar_lea.vmem %s7, %s702
        %p704 = pneg %p246
        %p705 = pneg %p243
        %p706 = scmp.lt.s32.totalorder %s36, 1
        %s707 = scalar_select %p706, %s36, 1
        %s708 = smul.addr %s707, 16
        %s709 = smul.addr %s708, 8
        %s710 = scalar_lea.vmem %s8, %s709
        %p711 = pneg %p272
        %p712 = pneg %p269
        %p713 = scmp.lt.s32.totalorder %s36, 1
        %s714 = scalar_select %p713, %s36, 1
        %s715 = smul.addr %s714, 4
        %s716 = smul.addr %s715, 4
        %s717 = scalar_lea.vmem %s9, %s716
        %p718 = pneg %p298
        %p719 = pneg %p295
        %p720 = scmp.lt.s32.totalorder %s36, 1
        %s721 = scalar_select %p720, %s36, 1
        %s722 = scalar_lea.vmem %s10, %s721
        %p723 = pneg %p324
        %p724 = pneg %p321
        %p725 = scmp.lt.s32.totalorder %s36, 1
        %s726 = scalar_select %p725, %s36, 1
        %s727 = scalar_lea.vmem %s11, %s726
        %p728 = pneg %p350
        %p729 = pneg %p347
        %p730 = scmp.lt.s32.totalorder %s36, 1
        %s731 = scalar_select %p730, %s36, 1
        %s732 = scalar_lea.vmem %s12, %s731
        %p733 = pneg %p376
        %p734 = pneg %p373
        %p735 = scmp.lt.s32.totalorder %s36, 1
        %s736 = scalar_select %p735, %s36, 1
        %s737 = smul.addr %s736, 16
        %s738 = smul.addr %s737, 4
        %s739 = scalar_lea.vmem %s13, %s738
        %p740 = pneg %p402
        %p741 = pneg %p399
        %p742 = scmp.lt.s32.totalorder %s36, 1
        %s743 = scalar_select %p742, %s36, 1
        %s744 = scalar_lea.vmem %s14, %s743
        %p745 = pneg %p428
        %p746 = pneg %p425
        %p747 = scmp.lt.s32.totalorder %s36, 1
        %s748 = scalar_select %p747, %s36, 1
        %s749 = smul.addr %s748, 16
        %s750 = smul.addr %s749, 4
        %s751 = scalar_lea.vmem %s15, %s750
        %p752 = pneg %p454
        %p753 = pneg %p451
        %p754 = scmp.lt.s32.totalorder %s36, 1
        %s755 = scalar_select %p754, %s36, 1
        %s756 = scalar_lea.vmem %s16, %s755
        %p757 = pneg %p480
        %p758 = pneg %p477
        %p759 = pneg %p506
        %p760 = pneg %p503
        %s761 = sand.u32 %s493, 1
        %s762 = scalar_lea.sflag [#allocation4], %s761
        %s763 = sand.u32 %s493, 1
        %s764 = smul.addr %s763, 16
        %s765 = scalar_lea.vmem [#allocation3], %s764
        %p766 = scmp.lt.s32.totalorder %s35, 1
        %s767 = scalar_select %p766, %s35, 1
        %s768 = smul.addr %s767, 2
        %s769 = smul.addr %s768, 8
        %s770 = scalar_lea.vmem %s0, %s769
        %p771 = scmp.lt.s32.totalorder %s36, 1
        %s772 = scalar_select %p771, %s36, 1
        %s773 = scalar_lea.vmem %s1, %s772
        %p774 = scmp.lt.s32.totalorder %s36, 1
        %s775 = scalar_select %p774, %s36, 1
        %s776 = scalar_lea.vmem %s2, %s775
        %p777 = scmp.lt.s32.totalorder %s36, 1
        %s778 = scalar_select %p777, %s36, 1
        %s779 = smul.addr %s778, 16
        %s780 = smul.addr %s779, 4
        %s781 = scalar_lea.vmem %s3, %s780
        %p782 = scmp.lt.s32.totalorder %s36, 1
        %s783 = scalar_select %p782, %s36, 1
        %s784 = smul.addr %s783, 16
        %s785 = smul.addr %s784, 8
        %s786 = scalar_lea.vmem %s4, %s785
        %p787 = scmp.lt.s32.totalorder %s36, 1
        %s788 = scalar_select %p787, %s36, 1
        %s789 = smul.addr %s788, 16
        %s790 = smul.addr %s789, 4
        %s791 = scalar_lea.vmem %s5, %s790
        %p792 = scmp.lt.s32.totalorder %s36, 1
        %s793 = scalar_select %p792, %s36, 1
        %s794 = smul.addr %s793, 16
        %s795 = smul.addr %s794, 8
        %s796 = scalar_lea.vmem %s6, %s795
        %p797 = scmp.lt.s32.totalorder %s36, 1
        %s798 = scalar_select %p797, %s36, 1
        %s799 = smul.addr %s798, 16
        %s800 = smul.addr %s799, 4
        %s801 = scalar_lea.vmem %s7, %s800
        %p802 = scmp.lt.s32.totalorder %s36, 1
        %s803 = scalar_select %p802, %s36, 1
        %s804 = smul.addr %s803, 16
        %s805 = smul.addr %s804, 8
        %s806 = scalar_lea.vmem %s8, %s805
        %p807 = scmp.lt.s32.totalorder %s36, 1
        %s808 = scalar_select %p807, %s36, 1
        %s809 = smul.addr %s808, 4
        %s810 = smul.addr %s809, 4
        %s811 = scalar_lea.vmem %s9, %s810
        %p812 = scmp.lt.s32.totalorder %s36, 1
        %s813 = scalar_select %p812, %s36, 1
        %s814 = scalar_lea.vmem %s10, %s813
        %p815 = scmp.lt.s32.totalorder %s36, 1
        %s816 = scalar_select %p815, %s36, 1
        %s817 = scalar_lea.vmem %s11, %s816
        %p818 = scmp.lt.s32.totalorder %s36, 1
        %s819 = scalar_select %p818, %s36, 1
        %s820 = scalar_lea.vmem %s12, %s819
        %p821 = scmp.lt.s32.totalorder %s36, 1
        %s822 = scalar_select %p821, %s36, 1
        %s823 = smul.addr %s822, 16
        %s824 = smul.addr %s823, 4
        %s825 = scalar_lea.vmem %s13, %s824
        %p826 = scmp.lt.s32.totalorder %s36, 1
        %s827 = scalar_select %p826, %s36, 1
        %s828 = scalar_lea.vmem %s14, %s827
        %p829 = scmp.lt.s32.totalorder %s36, 1
        %s830 = scalar_select %p829, %s36, 1
        %s831 = smul.addr %s830, 16
        %s832 = smul.addr %s831, 4
        %s833 = scalar_lea.vmem %s15, %s832
        %p834 = scmp.lt.s32.totalorder %s36, 1
        %s835 = scalar_select %p834, %s36, 1
        %s836 = scalar_lea.vmem %s16, %s835
        %p838 = scmp.eq.s32.totalorder %s36, 0
        // Predicated region
        $region89: #{tpu_custom_call.1} parent=87 // pred_check
          %p839 = pneg %p838
        $region90: #{tpu_custom_call.1} parent=87 // pred_check_branch
          %841 = sbr.rel (%p839) target = $region92
        $region91: #{tpu_custom_call.1} parent=87 // pred_region
          %v842 = vld [vmem:[%s770] sm:$0xff]
          %v843 = vld [vmem:[%s770 + $0x8] sm:$0xff]
          %844 = vst [vmem:[#allocation2] sm:$0xff] %v842
          %845 = vst [vmem:[#allocation2 + $0x8] sm:$0xff] %v843
        $region92: #{tpu_custom_call.1} parent=87 // pred_fallthru
          _
        %v846 = vld [vmem:[#allocation2] sm:$0xff]
        %v847 = vld [vmem:[#allocation2 + $0x8] sm:$0xff]
        %v848 = vld [vmem:[%s773] sm:$0x1]
        %v849 = vld [vmem:[%s776] sm:$0x1]
        %850 = vadd.xlane.f32.xlu0 %v846
        %v851 = vpop.xlane.xlu0 %850
        %852 = vadd.xlane.f32.xlu0 %v847
        %v853 = vpop.xlane.xlu0 %852
        %v854 = vmul.f32 %v851, 0.03125
        %v855 = vmul.f32 %v853, 0.03125
        %v856 = vmul.f32 %v846, %v846
        %v857 = vmul.f32 %v847, %v847
        %858 = vadd.xlane.f32.xlu0 %v856
        %v859 = vpop.xlane.xlu0 %858
        %860 = vadd.xlane.f32.xlu0 %v857
        %v861 = vpop.xlane.xlu0 %860
        %v862 = vmul.f32 %v859, 0.03125
        %v863 = vmul.f32 %v861, 0.03125
        %v864 = vmul.f32 %v854, %v854
        %v865 = vmul.f32 %v855, %v855
        %v866 = vsub.f32 %v862, %v864
        %v867 = vsub.f32 %v863, %v865
        %v868 = vsub.f32 %v846, %v854
        %v869 = vsub.f32 %v847, %v855
        %v870 = vadd.f32 %v866, 1e-06
        %v871 = vadd.f32 %v867, 1e-06
        %v872 = vrsqrt.pop %v870
        %v873 = vrsqrt.pop %v871
        %v874 = vmul.f32 %v868, %v872
        %v875 = vmul.f32 %v869, %v873
        %v877 = vlaneseq
        %v878 = vshrl.u32 %v877, 7
        %v879 = vsub.s32 0, %v878
        %v880 = vrot.slane %v848, %v879
        %v882 = vmul.f32 %v874, %v880
        %v883 = vmul.f32 %v875, %v880
        %v885 = vlaneseq
        %v886 = vshrl.u32 %v885, 7
        %v887 = vsub.s32 0, %v886
        %v888 = vrot.slane %v849, %v887
        %v890 = vadd.f32 %v882, %v888
        %v891 = vadd.f32 %v883, %v888
        %v892 = vpack.c.bf16 %v891, %v890
        %v893 = vld [vmem:[%s781] sm:$0xf]
        %v894 = vld [vmem:[%s781 + $0x4] sm:$0xf]
        %v895 = vld [vmem:[%s781 + $0x8] sm:$0xf]
        %v896 = vld [vmem:[%s781 + $0xc] sm:$0xf]
        %v897 = vld [vmem:[%s781 + $0x10] sm:$0xf]
        %v898 = vld [vmem:[%s781 + $0x14] sm:$0xf]
        %v899 = vld [vmem:[%s781 + $0x18] sm:$0xf]
        %v900 = vld [vmem:[%s781 + $0x1c] sm:$0xf]
        %v901 = vld [vmem:[%s781 + $0x20] sm:$0xf]
        %v902 = vld [vmem:[%s781 + $0x24] sm:$0xf]
        %v903 = vld [vmem:[%s781 + $0x28] sm:$0xf]
        %v904 = vld [vmem:[%s781 + $0x2c] sm:$0xf]
        %v905 = vld [vmem:[%s781 + $0x30] sm:$0xf]
        %v906 = vld [vmem:[%s781 + $0x34] sm:$0xf]
        %v907 = vld [vmem:[%s781 + $0x38] sm:$0xf]
        %v908 = vld [vmem:[%s781 + $0x3c] sm:$0xf]
        %v909 = vld [vmem:[%s786] sm:$0xff]
        %v910 = vld [vmem:[%s786 + $0x8] sm:$0xff]
        %v911 = vld [vmem:[%s786 + $0x10] sm:$0xff]
        %v912 = vld [vmem:[%s786 + $0x18] sm:$0xff]
        %v913 = vld [vmem:[%s786 + $0x20] sm:$0xff]
        %v914 = vld [vmem:[%s786 + $0x28] sm:$0xff]
        %v915 = vld [vmem:[%s786 + $0x30] sm:$0xff]
        %v916 = vld [vmem:[%s786 + $0x38] sm:$0xff]
        %v917 = vld [vmem:[%s786 + $0x40] sm:$0xff]
        %v918 = vld [vmem:[%s786 + $0x48] sm:$0xff]
        %v919 = vld [vmem:[%s786 + $0x50] sm:$0xff]
        %v920 = vld [vmem:[%s786 + $0x58] sm:$0xff]
        %v921 = vld [vmem:[%s786 + $0x60] sm:$0xff]
        %v922 = vld [vmem:[%s786 + $0x68] sm:$0xff]
        %v923 = vld [vmem:[%s786 + $0x70] sm:$0xff]
        %v924 = vld [vmem:[%s786 + $0x78] sm:$0xff]
        %926 = vset.pattern.permute.xlu0 0
        %927 = vperm.xlu0 %926, %v909
        %v928 = vpop.permute.xlu0 %927
        %931 = vset.pattern.permute.xlu0 0
        %932 = vperm.xlu0 %931, %v910
        %v933 = vpop.permute.xlu0 %932
        %936 = vset.pattern.permute.xlu0 0
        %937 = vperm.xlu0 %936, %v911
        %v938 = vpop.permute.xlu0 %937
        %941 = vset.pattern.permute.xlu0 0
        %942 = vperm.xlu0 %941, %v912
        %v943 = vpop.permute.xlu0 %942
        %946 = vset.pattern.permute.xlu0 0
        %947 = vperm.xlu0 %946, %v913
        %v948 = vpop.permute.xlu0 %947
        %950 = vset.pattern.permute.xlu0 0
        %951 = vperm.xlu0 %950, %v914
        %v952 = vpop.permute.xlu0 %951
        %954 = vset.pattern.permute.xlu0 0
        %955 = vperm.xlu0 %954, %v915
        %v956 = vpop.permute.xlu0 %955
        %958 = vset.pattern.permute.xlu0 0
        %959 = vperm.xlu0 %958, %v916
        %v960 = vpop.permute.xlu0 %959
        %962 = vset.pattern.permute.xlu0 0
        %963 = vperm.xlu0 %962, %v917
        %v964 = vpop.permute.xlu0 %963
        %966 = vset.pattern.permute.xlu0 0
        %967 = vperm.xlu0 %966, %v918
        %v968 = vpop.permute.xlu0 %967
        %970 = vset.pattern.permute.xlu0 0
        %971 = vperm.xlu0 %970, %v919
        %v972 = vpop.permute.xlu0 %971
        %974 = vset.pattern.permute.xlu0 0
        %975 = vperm.xlu0 %974, %v920
        %v976 = vpop.permute.xlu0 %975
        %978 = vset.pattern.permute.xlu0 0
        %979 = vperm.xlu0 %978, %v921
        %v980 = vpop.permute.xlu0 %979
        %982 = vset.pattern.permute.xlu0 0
        %983 = vperm.xlu0 %982, %v922
        %v984 = vpop.permute.xlu0 %983
        %986 = vset.pattern.permute.xlu0 0
        %987 = vperm.xlu0 %986, %v923
        %v988 = vpop.permute.xlu0 %987
        %990 = vset.pattern.permute.xlu0 0
        %991 = vperm.xlu0 %990, %v924
        %v992 = vpop.permute.xlu0 %991
        %v1009 = vunpack.c.l.b16 %v893
        %v1010 = vunpack.c.l.b16 %v894
        %v1011 = vunpack.c.l.b16 %v895
        %v1012 = vunpack.c.l.b16 %v896
        %v1013 = vunpack.c.l.b16 %v897
        %v1014 = vunpack.c.l.b16 %v898
        %v1015 = vunpack.c.l.b16 %v899
        %v1016 = vunpack.c.l.b16 %v900
        %v1017 = vunpack.c.l.b16 %v901
        %v1018 = vunpack.c.l.b16 %v902
        %v1019 = vunpack.c.l.b16 %v903
        %v1020 = vunpack.c.l.b16 %v904
        %v1021 = vunpack.c.l.b16 %v905
        %v1022 = vunpack.c.l.b16 %v906
        %v1023 = vunpack.c.l.b16 %v907
        %v1024 = vunpack.c.l.b16 %v908
        %v1025 = vpack.c.b16 %v1010, %v1009
        %v1026 = vpack.c.b16 %v1012, %v1011
        %v1027 = vpack.c.b16 %v1014, %v1013
        %v1028 = vpack.c.b16 %v1016, %v1015
        %v1029 = vpack.c.b16 %v1018, %v1017
        %v1030 = vpack.c.b16 %v1020, %v1019
        %v1031 = vpack.c.b16 %v1022, %v1021
        %v1032 = vpack.c.b16 %v1024, %v1023
        %1041 = vmatprep.subr.bf16.mxu0 0
        %1042 = vmatpush1.bf16.xpose.msra.mxu0 %v892
        %1043 = vmatprep.subr.bf16.mxu0 0
        %1044 = vmatpush1.bf16.xpose.msra.mxu0 0
        %1045 = vmatprep.subr.bf16.mxu0 0
        %1046 = vmatpush1.bf16.xpose.msra.mxu0 0
        %1047 = vmatprep.subr.bf16.mxu0 0
        %1048 = vmatpush1.bf16.xpose.msra.mxu0 0
        %1049 = vmatprep.subr.bf16.mxu0 0
        %1050 = vmatpush1.bf16.xpose.msra.mxu0 0
        %1051 = vmatprep.subr.bf16.mxu0 0
        %1052 = vmatpush1.bf16.xpose.msra.mxu0 0
        %1053 = vmatprep.subr.bf16.mxu0 0
        %1054 = vmatpush1.bf16.xpose.msra.mxu0 0
        %1055 = vmatprep.subr.bf16.mxu0 0
        %1056 = vmatpush1.bf16.xpose.msra.mxu0 0
        %1057 = vmatprep.subr.bf16.mxu0 0
        %1058 = vmatpush1.bf16.xpose.msra.mxu0 0
        %1059 = vmatprep.subr.bf16.mxu0 0
        %1060 = vmatpush1.bf16.xpose.msra.mxu0 0
        %1061 = vmatprep.subr.bf16.mxu0 0
        %1062 = vmatpush1.bf16.xpose.msra.mxu0 0
        %1063 = vmatprep.subr.bf16.mxu0 0
        %1064 = vmatpush1.bf16.xpose.msra.mxu0 0
        %1065 = vmatprep.subr.bf16.mxu0 0
        %1066 = vmatpush1.bf16.xpose.msra.mxu0 0
        %1067 = vmatprep.subr.bf16.mxu0 0
        %1068 = vmatpush1.bf16.xpose.msra.mxu0 0
        %1069 = vmatprep.subr.bf16.mxu0 0
        %1070 = vmatpush1.bf16.xpose.msra.mxu0 0
        %1071 = vmatprep.subr.bf16.mxu0 0
        %1072 = vmatpush1.bf16.xpose.msra.mxu0 0
        %1073 = vmatprep.mubr.bf16.mxu0 0
        %1074 = vmatmul.mubr.bf16.gmra.mrb[0].mxu0 %v1025
        %v1075 = vpop.f32.mrb[0].mxu0
        %v1076 = vadd.f32 %v928, %v1075
        %v1077 = vpop.f32.mrb[0].mxu0
        %v1078 = vpop.f32.mrb[0].mxu0
        %v1079 = vadd.f32 %v933, %v1078
        %v1080 = vpop.f32.mrb[0].mxu0
        %1081 = vmatprep.mubr.bf16.mxu0 0
        %1082 = vmatmul.mubr.bf16.gmra.mrb[0].mxu0 %v1026
        %v1083 = vpop.f32.mrb[0].mxu0
        %v1084 = vadd.f32 %v938, %v1083
        %v1085 = vpop.f32.mrb[0].mxu0
        %v1086 = vpop.f32.mrb[0].mxu0
        %v1087 = vadd.f32 %v943, %v1086
        %v1088 = vpop.f32.mrb[0].mxu0
        %1089 = vmatprep.mubr.bf16.mxu0 0
        %1090 = vmatmul.mubr.bf16.gmra.mrb[0].mxu0 %v1027
        %v1091 = vpop.f32.mrb[0].mxu0
        %v1092 = vpop.f32.mrb[0].mxu0
        %v1093 = vpop.f32.mrb[0].mxu0
        %v1094 = vpop.f32.mrb[0].mxu0
        %1095 = vmatprep.mubr.bf16.mxu0 0
        %1096 = vmatmul.mubr.bf16.gmra.mrb[0].mxu0 %v1028
        %v1097 = vpop.f32.mrb[0].mxu0
        %v1098 = vpop.f32.mrb[0].mxu0
        %v1099 = vpop.f32.mrb[0].mxu0
        %v1100 = vpop.f32.mrb[0].mxu0
        %1101 = vmatprep.mubr.bf16.mxu0 0
        %1102 = vmatmul.mubr.bf16.gmra.mrb[0].mxu0 %v1029
        %v1103 = vpop.f32.mrb[0].mxu0
        %v1104 = vpop.f32.mrb[0].mxu0
        %v1105 = vpop.f32.mrb[0].mxu0
        %v1106 = vpop.f32.mrb[0].mxu0
        %1107 = vmatprep.mubr.bf16.mxu0 0
        %1108 = vmatmul.mubr.bf16.gmra.mrb[0].mxu0 %v1030
        %v1109 = vpop.f32.mrb[0].mxu0
        %v1110 = vpop.f32.mrb[0].mxu0
        %v1111 = vpop.f32.mrb[0].mxu0
        %v1112 = vpop.f32.mrb[0].mxu0
        %1113 = vmatprep.mubr.bf16.mxu0 0
        %1114 = vmatmul.mubr.bf16.gmra.mrb[0].mxu0 %v1031
        %v1115 = vpop.f32.mrb[0].mxu0
        %v1116 = vpop.f32.mrb[0].mxu0
        %v1117 = vpop.f32.mrb[0].mxu0
        %v1118 = vpop.f32.mrb[0].mxu0
        %1119 = vmatprep.mubr.bf16.mxu0 0
        %1120 = vmatmul.mubr.bf16.gmra.mrb[0].mxu0 %v1032
        %v1121 = vpop.f32.mrb[0].mxu0
        %v1122 = vpop.f32.mrb[0].mxu0
        %v1123 = vpop.f32.mrb[0].mxu0
        %v1124 = vpop.f32.mrb[0].mxu0
        %1125 = vdwg.mxu0
        %v1126 = vld [vmem:[%s791] sm:$0xf]
        %v1127 = vld [vmem:[%s791 + $0x4] sm:$0xf]
        %v1128 = vld [vmem:[%s791 + $0x8] sm:$0xf]
        %v1129 = vld [vmem:[%s791 + $0xc] sm:$0xf]
        %v1130 = vld [vmem:[%s791 + $0x10] sm:$0xf]
        %v1131 = vld [vmem:[%s791 + $0x14] sm:$0xf]
        %v1132 = vld [vmem:[%s791 + $0x18] sm:$0xf]
        %v1133 = vld [vmem:[%s791 + $0x1c] sm:$0xf]
        %v1134 = vld [vmem:[%s791 + $0x20] sm:$0xf]
        %v1135 = vld [vmem:[%s791 + $0x24] sm:$0xf]
        %v1136 = vld [vmem:[%s791 + $0x28] sm:$0xf]
        %v1137 = vld [vmem:[%s791 + $0x2c] sm:$0xf]
        %v1138 = vld [vmem:[%s791 + $0x30] sm:$0xf]
        %v1139 = vld [vmem:[%s791 + $0x34] sm:$0xf]
        %v1140 = vld [vmem:[%s791 + $0x38] sm:$0xf]
        %v1141 = vld [vmem:[%s791 + $0x3c] sm:$0xf]
        %v1142 = vld [vmem:[%s796] sm:$0xff]
        %v1143 = vld [vmem:[%s796 + $0x8] sm:$0xff]
        %v1144 = vld [vmem:[%s796 + $0x10] sm:$0xff]
        %v1145 = vld [vmem:[%s796 + $0x18] sm:$0xff]
        %v1146 = vld [vmem:[%s796 + $0x20] sm:$0xff]
        %v1147 = vld [vmem:[%s796 + $0x28] sm:$0xff]
        %v1148 = vld [vmem:[%s796 + $0x30] sm:$0xff]
        %v1149 = vld [vmem:[%s796 + $0x38] sm:$0xff]
        %v1150 = vld [vmem:[%s796 + $0x40] sm:$0xff]
        %v1151 = vld [vmem:[%s796 + $0x48] sm:$0xff]
        %v1152 = vld [vmem:[%s796 + $0x50] sm:$0xff]
        %v1153 = vld [vmem:[%s796 + $0x58] sm:$0xff]
        %v1154 = vld [vmem:[%s796 + $0x60] sm:$0xff]
        %v1155 = vld [vmem:[%s796 + $0x68] sm:$0xff]
        %v1156 = vld [vmem:[%s796 + $0x70] sm:$0xff]
        %v1157 = vld [vmem:[%s796 + $0x78] sm:$0xff]
        %1159 = vset.pattern.permute.xlu0 0
        %1160 = vperm.xlu0 %1159, %v1142
        %v1161 = vpop.permute.xlu0 %1160
        %1164 = vset.pattern.permute.xlu0 0
        %1165 = vperm.xlu0 %1164, %v1143
        %v1166 = vpop.permute.xlu0 %1165
        %1169 = vset.pattern.permute.xlu0 0
        %1170 = vperm.xlu0 %1169, %v1144
        %v1171 = vpop.permute.xlu0 %1170
        %1174 = vset.pattern.permute.xlu0 0
        %1175 = vperm.xlu0 %1174, %v1145
        %v1176 = vpop.permute.xlu0 %1175
        %1179 = vset.pattern.permute.xlu0 0
        %1180 = vperm.xlu0 %1179, %v1146
        %v1181 = vpop.permute.xlu0 %1180
        %1183 = vset.pattern.permute.xlu0 0
        %1184 = vperm.xlu0 %1183, %v1147
        %v1185 = vpop.permute.xlu0 %1184
        %1187 = vset.pattern.permute.xlu0 0
        %1188 = vperm.xlu0 %1187, %v1148
        %v1189 = vpop.permute.xlu0 %1188
        %1191 = vset.pattern.permute.xlu0 0
        %1192 = vperm.xlu0 %1191, %v1149
        %v1193 = vpop.permute.xlu0 %1192
        %1195 = vset.pattern.permute.xlu0 0
        %1196 = vperm.xlu0 %1195, %v1150
        %v1197 = vpop.permute.xlu0 %1196
        %1199 = vset.pattern.permute.xlu0 0
        %1200 = vperm.xlu0 %1199, %v1151
        %v1201 = vpop.permute.xlu0 %1200
        %1203 = vset.pattern.permute.xlu0 0
        %1204 = vperm.xlu0 %1203, %v1152
        %v1205 = vpop.permute.xlu0 %1204
        %1207 = vset.pattern.permute.xlu0 0
        %1208 = vperm.xlu0 %1207, %v1153
        %v1209 = vpop.permute.xlu0 %1208
        %1211 = vset.pattern.permute.xlu0 0
        %1212 = vperm.xlu0 %1211, %v1154
        %v1213 = vpop.permute.xlu0 %1212
        %1215 = vset.pattern.permute.xlu0 0
        %1216 = vperm.xlu0 %1215, %v1155
        %v1217 = vpop.permute.xlu0 %1216
        %1219 = vset.pattern.permute.xlu0 0
        %1220 = vperm.xlu0 %1219, %v1156
        %v1221 = vpop.permute.xlu0 %1220
        %1223 = vset.pattern.permute.xlu0 0
        %1224 = vperm.xlu0 %1223, %v1157
        %v1225 = vpop.permute.xlu0 %1224
        %v1242 = vunpack.c.l.b16 %v1126
        %v1243 = vunpack.c.l.b16 %v1127
        %v1244 = vunpack.c.l.b16 %v1128
        %v1245 = vunpack.c.l.b16 %v1129
        %v1246 = vunpack.c.l.b16 %v1130
        %v1247 = vunpack.c.l.b16 %v1131
        %v1248 = vunpack.c.l.b16 %v1132
        %v1249 = vunpack.c.l.b16 %v1133
        %v1250 = vunpack.c.l.b16 %v1134
        %v1251 = vunpack.c.l.b16 %v1135
        %v1252 = vunpack.c.l.b16 %v1136
        %v1253 = vunpack.c.l.b16 %v1137
        %v1254 = vunpack.c.l.b16 %v1138
        %v1255 = vunpack.c.l.b16 %v1139
        %v1256 = vunpack.c.l.b16 %v1140
        %v1257 = vunpack.c.l.b16 %v1141
        %v1258 = vpack.c.b16 %v1243, %v1242
        %v1259 = vpack.c.b16 %v1245, %v1244
        %v1260 = vpack.c.b16 %v1247, %v1246
        %v1261 = vpack.c.b16 %v1249, %v1248
        %v1262 = vpack.c.b16 %v1251, %v1250
        %v1263 = vpack.c.b16 %v1253, %v1252
        %v1264 = vpack.c.b16 %v1255, %v1254
        %v1265 = vpack.c.b16 %v1257, %v1256
        %1274 = vmatprep.subr.bf16.mxu0 0
        %1275 = vmatpush1.bf16.xpose.msra.mxu0 %v892
        %1276 = vmatprep.subr.bf16.mxu0 0
        %1277 = vmatpush1.bf16.xpose.msra.mxu0 0
        %1278 = vmatprep.subr.bf16.mxu0 0
        %1279 = vmatpush1.bf16.xpose.msra.mxu0 0
        %1280 = vmatprep.subr.bf16.mxu0 0
        %1281 = vmatpush1.bf16.xpose.msra.mxu0 0
        %1282 = vmatprep.subr.bf16.mxu0 0
        %1283 = vmatpush1.bf16.xpose.msra.mxu0 0
        %1284 = vmatprep.subr.bf16.mxu0 0
        %1285 = vmatpush1.bf16.xpose.msra.mxu0 0
        %1286 = vmatprep.subr.bf16.mxu0 0
        %1287 = vmatpush1.bf16.xpose.msra.mxu0 0
        %1288 = vmatprep.subr.bf16.mxu0 0
        %1289 = vmatpush1.bf16.xpose.msra.mxu0 0
        %1290 = vmatprep.subr.bf16.mxu0 0
        %1291 = vmatpush1.bf16.xpose.msra.mxu0 0
        %1292 = vmatprep.subr.bf16.mxu0 0
        %1293 = vmatpush1.bf16.xpose.msra.mxu0 0
        %1294 = vmatprep.subr.bf16.mxu0 0
        %1295 = vmatpush1.bf16.xpose.msra.mxu0 0
        %1296 = vmatprep.subr.bf16.mxu0 0
        %1297 = vmatpush1.bf16.xpose.msra.mxu0 0
        %1298 = vmatprep.subr.bf16.mxu0 0
        %1299 = vmatpush1.bf16.xpose.msra.mxu0 0
        %1300 = vmatprep.subr.bf16.mxu0 0
        %1301 = vmatpush1.bf16.xpose.msra.mxu0 0
        %1302 = vmatprep.subr.bf16.mxu0 0
        %1303 = vmatpush1.bf16.xpose.msra.mxu0 0
        %1304 = vmatprep.subr.bf16.mxu0 0
        %1305 = vmatpush1.bf16.xpose.msra.mxu0 0
        %1306 = vmatprep.mubr.bf16.mxu0 0
        %1307 = vmatmul.mubr.bf16.gmra.mrb[0].mxu0 %v1258
        %v1308 = vpop.f32.mrb[0].mxu0
        %v1309 = vadd.f32 %v1161, %v1308
        %v1310 = vpop.f32.mrb[0].mxu0
        %v1311 = vpop.f32.mrb[0].mxu0
        %v1312 = vadd.f32 %v1166, %v1311
        %v1313 = vpop.f32.mrb[0].mxu0
        %1314 = vmatprep.mubr.bf16.mxu0 0
        %1315 = vmatmul.mubr.bf16.gmra.mrb[0].mxu0 %v1259
        %v1316 = vpop.f32.mrb[0].mxu0
        %v1317 = vadd.f32 %v1171, %v1316
        %v1318 = vpop.f32.mrb[0].mxu0
        %v1319 = vpop.f32.mrb[0].mxu0
        %v1320 = vadd.f32 %v1176, %v1319
        %v1321 = vpop.f32.mrb[0].mxu0
        %1322 = vmatprep.mubr.bf16.mxu0 0
        %1323 = vmatmul.mubr.bf16.gmra.mrb[0].mxu0 %v1260
        %v1324 = vpop.f32.mrb[0].mxu0
        %v1325 = vpop.f32.mrb[0].mxu0
        %v1326 = vpop.f32.mrb[0].mxu0
        %v1327 = vpop.f32.mrb[0].mxu0
        %1328 = vmatprep.mubr.bf16.mxu0 0
        %1329 = vmatmul.mubr.bf16.gmra.mrb[0].mxu0 %v1261
        %v1330 = vpop.f32.mrb[0].mxu0
        %v1331 = vpop.f32.mrb[0].mxu0
        %v1332 = vpop.f32.mrb[0].mxu0
        %v1333 = vpop.f32.mrb[0].mxu0
        %1334 = vmatprep.mubr.bf16.mxu0 0
        %1335 = vmatmul.mubr.bf16.gmra.mrb[0].mxu0 %v1262
        %v1336 = vpop.f32.mrb[0].mxu0
        %v1337 = vpop.f32.mrb[0].mxu0
        %v1338 = vpop.f32.mrb[0].mxu0
        %v1339 = vpop.f32.mrb[0].mxu0
        %1340 = vmatprep.mubr.bf16.mxu0 0
        %1341 = vmatmul.mubr.bf16.gmra.mrb[0].mxu0 %v1263
        %v1342 = vpop.f32.mrb[0].mxu0
        %v1343 = vpop.f32.mrb[0].mxu0
        %v1344 = vpop.f32.mrb[0].mxu0
        %v1345 = vpop.f32.mrb[0].mxu0
        %1346 = vmatprep.mubr.bf16.mxu0 0
        %1347 = vmatmul.mubr.bf16.gmra.mrb[0].mxu0 %v1264
        %v1348 = vpop.f32.mrb[0].mxu0
        %v1349 = vpop.f32.mrb[0].mxu0
        %v1350 = vpop.f32.mrb[0].mxu0
        %v1351 = vpop.f32.mrb[0].mxu0
        %1352 = vmatprep.mubr.bf16.mxu0 0
        %1353 = vmatmul.mubr.bf16.gmra.mrb[0].mxu0 %v1265
        %v1354 = vpop.f32.mrb[0].mxu0
        %v1355 = vpop.f32.mrb[0].mxu0
        %v1356 = vpop.f32.mrb[0].mxu0
        %v1357 = vpop.f32.mrb[0].mxu0
        %1358 = vdwg.mxu0
        %v1359 = vld [vmem:[%s801] sm:$0xf]
        %v1360 = vld [vmem:[%s801 + $0x4] sm:$0xf]
        %v1361 = vld [vmem:[%s801 + $0x8] sm:$0xf]
        %v1362 = vld [vmem:[%s801 + $0xc] sm:$0xf]
        %v1363 = vld [vmem:[%s801 + $0x10] sm:$0xf]
        %v1364 = vld [vmem:[%s801 + $0x14] sm:$0xf]
        %v1365 = vld [vmem:[%s801 + $0x18] sm:$0xf]
        %v1366 = vld [vmem:[%s801 + $0x1c] sm:$0xf]
        %v1367 = vld [vmem:[%s801 + $0x20] sm:$0xf]
        %v1368 = vld [vmem:[%s801 + $0x24] sm:$0xf]
        %v1369 = vld [vmem:[%s801 + $0x28] sm:$0xf]
        %v1370 = vld [vmem:[%s801 + $0x2c] sm:$0xf]
        %v1371 = vld [vmem:[%s801 + $0x30] sm:$0xf]
        %v1372 = vld [vmem:[%s801 + $0x34] sm:$0xf]
        %v1373 = vld [vmem:[%s801 + $0x38] sm:$0xf]
        %v1374 = vld [vmem:[%s801 + $0x3c] sm:$0xf]
        %v1375 = vld [vmem:[%s806] sm:$0xff]
        %v1376 = vld [vmem:[%s806 + $0x8] sm:$0xff]
        %v1377 = vld [vmem:[%s806 + $0x10] sm:$0xff]
        %v1378 = vld [vmem:[%s806 + $0x18] sm:$0xff]
        %v1379 = vld [vmem:[%s806 + $0x20] sm:$0xff]
        %v1380 = vld [vmem:[%s806 + $0x28] sm:$0xff]
        %v1381 = vld [vmem:[%s806 + $0x30] sm:$0xff]
        %v1382 = vld [vmem:[%s806 + $0x38] sm:$0xff]
        %v1383 = vld [vmem:[%s806 + $0x40] sm:$0xff]
        %v1384 = vld [vmem:[%s806 + $0x48] sm:$0xff]
        %v1385 = vld [vmem:[%s806 + $0x50] sm:$0xff]
        %v1386 = vld [vmem:[%s806 + $0x58] sm:$0xff]
        %v1387 = vld [vmem:[%s806 + $0x60] sm:$0xff]
        %v1388 = vld [vmem:[%s806 + $0x68] sm:$0xff]
        %v1389 = vld [vmem:[%s806 + $0x70] sm:$0xff]
        %v1390 = vld [vmem:[%s806 + $0x78] sm:$0xff]
        %1392 = vset.pattern.permute.xlu0 0
        %1393 = vperm.xlu0 %1392, %v1375
        %v1394 = vpop.permute.xlu0 %1393
        %1397 = vset.pattern.permute.xlu0 0
        %1398 = vperm.xlu0 %1397, %v1376
        %v1399 = vpop.permute.xlu0 %1398
        %1402 = vset.pattern.permute.xlu0 0
        %1403 = vperm.xlu0 %1402, %v1377
        %v1404 = vpop.permute.xlu0 %1403
        %1407 = vset.pattern.permute.xlu0 0
        %1408 = vperm.xlu0 %1407, %v1378
        %v1409 = vpop.permute.xlu0 %1408
        %1412 = vset.pattern.permute.xlu0 0
        %1413 = vperm.xlu0 %1412, %v1379
        %v1414 = vpop.permute.xlu0 %1413
        %1416 = vset.pattern.permute.xlu0 0
        %1417 = vperm.xlu0 %1416, %v1380
        %v1418 = vpop.permute.xlu0 %1417
        %1420 = vset.pattern.permute.xlu0 0
        %1421 = vperm.xlu0 %1420, %v1381
        %v1422 = vpop.permute.xlu0 %1421
        %1424 = vset.pattern.permute.xlu0 0
        %1425 = vperm.xlu0 %1424, %v1382
        %v1426 = vpop.permute.xlu0 %1425
        %1428 = vset.pattern.permute.xlu0 0
        %1429 = vperm.xlu0 %1428, %v1383
        %v1430 = vpop.permute.xlu0 %1429
        %1432 = vset.pattern.permute.xlu0 0
        %1433 = vperm.xlu0 %1432, %v1384
        %v1434 = vpop.permute.xlu0 %1433
        %1436 = vset.pattern.permute.xlu0 0
        %1437 = vperm.xlu0 %1436, %v1385
        %v1438 = vpop.permute.xlu0 %1437
        %1440 = vset.pattern.permute.xlu0 0
        %1441 = vperm.xlu0 %1440, %v1386
        %v1442 = vpop.permute.xlu0 %1441
        %1444 = vset.pattern.permute.xlu0 0
        %1445 = vperm.xlu0 %1444, %v1387
        %v1446 = vpop.permute.xlu0 %1445
        %1448 = vset.pattern.permute.xlu0 0
        %1449 = vperm.xlu0 %1448, %v1388
        %v1450 = vpop.permute.xlu0 %1449
        %1452 = vset.pattern.permute.xlu0 0
        %1453 = vperm.xlu0 %1452, %v1389
        %v1454 = vpop.permute.xlu0 %1453
        %1456 = vset.pattern.permute.xlu0 0
        %1457 = vperm.xlu0 %1456, %v1390
        %v1458 = vpop.permute.xlu0 %1457
        %v1475 = vunpack.c.l.b16 %v1359
        %v1476 = vunpack.c.l.b16 %v1360
        %v1477 = vunpack.c.l.b16 %v1361
        %v1478 = vunpack.c.l.b16 %v1362
        %v1479 = vunpack.c.l.b16 %v1363
        %v1480 = vunpack.c.l.b16 %v1364
        %v1481 = vunpack.c.l.b16 %v1365
        %v1482 = vunpack.c.l.b16 %v1366
        %v1483 = vunpack.c.l.b16 %v1367
        %v1484 = vunpack.c.l.b16 %v1368
        %v1485 = vunpack.c.l.b16 %v1369
        %v1486 = vunpack.c.l.b16 %v1370
        %v1487 = vunpack.c.l.b16 %v1371
        %v1488 = vunpack.c.l.b16 %v1372
        %v1489 = vunpack.c.l.b16 %v1373
        %v1490 = vunpack.c.l.b16 %v1374
        %v1491 = vpack.c.b16 %v1476, %v1475
        %v1492 = vpack.c.b16 %v1478, %v1477
        %v1493 = vpack.c.b16 %v1480, %v1479
        %v1494 = vpack.c.b16 %v1482, %v1481
        %v1495 = vpack.c.b16 %v1484, %v1483
        %v1496 = vpack.c.b16 %v1486, %v1485
        %v1497 = vpack.c.b16 %v1488, %v1487
        %v1498 = vpack.c.b16 %v1490, %v1489
        %1507 = vmatprep.subr.bf16.mxu0 0
        %1508 = vmatpush1.bf16.xpose.msra.mxu0 %v892
        %1509 = vmatprep.subr.bf16.mxu0 0
        %1510 = vmatpush1.bf16.xpose.msra.mxu0 0
        %1511 = vmatprep.subr.bf16.mxu0 0
        %1512 = vmatpush1.bf16.xpose.msra.mxu0 0
        %1513 = vmatprep.subr.bf16.mxu0 0
        %1514 = vmatpush1.bf16.xpose.msra.mxu0 0
        %1515 = vmatprep.subr.bf16.mxu0 0
        %1516 = vmatpush1.bf16.xpose.msra.mxu0 0
        %1517 = vmatprep.subr.bf16.mxu0 0
        %1518 = vmatpush1.bf16.xpose.msra.mxu0 0
        %1519 = vmatprep.subr.bf16.mxu0 0
        %1520 = vmatpush1.bf16.xpose.msra.mxu0 0
        %1521 = vmatprep.subr.bf16.mxu0 0
        %1522 = vmatpush1.bf16.xpose.msra.mxu0 0
        %1523 = vmatprep.subr.bf16.mxu0 0
        %1524 = vmatpush1.bf16.xpose.msra.mxu0 0
        %1525 = vmatprep.subr.bf16.mxu0 0
        %1526 = vmatpush1.bf16.xpose.msra.mxu0 0
        %1527 = vmatprep.subr.bf16.mxu0 0
        %1528 = vmatpush1.bf16.xpose.msra.mxu0 0
        %1529 = vmatprep.subr.bf16.mxu0 0
        %1530 = vmatpush1.bf16.xpose.msra.mxu0 0
        %1531 = vmatprep.subr.bf16.mxu0 0
        %1532 = vmatpush1.bf16.xpose.msra.mxu0 0
        %1533 = vmatprep.subr.bf16.mxu0 0
        %1534 = vmatpush1.bf16.xpose.msra.mxu0 0
        %1535 = vmatprep.subr.bf16.mxu0 0
        %1536 = vmatpush1.bf16.xpose.msra.mxu0 0
        %1537 = vmatprep.subr.bf16.mxu0 0
        %1538 = vmatpush1.bf16.xpose.msra.mxu0 0
        %1539 = vmatprep.mubr.bf16.mxu0 0
        %1540 = vmatmul.mubr.bf16.gmra.mrb[0].mxu0 %v1491
        %v1541 = vpop.f32.mrb[0].mxu0
        %v1542 = vadd.f32 %v1394, %v1541
        %v1543 = vpop.f32.mrb[0].mxu0
        %v1544 = vpop.f32.mrb[0].mxu0
        %v1545 = vadd.f32 %v1399, %v1544
        %v1546 = vpop.f32.mrb[0].mxu0
        %1547 = vmatprep.mubr.bf16.mxu0 0
        %1548 = vmatmul.mubr.bf16.gmra.mrb[0].mxu0 %v1492
        %v1549 = vpop.f32.mrb[0].mxu0
        %v1550 = vadd.f32 %v1404, %v1549
        %v1551 = vpop.f32.mrb[0].mxu0
        %v1552 = vpop.f32.mrb[0].mxu0
        %v1553 = vadd.f32 %v1409, %v1552
        %v1554 = vpop.f32.mrb[0].mxu0
        %1555 = vmatprep.mubr.bf16.mxu0 0
        %1556 = vmatmul.mubr.bf16.gmra.mrb[0].mxu0 %v1493
        %v1557 = vpop.f32.mrb[0].mxu0
        %v1558 = vpop.f32.mrb[0].mxu0
        %v1559 = vpop.f32.mrb[0].mxu0
        %v1560 = vpop.f32.mrb[0].mxu0
        %1561 = vmatprep.mubr.bf16.mxu0 0
        %1562 = vmatmul.mubr.bf16.gmra.mrb[0].mxu0 %v1494
        %v1563 = vpop.f32.mrb[0].mxu0
        %v1564 = vpop.f32.mrb[0].mxu0
        %v1565 = vpop.f32.mrb[0].mxu0
        %v1566 = vpop.f32.mrb[0].mxu0
        %1567 = vmatprep.mubr.bf16.mxu0 0
        %1568 = vmatmul.mubr.bf16.gmra.mrb[0].mxu0 %v1495
        %v1569 = vpop.f32.mrb[0].mxu0
        %v1570 = vpop.f32.mrb[0].mxu0
        %v1571 = vpop.f32.mrb[0].mxu0
        %v1572 = vpop.f32.mrb[0].mxu0
        %1573 = vmatprep.mubr.bf16.mxu0 0
        %1574 = vmatmul.mubr.bf16.gmra.mrb[0].mxu0 %v1496
        %v1575 = vpop.f32.mrb[0].mxu0
        %v1576 = vpop.f32.mrb[0].mxu0
        %v1577 = vpop.f32.mrb[0].mxu0
        %v1578 = vpop.f32.mrb[0].mxu0
        %1579 = vmatprep.mubr.bf16.mxu0 0
        %1580 = vmatmul.mubr.bf16.gmra.mrb[0].mxu0 %v1497
        %v1581 = vpop.f32.mrb[0].mxu0
        %v1582 = vpop.f32.mrb[0].mxu0
        %v1583 = vpop.f32.mrb[0].mxu0
        %v1584 = vpop.f32.mrb[0].mxu0
        %1585 = vmatprep.mubr.bf16.mxu0 0
        %1586 = vmatmul.mubr.bf16.gmra.mrb[0].mxu0 %v1498
        %v1587 = vpop.f32.mrb[0].mxu0
        %v1588 = vpop.f32.mrb[0].mxu0
        %v1589 = vpop.f32.mrb[0].mxu0
        %v1590 = vpop.f32.mrb[0].mxu0
        %1591 = vdwg.mxu0
        %v1592 = vpack.c.bf16 %v1076, %v1076
        %v1593 = vpack.c.bf16 %v1079, %v1079
        %v1594 = vpack.c.bf16 %v1084, %v1084
        %v1595 = vpack.c.bf16 %v1087, %v1087
        %v1596 = vpack.c.bf16 %v1309, %v1309
        %v1597 = vpack.c.bf16 %v1312, %v1312
        %v1598 = vpack.c.bf16 %v1317, %v1317
        %v1599 = vpack.c.bf16 %v1320, %v1320
        %v1600 = vpack.c.bf16 %v1542, %v1542
        %v1601 = vpack.c.bf16 %v1545, %v1545
        %v1602 = vpack.c.bf16 %v1550, %v1550
        %v1603 = vpack.c.bf16 %v1553, %v1553
        %v1604 = vld [vmem:[%s811] sm:$0xf]
        %v1605 = vld [vmem:[%s811 + $0x4] sm:$0xf]
        %v1606 = vld [vmem:[%s811 + $0x8] sm:$0xf]
        %v1607 = vld [vmem:[%s811 + $0xc] sm:$0xf]
        %1608 = vxpose.xlu0.c.b16.start [1/8] %v1592, 128
        %1609 = vxpose.xlu0.c.b16.cont [2/8] 0, 128
        %1610 = vxpose.xlu0.c.b16.cont [3/8] 0, 128
        %1611 = vxpose.xlu0.c.b16.cont [4/8] 0, 128
        %1612 = vxpose.xlu0.c.b16.cont [5/8] 0, 128
        %1613 = vxpose.xlu0.c.b16.cont [6/8] 0, 128
        %1614 = vxpose.xlu0.c.b16.cont [7/8] 0, 128
        %1615 = vxpose.xlu0.c.b16.end [8/8] 0, 128
        %v1616 = vpop.trf.xlu0
        %v1617 = vpop.trf.xlu0
        %v1618 = vpop.trf.xlu0
        %v1619 = vpop.trf.xlu0
        %v1620 = vpop.trf.xlu0
        %v1621 = vpop.trf.xlu0
        %v1622 = vpop.trf.xlu0
        %v1623 = vpop.trf.xlu0
        %vm1624 = vcmask 64512
        %v1626 = vsel %vm1624, %v1616, 0
        %vm1628 = vcmask 1043456
        %v1630 = vsel %vm1628, %v1596, 0
        %1632 = vmatprep.subr.bf16.mxu0 0
        %1633 = vmatpush1.bf16.msra.mxu0 %v1630
        %1634 = vmatprep.subr.bf16.mxu0 0
        %1635 = vmatpush1.bf16.msra.mxu0 0
        %1636 = vmatprep.subr.bf16.mxu0 0
        %1637 = vmatpush1.bf16.msra.mxu0 0
        %1638 = vmatprep.subr.bf16.mxu0 0
        %1639 = vmatpush1.bf16.msra.mxu0 0
        %1640 = vmatprep.subr.bf16.mxu0 0
        %1641 = vmatpush1.bf16.msra.mxu0 0
        %1642 = vmatprep.subr.bf16.mxu0 0
        %1643 = vmatpush1.bf16.msra.mxu0 0
        %1644 = vmatprep.subr.bf16.mxu0 0
        %1645 = vmatpush1.bf16.msra.mxu0 0
        %1646 = vmatprep.subr.bf16.mxu0 0
        %1647 = vmatpush1.bf16.msra.mxu0 0
        %1648 = vmatprep.subr.bf16.mxu0 0
        %1649 = vmatpush1.bf16.msra.mxu0 0
        %1650 = vmatprep.subr.bf16.mxu0 0
        %1651 = vmatpush1.bf16.msra.mxu0 0
        %1652 = vmatprep.subr.bf16.mxu0 0
        %1653 = vmatpush1.bf16.msra.mxu0 0
        %1654 = vmatprep.subr.bf16.mxu0 0
        %1655 = vmatpush1.bf16.msra.mxu0 0
        %1656 = vmatprep.subr.bf16.mxu0 0
        %1657 = vmatpush1.bf16.msra.mxu0 0
        %1658 = vmatprep.subr.bf16.mxu0 0
        %1659 = vmatpush1.bf16.msra.mxu0 0
        %1660 = vmatprep.subr.bf16.mxu0 0
        %1661 = vmatpush1.bf16.msra.mxu0 0
        %1662 = vmatprep.subr.bf16.mxu0 0
        %1663 = vmatpush1.bf16.msra.mxu0 0
        %1664 = vmatprep.mubr.bf16.mxu0 0
        %1665 = vmatmul.mubr.bf16.gmra.mrb[0].mxu0 %v1626
        %v1666 = vpop.f32.mrb[0].mxu0
        %v1667 = vadd.f32 0.0, %v1666
        %v1668 = vpop.f32.mrb[0].mxu0
        %v1669 = vpop.f32.mrb[0].mxu0
        %v1670 = vadd.f32 0.0, %v1669
        %v1671 = vpop.f32.mrb[0].mxu0
        %1672 = vdwg.mxu0
        %vm1673 = vcmask 130048
        %v1674 = vsel %vm1673, %v1667, -inf
        %1675 = vmax.xlane.f32.xlu0 %v1674
        %v1676 = vpop.xlane.xlu0 %1675
        %v1677 = vsel %vm1673, %v1670, -inf
        %1678 = vmax.xlane.f32.xlu0 %v1677
        %v1679 = vpop.xlane.xlu0 %1678
        %v1680 = vsub.f32 %v1667, %v1676
        %v1681 = vsub.f32 %v1670, %v1679
        %v1682 = vmul.f32 %v1680, 1.442695
        %v1683 = vpow.pop %v1682
        %v1684 = vmul.f32 %v1681, 1.442695
        %v1685 = vpow.pop %v1684
        %v1686 = vsel %vm1673, %v1683, 0.0
        %1687 = vadd.xlane.f32.xlu0 %v1686
        %v1688 = vpop.xlane.xlu0 %1687
        %v1689 = vsel %vm1673, %v1685, 0.0
        %1690 = vadd.xlane.f32.xlu0 %v1689
        %v1691 = vpop.xlane.xlu0 %1690
        %v1692 = vrcp.pop %v1688
        %v1693 = vrcp.pop %v1691
        %v1694 = vmul.f32 %v1683, %v1692
        %v1695 = vmul.f32 %v1685, %v1693
        %v1696 = vpack.c.bf16 %v1695, %v1694
        %v1698 = vsel %vm1673, %v1696, 0
        %v1701 = vsel %vm1673, %v1600, 0
        %1703 = vmatprep.subr.bf16.mxu0 0
        %1704 = vmatpush1.bf16.xpose.msra.mxu0 %v1701
        %1705 = vmatprep.subr.bf16.mxu0 0
        %1706 = vmatpush1.bf16.xpose.msra.mxu0 0
        %1707 = vmatprep.subr.bf16.mxu0 0
        %1708 = vmatpush1.bf16.xpose.msra.mxu0 0
        %1709 = vmatprep.subr.bf16.mxu0 0
        %1710 = vmatpush1.bf16.xpose.msra.mxu0 0
        %1711 = vmatprep.subr.bf16.mxu0 0
        %1712 = vmatpush1.bf16.xpose.msra.mxu0 0
        %1713 = vmatprep.subr.bf16.mxu0 0
        %1714 = vmatpush1.bf16.xpose.msra.mxu0 0
        %1715 = vmatprep.subr.bf16.mxu0 0
        %1716 = vmatpush1.bf16.xpose.msra.mxu0 0
        %1717 = vmatprep.subr.bf16.mxu0 0
        %1718 = vmatpush1.bf16.xpose.msra.mxu0 0
        %1719 = vmatprep.subr.bf16.mxu0 0
        %1720 = vmatpush1.bf16.xpose.msra.mxu0 0
        %1721 = vmatprep.subr.bf16.mxu0 0
        %1722 = vmatpush1.bf16.xpose.msra.mxu0 0
        %1723 = vmatprep.subr.bf16.mxu0 0
        %1724 = vmatpush1.bf16.xpose.msra.mxu0 0
        %1725 = vmatprep.subr.bf16.mxu0 0
        %1726 = vmatpush1.bf16.xpose.msra.mxu0 0
        %1727 = vmatprep.subr.bf16.mxu0 0
        %1728 = vmatpush1.bf16.xpose.msra.mxu0 0
        %1729 = vmatprep.subr.bf16.mxu0 0
        %1730 = vmatpush1.bf16.xpose.msra.mxu0 0
        %1731 = vmatprep.subr.bf16.mxu0 0
        %1732 = vmatpush1.bf16.xpose.msra.mxu0 0
        %1733 = vmatprep.subr.bf16.mxu0 0
        %1734 = vmatpush1.bf16.xpose.msra.mxu0 0
        %1735 = vmatprep.mubr.bf16.mxu0 0
        %1736 = vmatmul.mubr.bf16.gmra.mrb[0].mxu0 %v1698
        %v1737 = vpop.f32.mrb[0].mxu0
        %v1738 = vadd.f32 0.0, %v1737
        %v1739 = vpop.f32.mrb[0].mxu0
        %v1740 = vpop.f32.mrb[0].mxu0
        %v1741 = vadd.f32 0.0, %v1740
        %v1742 = vpop.f32.mrb[0].mxu0
        %1743 = vdwg.mxu0
        %v1744 = vpack.c.bf16 %v1741, %v1738
        %1745 = vxpose.xlu0.c.b16.start [1/8] %v1593, 128
        %1746 = vxpose.xlu0.c.b16.cont [2/8] 0, 128
        %1747 = vxpose.xlu0.c.b16.cont [3/8] 0, 128
        %1748 = vxpose.xlu0.c.b16.cont [4/8] 0, 128
        %1749 = vxpose.xlu0.c.b16.cont [5/8] 0, 128
        %1750 = vxpose.xlu0.c.b16.cont [6/8] 0, 128
        %1751 = vxpose.xlu0.c.b16.cont [7/8] 0, 128
        %1752 = vxpose.xlu0.c.b16.end [8/8] 0, 128
        %v1753 = vpop.trf.xlu0
        %v1754 = vpop.trf.xlu0
        %v1755 = vpop.trf.xlu0
        %v1756 = vpop.trf.xlu0
        %v1757 = vpop.trf.xlu0
        %v1758 = vpop.trf.xlu0
        %v1759 = vpop.trf.xlu0
        %v1760 = vpop.trf.xlu0
        %v1762 = vsel %vm1624, %v1753, 0
        %v1765 = vsel %vm1628, %v1597, 0
        %1767 = vmatprep.subr.bf16.mxu0 0
        %1768 = vmatpush1.bf16.msra.mxu0 %v1765
        %1769 = vmatprep.subr.bf16.mxu0 0
        %1770 = vmatpush1.bf16.msra.mxu0 0
        %1771 = vmatprep.subr.bf16.mxu0 0
        %1772 = vmatpush1.bf16.msra.mxu0 0
        %1773 = vmatprep.subr.bf16.mxu0 0
        %1774 = vmatpush1.bf16.msra.mxu0 0
        %1775 = vmatprep.subr.bf16.mxu0 0
        %1776 = vmatpush1.bf16.msra.mxu0 0
        %1777 = vmatprep.subr.bf16.mxu0 0
        %1778 = vmatpush1.bf16.msra.mxu0 0
        %1779 = vmatprep.subr.bf16.mxu0 0
        %1780 = vmatpush1.bf16.msra.mxu0 0
        %1781 = vmatprep.subr.bf16.mxu0 0
        %1782 = vmatpush1.bf16.msra.mxu0 0
        %1783 = vmatprep.subr.bf16.mxu0 0
        %1784 = vmatpush1.bf16.msra.mxu0 0
        %1785 = vmatprep.subr.bf16.mxu0 0
        %1786 = vmatpush1.bf16.msra.mxu0 0
        %1787 = vmatprep.subr.bf16.mxu0 0
        %1788 = vmatpush1.bf16.msra.mxu0 0
        %1789 = vmatprep.subr.bf16.mxu0 0
        %1790 = vmatpush1.bf16.msra.mxu0 0
        %1791 = vmatprep.subr.bf16.mxu0 0
        %1792 = vmatpush1.bf16.msra.mxu0 0
        %1793 = vmatprep.subr.bf16.mxu0 0
        %1794 = vmatpush1.bf16.msra.mxu0 0
        %1795 = vmatprep.subr.bf16.mxu0 0
        %1796 = vmatpush1.bf16.msra.mxu0 0
        %1797 = vmatprep.subr.bf16.mxu0 0
        %1798 = vmatpush1.bf16.msra.mxu0 0
        %1799 = vmatprep.mubr.bf16.mxu0 0
        %1800 = vmatmul.mubr.bf16.gmra.mrb[0].mxu0 %v1762
        %v1801 = vpop.f32.mrb[0].mxu0
        %v1802 = vadd.f32 0.0, %v1801
        %v1803 = vpop.f32.mrb[0].mxu0
        %v1804 = vpop.f32.mrb[0].mxu0
        %v1805 = vadd.f32 0.0, %v1804
        %v1806 = vpop.f32.mrb[0].mxu0
        %1807 = vdwg.mxu0
        %v1808 = vsel %vm1673, %v1802, -inf
        %1809 = vmax.xlane.f32.xlu0 %v1808
        %v1810 = vpop.xlane.xlu0 %1809
        %v1811 = vsel %vm1673, %v1805, -inf
        %1812 = vmax.xlane.f32.xlu0 %v1811
        %v1813 = vpop.xlane.xlu0 %1812
        %v1814 = vsub.f32 %v1802, %v1810
        %v1815 = vsub.f32 %v1805, %v1813
        %v1816 = vmul.f32 %v1814, 1.442695
        %v1817 = vpow.pop %v1816
        %v1818 = vmul.f32 %v1815, 1.442695
        %v1819 = vpow.pop %v1818
        %v1820 = vsel %vm1673, %v1817, 0.0
        %1821 = vadd.xlane.f32.xlu0 %v1820
        %v1822 = vpop.xlane.xlu0 %1821
        %v1823 = vsel %vm1673, %v1819, 0.0
        %1824 = vadd.xlane.f32.xlu0 %v1823
        %v1825 = vpop.xlane.xlu0 %1824
        %v1826 = vrcp.pop %v1822
        %v1827 = vrcp.pop %v1825
        %v1828 = vmul.f32 %v1817, %v1826
        %v1829 = vmul.f32 %v1819, %v1827
        %v1830 = vpack.c.bf16 %v1829, %v1828
        %v1832 = vsel %vm1673, %v1830, 0
        %v1835 = vsel %vm1673, %v1601, 0
        %1837 = vmatprep.subr.bf16.mxu0 0
        %1838 = vmatpush1.bf16.xpose.msra.mxu0 %v1835
        %1839 = vmatprep.subr.bf16.mxu0 0
        %1840 = vmatpush1.bf16.xpose.msra.mxu0 0
        %1841 = vmatprep.subr.bf16.mxu0 0
        %1842 = vmatpush1.bf16.xpose.msra.mxu0 0
        %1843 = vmatprep.subr.bf16.mxu0 0
        %1844 = vmatpush1.bf16.xpose.msra.mxu0 0
        %1845 = vmatprep.subr.bf16.mxu0 0
        %1846 = vmatpush1.bf16.xpose.msra.mxu0 0
        %1847 = vmatprep.subr.bf16.mxu0 0
        %1848 = vmatpush1.bf16.xpose.msra.mxu0 0
        %1849 = vmatprep.subr.bf16.mxu0 0
        %1850 = vmatpush1.bf16.xpose.msra.mxu0 0
        %1851 = vmatprep.subr.bf16.mxu0 0
        %1852 = vmatpush1.bf16.xpose.msra.mxu0 0
        %1853 = vmatprep.subr.bf16.mxu0 0
        %1854 = vmatpush1.bf16.xpose.msra.mxu0 0
        %1855 = vmatprep.subr.bf16.mxu0 0
        %1856 = vmatpush1.bf16.xpose.msra.mxu0 0
        %1857 = vmatprep.subr.bf16.mxu0 0
        %1858 = vmatpush1.bf16.xpose.msra.mxu0 0
        %1859 = vmatprep.subr.bf16.mxu0 0
        %1860 = vmatpush1.bf16.xpose.msra.mxu0 0
        %1861 = vmatprep.subr.bf16.mxu0 0
        %1862 = vmatpush1.bf16.xpose.msra.mxu0 0
        %1863 = vmatprep.subr.bf16.mxu0 0
        %1864 = vmatpush1.bf16.xpose.msra.mxu0 0
        %1865 = vmatprep.subr.bf16.mxu0 0
        %1866 = vmatpush1.bf16.xpose.msra.mxu0 0
        %1867 = vmatprep.subr.bf16.mxu0 0
        %1868 = vmatpush1.bf16.xpose.msra.mxu0 0
        %1869 = vmatprep.mubr.bf16.mxu0 0
        %1870 = vmatmul.mubr.bf16.gmra.mrb[0].mxu0 %v1832
        %v1871 = vpop.f32.mrb[0].mxu0
        %v1872 = vadd.f32 0.0, %v1871
        %v1873 = vpop.f32.mrb[0].mxu0
        %v1874 = vpop.f32.mrb[0].mxu0
        %v1875 = vadd.f32 0.0, %v1874
        %v1876 = vpop.f32.mrb[0].mxu0
        %1877 = vdwg.mxu0
        %v1878 = vpack.c.bf16 %v1875, %v1872
        %v1880 = vsel %vm1624, %v1878, 0
        %v1883 = vsel %vm1628, %v1605, 0
        %1885 = vmatprep.subr.bf16.mxu0 0
        %1886 = vmatpush1.bf16.msra.mxu0 %v1883
        %1887 = vmatprep.subr.bf16.mxu0 0
        %1888 = vmatpush1.bf16.msra.mxu0 0
        %1889 = vmatprep.subr.bf16.mxu0 0
        %1890 = vmatpush1.bf16.msra.mxu0 0
        %1891 = vmatprep.subr.bf16.mxu0 0
        %1892 = vmatpush1.bf16.msra.mxu0 0
        %1893 = vmatprep.subr.bf16.mxu0 0
        %1894 = vmatpush1.bf16.msra.mxu0 0
        %1895 = vmatprep.subr.bf16.mxu0 0
        %1896 = vmatpush1.bf16.msra.mxu0 0
        %1897 = vmatprep.subr.bf16.mxu0 0
        %1898 = vmatpush1.bf16.msra.mxu0 0
        %1899 = vmatprep.subr.bf16.mxu0 0
        %1900 = vmatpush1.bf16.msra.mxu0 0
        %1901 = vmatprep.subr.bf16.mxu0 0
        %1902 = vmatpush1.bf16.msra.mxu0 0
        %1903 = vmatprep.subr.bf16.mxu0 0
        %1904 = vmatpush1.bf16.msra.mxu0 0
        %1905 = vmatprep.subr.bf16.mxu0 0
        %1906 = vmatpush1.bf16.msra.mxu0 0
        %1907 = vmatprep.subr.bf16.mxu0 0
        %1908 = vmatpush1.bf16.msra.mxu0 0
        %1909 = vmatprep.subr.bf16.mxu0 0
        %1910 = vmatpush1.bf16.msra.mxu0 0
        %1911 = vmatprep.subr.bf16.mxu0 0
        %1912 = vmatpush1.bf16.msra.mxu0 0
        %1913 = vmatprep.subr.bf16.mxu0 0
        %1914 = vmatpush1.bf16.msra.mxu0 0
        %1915 = vmatprep.subr.bf16.mxu0 0
        %1916 = vmatpush1.bf16.msra.mxu0 0
        %1917 = vmatprep.mubr.bf16.mxu0 0
        %1918 = vmatmul.mubr.bf16.gmra.mrb[0].mxu0 %v1880
        %v1919 = vpop.f32.mrb[0].mxu0
        %v1920 = vadd.f32 0.0, %v1919
        %v1921 = vpop.f32.mrb[0].mxu0
        %v1922 = vpop.f32.mrb[0].mxu0
        %v1923 = vadd.f32 0.0, %v1922
        %v1924 = vpop.f32.mrb[0].mxu0
        %1925 = vdwg.mxu0
        %v1927 = vsel %vm1624, %v1744, 0
        %v1930 = vsel %vm1628, %v1604, 0
        %1932 = vmatprep.subr.bf16.mxu0 0
        %1933 = vmatpush1.bf16.msra.mxu0 %v1930
        %1934 = vmatprep.subr.bf16.mxu0 0
        %1935 = vmatpush1.bf16.msra.mxu0 0
        %1936 = vmatprep.subr.bf16.mxu0 0
        %1937 = vmatpush1.bf16.msra.mxu0 0
        %1938 = vmatprep.subr.bf16.mxu0 0
        %1939 = vmatpush1.bf16.msra.mxu0 0
        %1940 = vmatprep.subr.bf16.mxu0 0
        %1941 = vmatpush1.bf16.msra.mxu0 0
        %1942 = vmatprep.subr.bf16.mxu0 0
        %1943 = vmatpush1.bf16.msra.mxu0 0
        %1944 = vmatprep.subr.bf16.mxu0 0
        %1945 = vmatpush1.bf16.msra.mxu0 0
        %1946 = vmatprep.subr.bf16.mxu0 0
        %1947 = vmatpush1.bf16.msra.mxu0 0
        %1948 = vmatprep.subr.bf16.mxu0 0
        %1949 = vmatpush1.bf16.msra.mxu0 0
        %1950 = vmatprep.subr.bf16.mxu0 0
        %1951 = vmatpush1.bf16.msra.mxu0 0
        %1952 = vmatprep.subr.bf16.mxu0 0
        %1953 = vmatpush1.bf16.msra.mxu0 0
        %1954 = vmatprep.subr.bf16.mxu0 0
        %1955 = vmatpush1.bf16.msra.mxu0 0
        %1956 = vmatprep.subr.bf16.mxu0 0
        %1957 = vmatpush1.bf16.msra.mxu0 0
        %1958 = vmatprep.subr.bf16.mxu0 0
        %1959 = vmatpush1.bf16.msra.mxu0 0
        %1960 = vmatprep.subr.bf16.mxu0 0
        %1961 = vmatpush1.bf16.msra.mxu0 0
        %1962 = vmatprep.subr.bf16.mxu0 0
        %1963 = vmatpush1.bf16.msra.mxu0 0
        %1964 = vmatprep.mubr.bf16.mxu0 0
        %1965 = vmatmul.mubr.bf16.gmra.mrb[0].mxu0 %v1927
        %v1966 = vpop.f32.mrb[0].mxu0
        %v1967 = vadd.f32 %v1920, %v1966
        %v1968 = vpop.f32.mrb[0].mxu0
        %v1969 = vpop.f32.mrb[0].mxu0
        %v1970 = vadd.f32 %v1923, %v1969
        %v1971 = vpop.f32.mrb[0].mxu0
        %1972 = vdwg.mxu0
        %1973 = vxpose.xlu0.c.b16.start [1/8] %v1594, 128
        %1974 = vxpose.xlu0.c.b16.cont [2/8] 0, 128
        %1975 = vxpose.xlu0.c.b16.cont [3/8] 0, 128
        %1976 = vxpose.xlu0.c.b16.cont [4/8] 0, 128
        %1977 = vxpose.xlu0.c.b16.cont [5/8] 0, 128
        %1978 = vxpose.xlu0.c.b16.cont [6/8] 0, 128
        %1979 = vxpose.xlu0.c.b16.cont [7/8] 0, 128
        %1980 = vxpose.xlu0.c.b16.end [8/8] 0, 128
        %v1981 = vpop.trf.xlu0
        %v1982 = vpop.trf.xlu0
        %v1983 = vpop.trf.xlu0
        %v1984 = vpop.trf.xlu0
        %v1985 = vpop.trf.xlu0
        %v1986 = vpop.trf.xlu0
        %v1987 = vpop.trf.xlu0
        %v1988 = vpop.trf.xlu0
        %v1990 = vsel %vm1624, %v1981, 0
        %v1993 = vsel %vm1628, %v1598, 0
        %1995 = vmatprep.subr.bf16.mxu0 0
        %1996 = vmatpush1.bf16.msra.mxu0 %v1993
        %1997 = vmatprep.subr.bf16.mxu0 0
        %1998 = vmatpush1.bf16.msra.mxu0 0
        %1999 = vmatprep.subr.bf16.mxu0 0
        %2000 = vmatpush1.bf16.msra.mxu0 0
        %2001 = vmatprep.subr.bf16.mxu0 0
        %2002 = vmatpush1.bf16.msra.mxu0 0
        %2003 = vmatprep.subr.bf16.mxu0 0
        %2004 = vmatpush1.bf16.msra.mxu0 0
        %2005 = vmatprep.subr.bf16.mxu0 0
        %2006 = vmatpush1.bf16.msra.mxu0 0
        %2007 = vmatprep.subr.bf16.mxu0 0
        %2008 = vmatpush1.bf16.msra.mxu0 0
        %2009 = vmatprep.subr.bf16.mxu0 0
        %2010 = vmatpush1.bf16.msra.mxu0 0
        %2011 = vmatprep.subr.bf16.mxu0 0
        %2012 = vmatpush1.bf16.msra.mxu0 0
        %2013 = vmatprep.subr.bf16.mxu0 0
        %2014 = vmatpush1.bf16.msra.mxu0 0
        %2015 = vmatprep.subr.bf16.mxu0 0
        %2016 = vmatpush1.bf16.msra.mxu0 0
        %2017 = vmatprep.subr.bf16.mxu0 0
        %2018 = vmatpush1.bf16.msra.mxu0 0
        %2019 = vmatprep.subr.bf16.mxu0 0
        %2020 = vmatpush1.bf16.msra.mxu0 0
        %2021 = vmatprep.subr.bf16.mxu0 0
        %2022 = vmatpush1.bf16.msra.mxu0 0
        %2023 = vmatprep.subr.bf16.mxu0 0
        %2024 = vmatpush1.bf16.msra.mxu0 0
        %2025 = vmatprep.subr.bf16.mxu0 0
        %2026 = vmatpush1.bf16.msra.mxu0 0
        %2027 = vmatprep.mubr.bf16.mxu0 0
        %2028 = vmatmul.mubr.bf16.gmra.mrb[0].mxu0 %v1990
        %v2029 = vpop.f32.mrb[0].mxu0
        %v2030 = vadd.f32 0.0, %v2029
        %v2031 = vpop.f32.mrb[0].mxu0
        %v2032 = vpop.f32.mrb[0].mxu0
        %v2033 = vadd.f32 0.0, %v2032
        %v2034 = vpop.f32.mrb[0].mxu0
        %2035 = vdwg.mxu0
        %v2036 = vsel %vm1673, %v2030, -inf
        %2037 = vmax.xlane.f32.xlu0 %v2036
        %v2038 = vpop.xlane.xlu0 %2037
        %v2039 = vsel %vm1673, %v2033, -inf
        %2040 = vmax.xlane.f32.xlu0 %v2039
        %v2041 = vpop.xlane.xlu0 %2040
        %v2042 = vsub.f32 %v2030, %v2038
        %v2043 = vsub.f32 %v2033, %v2041
        %v2044 = vmul.f32 %v2042, 1.442695
        %v2045 = vpow.pop %v2044
        %v2046 = vmul.f32 %v2043, 1.442695
        %v2047 = vpow.pop %v2046
        %v2048 = vsel %vm1673, %v2045, 0.0
        %2049 = vadd.xlane.f32.xlu0 %v2048
        %v2050 = vpop.xlane.xlu0 %2049
        %v2051 = vsel %vm1673, %v2047, 0.0
        %2052 = vadd.xlane.f32.xlu0 %v2051
        %v2053 = vpop.xlane.xlu0 %2052
        %v2054 = vrcp.pop %v2050
        %v2055 = vrcp.pop %v2053
        %v2056 = vmul.f32 %v2045, %v2054
        %v2057 = vmul.f32 %v2047, %v2055
        %v2058 = vpack.c.bf16 %v2057, %v2056
        %v2060 = vsel %vm1673, %v2058, 0
        %v2063 = vsel %vm1673, %v1602, 0
        %2065 = vmatprep.subr.bf16.mxu0 0
        %2066 = vmatpush1.bf16.xpose.msra.mxu0 %v2063
        %2067 = vmatprep.subr.bf16.mxu0 0
        %2068 = vmatpush1.bf16.xpose.msra.mxu0 0
        %2069 = vmatprep.subr.bf16.mxu0 0
        %2070 = vmatpush1.bf16.xpose.msra.mxu0 0
        %2071 = vmatprep.subr.bf16.mxu0 0
        %2072 = vmatpush1.bf16.xpose.msra.mxu0 0
        %2073 = vmatprep.subr.bf16.mxu0 0
        %2074 = vmatpush1.bf16.xpose.msra.mxu0 0
        %2075 = vmatprep.subr.bf16.mxu0 0
        %2076 = vmatpush1.bf16.xpose.msra.mxu0 0
        %2077 = vmatprep.subr.bf16.mxu0 0
        %2078 = vmatpush1.bf16.xpose.msra.mxu0 0
        %2079 = vmatprep.subr.bf16.mxu0 0
        %2080 = vmatpush1.bf16.xpose.msra.mxu0 0
        %2081 = vmatprep.subr.bf16.mxu0 0
        %2082 = vmatpush1.bf16.xpose.msra.mxu0 0
        %2083 = vmatprep.subr.bf16.mxu0 0
        %2084 = vmatpush1.bf16.xpose.msra.mxu0 0
        %2085 = vmatprep.subr.bf16.mxu0 0
        %2086 = vmatpush1.bf16.xpose.msra.mxu0 0
        %2087 = vmatprep.subr.bf16.mxu0 0
        %2088 = vmatpush1.bf16.xpose.msra.mxu0 0
        %2089 = vmatprep.subr.bf16.mxu0 0
        %2090 = vmatpush1.bf16.xpose.msra.mxu0 0
        %2091 = vmatprep.subr.bf16.mxu0 0
        %2092 = vmatpush1.bf16.xpose.msra.mxu0 0
        %2093 = vmatprep.subr.bf16.mxu0 0
        %2094 = vmatpush1.bf16.xpose.msra.mxu0 0
        %2095 = vmatprep.subr.bf16.mxu0 0
        %2096 = vmatpush1.bf16.xpose.msra.mxu0 0
        %2097 = vmatprep.mubr.bf16.mxu0 0
        %2098 = vmatmul.mubr.bf16.gmra.mrb[0].mxu0 %v2060
        %v2099 = vpop.f32.mrb[0].mxu0
        %v2100 = vadd.f32 0.0, %v2099
        %v2101 = vpop.f32.mrb[0].mxu0
        %v2102 = vpop.f32.mrb[0].mxu0
        %v2103 = vadd.f32 0.0, %v2102
        %v2104 = vpop.f32.mrb[0].mxu0
        %2105 = vdwg.mxu0
        %v2106 = vpack.c.bf16 %v2103, %v2100
        %v2108 = vsel %vm1624, %v2106, 0
        %v2111 = vsel %vm1628, %v1606, 0
        %2113 = vmatprep.subr.bf16.mxu0 0
        %2114 = vmatpush1.bf16.msra.mxu0 %v2111
        %2115 = vmatprep.subr.bf16.mxu0 0
        %2116 = vmatpush1.bf16.msra.mxu0 0
        %2117 = vmatprep.subr.bf16.mxu0 0
        %2118 = vmatpush1.bf16.msra.mxu0 0
        %2119 = vmatprep.subr.bf16.mxu0 0
        %2120 = vmatpush1.bf16.msra.mxu0 0
        %2121 = vmatprep.subr.bf16.mxu0 0
        %2122 = vmatpush1.bf16.msra.mxu0 0
        %2123 = vmatprep.subr.bf16.mxu0 0
        %2124 = vmatpush1.bf16.msra.mxu0 0
        %2125 = vmatprep.subr.bf16.mxu0 0
        %2126 = vmatpush1.bf16.msra.mxu0 0
        %2127 = vmatprep.subr.bf16.mxu0 0
        %2128 = vmatpush1.bf16.msra.mxu0 0
        %2129 = vmatprep.subr.bf16.mxu0 0
        %2130 = vmatpush1.bf16.msra.mxu0 0
        %2131 = vmatprep.subr.bf16.mxu0 0
        %2132 = vmatpush1.bf16.msra.mxu0 0
        %2133 = vmatprep.subr.bf16.mxu0 0
        %2134 = vmatpush1.bf16.msra.mxu0 0
        %2135 = vmatprep.subr.bf16.mxu0 0
        %2136 = vmatpush1.bf16.msra.mxu0 0
        %2137 = vmatprep.subr.bf16.mxu0 0
        %2138 = vmatpush1.bf16.msra.mxu0 0
        %2139 = vmatprep.subr.bf16.mxu0 0
        %2140 = vmatpush1.bf16.msra.mxu0 0
        %2141 = vmatprep.subr.bf16.mxu0 0
        %2142 = vmatpush1.bf16.msra.mxu0 0
        %2143 = vmatprep.subr.bf16.mxu0 0
        %2144 = vmatpush1.bf16.msra.mxu0 0
        %2145 = vmatprep.mubr.bf16.mxu0 0
        %2146 = vmatmul.mubr.bf16.gmra.mrb[0].mxu0 %v2108
        %v2147 = vpop.f32.mrb[0].mxu0
        %v2148 = vadd.f32 0.0, %v2147
        %v2149 = vpop.f32.mrb[0].mxu0
        %v2150 = vpop.f32.mrb[0].mxu0
        %v2151 = vadd.f32 0.0, %v2150
        %v2152 = vpop.f32.mrb[0].mxu0
        %2153 = vdwg.mxu0
        %v2154 = vadd.f32 %v1967, %v2148
        %v2155 = vadd.f32 %v1970, %v2151
        %2156 = vxpose.xlu0.c.b16.start [1/8] %v1595, 128
        %2157 = vxpose.xlu0.c.b16.cont [2/8] 0, 128
        %2158 = vxpose.xlu0.c.b16.cont [3/8] 0, 128
        %2159 = vxpose.xlu0.c.b16.cont [4/8] 0, 128
        %2160 = vxpose.xlu0.c.b16.cont [5/8] 0, 128
        %2161 = vxpose.xlu0.c.b16.cont [6/8] 0, 128
        %2162 = vxpose.xlu0.c.b16.cont [7/8] 0, 128
        %2163 = vxpose.xlu0.c.b16.end [8/8] 0, 128
        %v2164 = vpop.trf.xlu0
        %v2165 = vpop.trf.xlu0
        %v2166 = vpop.trf.xlu0
        %v2167 = vpop.trf.xlu0
        %v2168 = vpop.trf.xlu0
        %v2169 = vpop.trf.xlu0
        %v2170 = vpop.trf.xlu0
        %v2171 = vpop.trf.xlu0
        %v2173 = vsel %vm1624, %v2164, 0
        %v2176 = vsel %vm1628, %v1599, 0
        %2178 = vmatprep.subr.bf16.mxu0 0
        %2179 = vmatpush1.bf16.msra.mxu0 %v2176
        %2180 = vmatprep.subr.bf16.mxu0 0
        %2181 = vmatpush1.bf16.msra.mxu0 0
        %2182 = vmatprep.subr.bf16.mxu0 0
        %2183 = vmatpush1.bf16.msra.mxu0 0
        %2184 = vmatprep.subr.bf16.mxu0 0
        %2185 = vmatpush1.bf16.msra.mxu0 0
        %2186 = vmatprep.subr.bf16.mxu0 0
        %2187 = vmatpush1.bf16.msra.mxu0 0
        %2188 = vmatprep.subr.bf16.mxu0 0
        %2189 = vmatpush1.bf16.msra.mxu0 0
        %2190 = vmatprep.subr.bf16.mxu0 0
        %2191 = vmatpush1.bf16.msra.mxu0 0
        %2192 = vmatprep.subr.bf16.mxu0 0
        %2193 = vmatpush1.bf16.msra.mxu0 0
        %2194 = vmatprep.subr.bf16.mxu0 0
        %2195 = vmatpush1.bf16.msra.mxu0 0
        %2196 = vmatprep.subr.bf16.mxu0 0
        %2197 = vmatpush1.bf16.msra.mxu0 0
        %2198 = vmatprep.subr.bf16.mxu0 0
        %2199 = vmatpush1.bf16.msra.mxu0 0
        %2200 = vmatprep.subr.bf16.mxu0 0
        %2201 = vmatpush1.bf16.msra.mxu0 0
        %2202 = vmatprep.subr.bf16.mxu0 0
        %2203 = vmatpush1.bf16.msra.mxu0 0
        %2204 = vmatprep.subr.bf16.mxu0 0
        %2205 = vmatpush1.bf16.msra.mxu0 0
        %2206 = vmatprep.subr.bf16.mxu0 0
        %2207 = vmatpush1.bf16.msra.mxu0 0
        %2208 = vmatprep.subr.bf16.mxu0 0
        %2209 = vmatpush1.bf16.msra.mxu0 0
        %2210 = vmatprep.mubr.bf16.mxu0 0
        %2211 = vmatmul.mubr.bf16.gmra.mrb[0].mxu0 %v2173
        %v2212 = vpop.f32.mrb[0].mxu0
        %v2213 = vadd.f32 0.0, %v2212
        %v2214 = vpop.f32.mrb[0].mxu0
        %v2215 = vpop.f32.mrb[0].mxu0
        %v2216 = vadd.f32 0.0, %v2215
        %v2217 = vpop.f32.mrb[0].mxu0
        %2218 = vdwg.mxu0
        %v2219 = vsel %vm1673, %v2213, -inf
        %2220 = vmax.xlane.f32.xlu0 %v2219
        %v2221 = vpop.xlane.xlu0 %2220
        %v2222 = vsel %vm1673, %v2216, -inf
        %2223 = vmax.xlane.f32.xlu0 %v2222
        %v2224 = vpop.xlane.xlu0 %2223
        %v2225 = vsub.f32 %v2213, %v2221
        %v2226 = vsub.f32 %v2216, %v2224
        %v2227 = vmul.f32 %v2225, 1.442695
        %v2228 = vpow.pop %v2227
        %v2229 = vmul.f32 %v2226, 1.442695
        %v2230 = vpow.pop %v2229
        %v2231 = vsel %vm1673, %v2228, 0.0
        %2232 = vadd.xlane.f32.xlu0 %v2231
        %v2233 = vpop.xlane.xlu0 %2232
        %v2234 = vsel %vm1673, %v2230, 0.0
        %2235 = vadd.xlane.f32.xlu0 %v2234
        %v2236 = vpop.xlane.xlu0 %2235
        %v2237 = vrcp.pop %v2233
        %v2238 = vrcp.pop %v2236
        %v2239 = vmul.f32 %v2228, %v2237
        %v2240 = vmul.f32 %v2230, %v2238
        %v2241 = vpack.c.bf16 %v2240, %v2239
        %v2243 = vsel %vm1673, %v2241, 0
        %v2246 = vsel %vm1673, %v1603, 0
        %2248 = vmatprep.subr.bf16.mxu0 0
        %2249 = vmatpush1.bf16.xpose.msra.mxu0 %v2246
        %2250 = vmatprep.subr.bf16.mxu0 0
        %2251 = vmatpush1.bf16.xpose.msra.mxu0 0
        %2252 = vmatprep.subr.bf16.mxu0 0
        %2253 = vmatpush1.bf16.xpose.msra.mxu0 0
        %2254 = vmatprep.subr.bf16.mxu0 0
        %2255 = vmatpush1.bf16.xpose.msra.mxu0 0
        %2256 = vmatprep.subr.bf16.mxu0 0
        %2257 = vmatpush1.bf16.xpose.msra.mxu0 0
        %2258 = vmatprep.subr.bf16.mxu0 0
        %2259 = vmatpush1.bf16.xpose.msra.mxu0 0
        %2260 = vmatprep.subr.bf16.mxu0 0
        %2261 = vmatpush1.bf16.xpose.msra.mxu0 0
        %2262 = vmatprep.subr.bf16.mxu0 0
        %2263 = vmatpush1.bf16.xpose.msra.mxu0 0
        %2264 = vmatprep.subr.bf16.mxu0 0
        %2265 = vmatpush1.bf16.xpose.msra.mxu0 0
        %2266 = vmatprep.subr.bf16.mxu0 0
        %2267 = vmatpush1.bf16.xpose.msra.mxu0 0
        %2268 = vmatprep.subr.bf16.mxu0 0
        %2269 = vmatpush1.bf16.xpose.msra.mxu0 0
        %2270 = vmatprep.subr.bf16.mxu0 0
        %2271 = vmatpush1.bf16.xpose.msra.mxu0 0
        %2272 = vmatprep.subr.bf16.mxu0 0
        %2273 = vmatpush1.bf16.xpose.msra.mxu0 0
        %2274 = vmatprep.subr.bf16.mxu0 0
        %2275 = vmatpush1.bf16.xpose.msra.mxu0 0
        %2276 = vmatprep.subr.bf16.mxu0 0
        %2277 = vmatpush1.bf16.xpose.msra.mxu0 0
        %2278 = vmatprep.subr.bf16.mxu0 0
        %2279 = vmatpush1.bf16.xpose.msra.mxu0 0
        %2280 = vmatprep.mubr.bf16.mxu0 0
        %2281 = vmatmul.mubr.bf16.gmra.mrb[0].mxu0 %v2243
        %v2282 = vpop.f32.mrb[0].mxu0
        %v2283 = vadd.f32 0.0, %v2282
        %v2284 = vpop.f32.mrb[0].mxu0
        %v2285 = vpop.f32.mrb[0].mxu0
        %v2286 = vadd.f32 0.0, %v2285
        %v2287 = vpop.f32.mrb[0].mxu0
        %2288 = vdwg.mxu0
        %v2289 = vpack.c.bf16 %v2286, %v2283
        %v2291 = vsel %vm1624, %v2289, 0
        %v2294 = vsel %vm1628, %v1607, 0
        %2296 = vmatprep.subr.bf16.mxu0 0
        %2297 = vmatpush1.bf16.msra.mxu0 %v2294
        %2298 = vmatprep.subr.bf16.mxu0 0
        %2299 = vmatpush1.bf16.msra.mxu0 0
        %2300 = vmatprep.subr.bf16.mxu0 0
        %2301 = vmatpush1.bf16.msra.mxu0 0
        %2302 = vmatprep.subr.bf16.mxu0 0
        %2303 = vmatpush1.bf16.msra.mxu0 0
        %2304 = vmatprep.subr.bf16.mxu0 0
        %2305 = vmatpush1.bf16.msra.mxu0 0
        %2306 = vmatprep.subr.bf16.mxu0 0
        %2307 = vmatpush1.bf16.msra.mxu0 0
        %2308 = vmatprep.subr.bf16.mxu0 0
        %2309 = vmatpush1.bf16.msra.mxu0 0
        %2310 = vmatprep.subr.bf16.mxu0 0
        %2311 = vmatpush1.bf16.msra.mxu0 0
        %2312 = vmatprep.subr.bf16.mxu0 0
        %2313 = vmatpush1.bf16.msra.mxu0 0
        %2314 = vmatprep.subr.bf16.mxu0 0
        %2315 = vmatpush1.bf16.msra.mxu0 0
        %2316 = vmatprep.subr.bf16.mxu0 0
        %2317 = vmatpush1.bf16.msra.mxu0 0
        %2318 = vmatprep.subr.bf16.mxu0 0
        %2319 = vmatpush1.bf16.msra.mxu0 0
        %2320 = vmatprep.subr.bf16.mxu0 0
        %2321 = vmatpush1.bf16.msra.mxu0 0
        %2322 = vmatprep.subr.bf16.mxu0 0
        %2323 = vmatpush1.bf16.msra.mxu0 0
        %2324 = vmatprep.subr.bf16.mxu0 0
        %2325 = vmatpush1.bf16.msra.mxu0 0
        %2326 = vmatprep.subr.bf16.mxu0 0
        %2327 = vmatpush1.bf16.msra.mxu0 0
        %2328 = vmatprep.mubr.bf16.mxu0 0
        %2329 = vmatmul.mubr.bf16.gmra.mrb[0].mxu0 %v2291
        %v2330 = vpop.f32.mrb[0].mxu0
        %v2331 = vadd.f32 0.0, %v2330
        %v2332 = vpop.f32.mrb[0].mxu0
        %v2333 = vpop.f32.mrb[0].mxu0
        %v2334 = vadd.f32 0.0, %v2333
        %v2335 = vpop.f32.mrb[0].mxu0
        %2336 = vdwg.mxu0
        %v2337 = vadd.f32 %v2154, %v2331
        %v2338 = vadd.f32 %v2155, %v2334
        %v2339 = vadd.f32 %v846, %v2337
        %v2340 = vadd.f32 %v847, %v2338
        %v2341 = vld [vmem:[%s814] sm:$0x1]
        %v2343 = vlaneseq
        %v2344 = vshrl.u32 %v2343, 7
        %v2345 = vsub.s32 0, %v2344
        %v2346 = vrot.slane %v2341, %v2345
        %v2348 = vadd.f32 %v2339, %v2346
        %v2349 = vadd.f32 %v2340, %v2346
        %v2350 = vld [vmem:[%s817] sm:$0x1]
        %v2351 = vld [vmem:[%s820] sm:$0x1]
        %2352 = vadd.xlane.f32.xlu0 %v2348
        %v2353 = vpop.xlane.xlu0 %2352
        %2354 = vadd.xlane.f32.xlu0 %v2349
        %v2355 = vpop.xlane.xlu0 %2354
        %v2356 = vmul.f32 %v2353, 0.03125
        %v2357 = vmul.f32 %v2355, 0.03125
        %v2358 = vmul.f32 %v2348, %v2348
        %v2359 = vmul.f32 %v2349, %v2349
        %2360 = vadd.xlane.f32.xlu0 %v2358
        %v2361 = vpop.xlane.xlu0 %2360
        %2362 = vadd.xlane.f32.xlu0 %v2359
        %v2363 = vpop.xlane.xlu0 %2362
        %v2364 = vmul.f32 %v2361, 0.03125
        %v2365 = vmul.f32 %v2363, 0.03125
        %v2366 = vmul.f32 %v2356, %v2356
        %v2367 = vmul.f32 %v2357, %v2357
        %v2368 = vsub.f32 %v2364, %v2366
        %v2369 = vsub.f32 %v2365, %v2367
        %v2370 = vsub.f32 %v2348, %v2356
        %v2371 = vsub.f32 %v2349, %v2357
        %v2372 = vadd.f32 %v2368, 1e-06
        %v2373 = vadd.f32 %v2369, 1e-06
        %v2374 = vrsqrt.pop %v2372
        %v2375 = vrsqrt.pop %v2373
        %v2376 = vmul.f32 %v2370, %v2374
        %v2377 = vmul.f32 %v2371, %v2375
        %v2379 = vlaneseq
        %v2380 = vshrl.u32 %v2379, 7
        %v2381 = vsub.s32 0, %v2380
        %v2382 = vrot.slane %v2350, %v2381
        %v2384 = vmul.f32 %v2376, %v2382
        %v2385 = vmul.f32 %v2377, %v2382
        %v2387 = vlaneseq
        %v2388 = vshrl.u32 %v2387, 7
        %v2389 = vsub.s32 0, %v2388
        %v2390 = vrot.slane %v2351, %v2389
        %v2392 = vadd.f32 %v2384, %v2390
        %v2393 = vadd.f32 %v2385, %v2390
        %v2394 = vpack.c.bf16 %v2393, %v2392
        %v2395 = vld [vmem:[%s825] sm:$0xf]
        %v2396 = vld [vmem:[%s825 + $0x4] sm:$0xf]
        %v2397 = vld [vmem:[%s825 + $0x8] sm:$0xf]
        %v2398 = vld [vmem:[%s825 + $0xc] sm:$0xf]
        %v2399 = vld [vmem:[%s825 + $0x10] sm:$0xf]
        %v2400 = vld [vmem:[%s825 + $0x14] sm:$0xf]
        %v2401 = vld [vmem:[%s825 + $0x18] sm:$0xf]
        %v2402 = vld [vmem:[%s825 + $0x1c] sm:$0xf]
        %v2403 = vld [vmem:[%s825 + $0x20] sm:$0xf]
        %v2404 = vld [vmem:[%s825 + $0x24] sm:$0xf]
        %v2405 = vld [vmem:[%s825 + $0x28] sm:$0xf]
        %v2406 = vld [vmem:[%s825 + $0x2c] sm:$0xf]
        %v2407 = vld [vmem:[%s825 + $0x30] sm:$0xf]
        %v2408 = vld [vmem:[%s825 + $0x34] sm:$0xf]
        %v2409 = vld [vmem:[%s825 + $0x38] sm:$0xf]
        %v2410 = vld [vmem:[%s825 + $0x3c] sm:$0xf]
        %v2411 = vld [vmem:[%s828] sm:$0x1]
        %v2413 = vlaneseq
        %v2414 = vshrl.u32 %v2413, 7
        %v2415 = vsub.s32 0, %v2414
        %v2416 = vrot.slane %v2411, %v2415
        %v2434 = vunpack.c.l.b16 %v2395
        %v2435 = vunpack.c.l.b16 %v2396
        %v2436 = vunpack.c.l.b16 %v2397
        %v2437 = vunpack.c.l.b16 %v2398
        %v2438 = vunpack.c.l.b16 %v2399
        %v2439 = vunpack.c.l.b16 %v2400
        %v2440 = vunpack.c.l.b16 %v2401
        %v2441 = vunpack.c.l.b16 %v2402
        %v2442 = vunpack.c.l.b16 %v2403
        %v2443 = vunpack.c.l.b16 %v2404
        %v2444 = vunpack.c.l.b16 %v2405
        %v2445 = vunpack.c.l.b16 %v2406
        %v2446 = vunpack.c.l.b16 %v2407
        %v2447 = vunpack.c.l.b16 %v2408
        %v2448 = vunpack.c.l.b16 %v2409
        %v2449 = vunpack.c.l.b16 %v2410
        %v2450 = vpack.c.b16 %v2435, %v2434
        %v2451 = vpack.c.b16 %v2437, %v2436
        %v2452 = vpack.c.b16 %v2439, %v2438
        %v2453 = vpack.c.b16 %v2441, %v2440
        %v2454 = vpack.c.b16 %v2443, %v2442
        %v2455 = vpack.c.b16 %v2445, %v2444
        %v2456 = vpack.c.b16 %v2447, %v2446
        %v2457 = vpack.c.b16 %v2449, %v2448
        %2466 = vmatprep.subr.bf16.mxu0 0
        %2467 = vmatpush1.bf16.msra.mxu0 %v2450
        %2468 = vmatprep.subr.bf16.mxu0 0
        %2469 = vmatpush1.bf16.msra.mxu0 %v2451
        %2470 = vmatprep.subr.bf16.mxu0 0
        %2471 = vmatpush1.bf16.msra.mxu0 %v2452
        %2472 = vmatprep.subr.bf16.mxu0 0
        %2473 = vmatpush1.bf16.msra.mxu0 %v2453
        %2474 = vmatprep.subr.bf16.mxu0 0
        %2475 = vmatpush1.bf16.msra.mxu0 %v2454
        %2476 = vmatprep.subr.bf16.mxu0 0
        %2477 = vmatpush1.bf16.msra.mxu0 %v2455
        %2478 = vmatprep.subr.bf16.mxu0 0
        %2479 = vmatpush1.bf16.msra.mxu0 %v2456
        %2480 = vmatprep.subr.bf16.mxu0 0
        %2481 = vmatpush1.bf16.msra.mxu0 %v2457
        %2482 = vmatprep.subr.bf16.mxu0 0
        %2483 = vmatpush1.bf16.msra.mxu0 0
        %2484 = vmatprep.subr.bf16.mxu0 0
        %2485 = vmatpush1.bf16.msra.mxu0 0
        %2486 = vmatprep.subr.bf16.mxu0 0
        %2487 = vmatpush1.bf16.msra.mxu0 0
        %2488 = vmatprep.subr.bf16.mxu0 0
        %2489 = vmatpush1.bf16.msra.mxu0 0
        %2490 = vmatprep.subr.bf16.mxu0 0
        %2491 = vmatpush1.bf16.msra.mxu0 0
        %2492 = vmatprep.subr.bf16.mxu0 0
        %2493 = vmatpush1.bf16.msra.mxu0 0
        %2494 = vmatprep.subr.bf16.mxu0 0
        %2495 = vmatpush1.bf16.msra.mxu0 0
        %2496 = vmatprep.subr.bf16.mxu0 0
        %2497 = vmatpush1.bf16.msra.mxu0 0
        %2498 = vmatprep.mubr.bf16.mxu0 0
        %2499 = vmatmul.mubr.bf16.gmra.mrb[0].mxu0 %v2394
        %v2500 = vpop.f32.mrb[0].mxu0
        %v2501 = vadd.f32 %v2416, %v2500
        %v2502 = vpop.f32.mrb[0].mxu0
        %v2503 = vpop.f32.mrb[0].mxu0
        %v2504 = vadd.f32 %v2416, %v2503
        %v2505 = vpop.f32.mrb[0].mxu0
        %2506 = vdwg.mxu0
        %v2507 = vmul.f32 %v2501, 0.5
        %v2508 = vmul.f32 %v2504, 0.5
        %v2509 = vmul.f32 %v2501, 0.044715
        %v2510 = vmul.f32 %v2504, 0.044715
        %v2511 = vmul.f32 %v2509, %v2501
        %v2512 = vmul.f32 %v2510, %v2504
        %v2513 = vmul.f32 %v2511, %v2501
        %v2514 = vmul.f32 %v2512, %v2504
        %v2515 = vadd.f32 %v2501, %v2513
        %v2516 = vadd.f32 %v2504, %v2514
        %v2517 = vmul.f32 %v2515, 0.7978846
        %v2518 = vmul.f32 %v2516, 0.7978846
        %v2519 = vtanh.pop %v2517
        %v2520 = vtanh.pop %v2518
        %v2521 = vadd.f32 %v2519, 1.0
        %v2522 = vadd.f32 %v2520, 1.0
        %v2523 = vmul.f32 %v2507, %v2521
        %v2524 = vmul.f32 %v2508, %v2522
        %v2525 = vpack.c.bf16 %v2524, %v2523
        %v2526 = vld [vmem:[%s833] sm:$0xf]
        %v2527 = vld [vmem:[%s833 + $0x4] sm:$0xf]
        %v2528 = vld [vmem:[%s833 + $0x8] sm:$0xf]
        %v2529 = vld [vmem:[%s833 + $0xc] sm:$0xf]
        %v2530 = vld [vmem:[%s833 + $0x10] sm:$0xf]
        %v2531 = vld [vmem:[%s833 + $0x14] sm:$0xf]
        %v2532 = vld [vmem:[%s833 + $0x18] sm:$0xf]
        %v2533 = vld [vmem:[%s833 + $0x1c] sm:$0xf]
        %v2534 = vld [vmem:[%s833 + $0x20] sm:$0xf]
        %v2535 = vld [vmem:[%s833 + $0x24] sm:$0xf]
        %v2536 = vld [vmem:[%s833 + $0x28] sm:$0xf]
        %v2537 = vld [vmem:[%s833 + $0x2c] sm:$0xf]
        %v2538 = vld [vmem:[%s833 + $0x30] sm:$0xf]
        %v2539 = vld [vmem:[%s833 + $0x34] sm:$0xf]
        %v2540 = vld [vmem:[%s833 + $0x38] sm:$0xf]
        %v2541 = vld [vmem:[%s833 + $0x3c] sm:$0xf]
        %v2542 = vld [vmem:[%s836] sm:$0x1]
        %v2544 = vlaneseq
        %v2545 = vshrl.u32 %v2544, 7
        %v2546 = vsub.s32 0, %v2545
        %v2547 = vrot.slane %v2542, %v2546
        %v2565 = vunpack.c.l.b16 %v2526
        %v2566 = vunpack.c.l.b16 %v2527
        %v2567 = vunpack.c.l.b16 %v2528
        %v2568 = vunpack.c.l.b16 %v2529
        %v2569 = vunpack.c.l.b16 %v2530
        %v2570 = vunpack.c.l.b16 %v2531
        %v2571 = vunpack.c.l.b16 %v2532
        %v2572 = vunpack.c.l.b16 %v2533
        %v2573 = vunpack.c.l.b16 %v2534
        %v2574 = vunpack.c.l.b16 %v2535
        %v2575 = vunpack.c.l.b16 %v2536
        %v2576 = vunpack.c.l.b16 %v2537
        %v2577 = vunpack.c.l.b16 %v2538
        %v2578 = vunpack.c.l.b16 %v2539
        %v2579 = vunpack.c.l.b16 %v2540
        %v2580 = vunpack.c.l.b16 %v2541
        %v2581 = vpack.c.b16 %v2566, %v2565
        %v2582 = vpack.c.b16 %v2568, %v2567
        %v2583 = vpack.c.b16 %v2570, %v2569
        %v2584 = vpack.c.b16 %v2572, %v2571
        %v2585 = vpack.c.b16 %v2574, %v2573
        %v2586 = vpack.c.b16 %v2576, %v2575
        %v2587 = vpack.c.b16 %v2578, %v2577
        %v2588 = vpack.c.b16 %v2580, %v2579
        %2597 = vmatprep.subr.bf16.mxu0 0
        %2598 = vmatpush1.bf16.msra.mxu0 %v2581
        %2599 = vmatprep.subr.bf16.mxu0 0
        %2600 = vmatpush1.bf16.msra.mxu0 %v2582
        %2601 = vmatprep.subr.bf16.mxu0 0
        %2602 = vmatpush1.bf16.msra.mxu0 %v2583
        %2603 = vmatprep.subr.bf16.mxu0 0
        %2604 = vmatpush1.bf16.msra.mxu0 %v2584
        %2605 = vmatprep.subr.bf16.mxu0 0
        %2606 = vmatpush1.bf16.msra.mxu0 %v2585
        %2607 = vmatprep.subr.bf16.mxu0 0
        %2608 = vmatpush1.bf16.msra.mxu0 %v2586
        %2609 = vmatprep.subr.bf16.mxu0 0
        %2610 = vmatpush1.bf16.msra.mxu0 %v2587
        %2611 = vmatprep.subr.bf16.mxu0 0
        %2612 = vmatpush1.bf16.msra.mxu0 %v2588
        %2613 = vmatprep.subr.bf16.mxu0 0
        %2614 = vmatpush1.bf16.msra.mxu0 0
        %2615 = vmatprep.subr.bf16.mxu0 0
        %2616 = vmatpush1.bf16.msra.mxu0 0
        %2617 = vmatprep.subr.bf16.mxu0 0
        %2618 = vmatpush1.bf16.msra.mxu0 0
        %2619 = vmatprep.subr.bf16.mxu0 0
        %2620 = vmatpush1.bf16.msra.mxu0 0
        %2621 = vmatprep.subr.bf16.mxu0 0
        %2622 = vmatpush1.bf16.msra.mxu0 0
        %2623 = vmatprep.subr.bf16.mxu0 0
        %2624 = vmatpush1.bf16.msra.mxu0 0
        %2625 = vmatprep.subr.bf16.mxu0 0
        %2626 = vmatpush1.bf16.msra.mxu0 0
        %2627 = vmatprep.subr.bf16.mxu0 0
        %2628 = vmatpush1.bf16.msra.mxu0 0
        %2629 = vmatprep.mubr.bf16.mxu0 0
        %2630 = vmatmul.mubr.bf16.gmra.mrb[0].mxu0 %v2525
        %v2631 = vpop.f32.mrb[0].mxu0
        %v2632 = vadd.f32 %v2547, %v2631
        %v2633 = vpop.f32.mrb[0].mxu0
        %v2634 = vpop.f32.mrb[0].mxu0
        %v2635 = vadd.f32 %v2547, %v2634
        %v2636 = vpop.f32.mrb[0].mxu0
        %2637 = vdwg.mxu0
        %v2638 = vadd.f32 %v2348, %v2632
        %v2639 = vadd.f32 %v2349, %v2635
        %2640 = vst [vmem:[#allocation2] sm:$0xff] %v2638
        %2641 = vst [vmem:[#allocation2 + $0x8] sm:$0xff] %v2639
        %p2642 = scmp.eq.s32.totalorder %s36, 1
        // Predicated region
        $region93: #{tpu_custom_call.1} parent=87 // pred_check
          %p2643 = pneg %p2642
        $region94: #{tpu_custom_call.1} parent=87 // pred_check_branch
          %2645 = sbr.rel (%p2643) target = $region96
        $region95: #{tpu_custom_call.1} parent=87 // pred_region
          %2646 = vst [vmem:[%s765] sm:$0xff] %v2638
          %2647 = vst [vmem:[%s765 + $0x8] sm:$0xff] %v2639
        $region96: #{tpu_custom_call.1} parent=87 // pred_fallthru
          _
        %s2648 = sand.u32 %s493, 1
        %s2649 = scalar_lea.sflag [#allocation4], %s2648
        %s2650 = sand.u32 %s493, 1
        %s2651 = smul.addr %s2650, 16
        %s2652 = scalar_lea.vmem [#allocation3], %s2651
        // Predicated region
        $region97: #{tpu_custom_call.1} parent=87 // pred_check
          %p2653 = pneg %p503
        $region98: #{tpu_custom_call.1} parent=87 // pred_check_branch
          %2655 = sbr.rel (%p2653) target = $region100
        $region99: #{tpu_custom_call.1} parent=87 // pred_region
          %s2657 = ssub.s32 256, 256
          %2658 = vsyncadd %s2649, %s2657
          %s2659 = smul.addr %s35, 2
          %s2660 = smul.addr %s2659, 128
          %s2661 = scalar_lea.hbm %s17, %s2660
          %s2662 = sshll.u32 %s2652, 4
          %s2663 = int_to_ptr.vmem [resolvable:$true] %s2662
          %2668 = dma.vmem_to_hbm [thread:$0]  %s2663, 256, %s2661, %s2649, 128, 128, 8
        $region100: #{tpu_custom_call.1} parent=87 // pred_fallthru
          _
      $region88: #{tpu_custom_call.1} parent=5 // pred_fallthru
        _
      %p2669 = scmp.le.s32.totalorder 2, %s26
      // Predicated region
      $region101: #{tpu_custom_call.1} parent=5 // pred_check
        %p2670 = pneg %p2669
      $region102: #{tpu_custom_call.1} parent=5 // pred_check_branch
        %2672 = sbr.rel (%p2670) target = $region104
      $region103: #{tpu_custom_call.1} parent=5 // pred_region
        %s2673 = ssub.s32 %s26, 2
        // Predicated region
        $region105: #{tpu_custom_call.1} parent=103 // pred_check
          %p2674 = pneg %p509
        $region106: #{tpu_custom_call.1} parent=103 // pred_check_branch
          %2676 = sbr.rel (%p2674) target = $region108
        $region107: #{tpu_custom_call.1} parent=103 // pred_region
          %s2677 = sand.u32 %s494, 1
          %s2678 = scalar_lea.sflag [#allocation4], %s2677
          %s2679 = sand.u32 %s494, 1
          %s2680 = smul.addr %s2679, 16
          %s2681 = scalar_lea.vmem [#allocation3], %s2680
          %2682 = dma.done %s2678, 256
        $region108: #{tpu_custom_call.1} parent=103 // pred_fallthru
          _
      $region104: #{tpu_custom_call.1} parent=5 // pred_fallthru
        _
    $region6: #{tpu_custom_call.1} parent=1 // loop_footer
      %s30 = sadd.s32 1, %s26
    $region7: #{tpu_custom_call.1} parent=1 // loop_footer_branch
      %25 = sbr.rel target = $region3
    $region8: #{tpu_custom_call.1} parent=1 // loop_exit
      _
    %2683 = vsyncpa [#allocation4], 1
    %s2684 = scalar_lea.sflag [#allocation4], 1
    %2685 = vsyncpa %s2684, 1

</llo_original>
